<compile_context>
chip_gen: v6e
topology: v6e:2x2x1
jax: 0.10.0
libtpu: 0.0.40
codegen_flags: <defaults>
</compile_context>

<pallas_src>
import jax
import jax.numpy as jnp
from jax.experimental import pallas as pl
from jax.experimental.pallas import tpu as pltpu

IN_FEATURES = 1632
HIDDEN = 1000
OUT_FEATURES = 96
NEG_SLOPE = 0.01  # PyTorch nn.LeakyReLU default

# Padded (128-aligned) weight dims.  The input-feature dim stays at 1632.
HID_P = 1024   # 8 * 128
OUT_P = 128    # 1 * 128

MAX_TB = 512   # batch tile for large B


def fcnn_kernel(x_ref, w1_ref, b1_ref, w2_ref, b2_ref, o_ref):
    # x_ref : [TB, 1632]  f32   (cast to bf16 on the VPU below)
    # w1_ref: [1632, 1024] bf16 (resident; constant index_map)
    # b1_ref: [1, 1024]    f32
    # w2_ref: [1024, 128]  bf16 (resident)
    # b2_ref: [1, 128]     f32
    # o_ref : [TB, 128]    f32
    x = x_ref[...].astype(jnp.bfloat16)

    # Layer 1: [TB,1632] @ [1632,1024] -> f32 accumulate on the MXU.
    h = jnp.dot(x, w1_ref[...], preferred_element_type=jnp.float32)
    h = h + b1_ref[...]
    h = jnp.where(h > 0, h, NEG_SLOPE * h)          # LeakyReLU

    # Layer 2: [TB,1024] @ [1024,128] -> f32, bias added directly.
    out = jnp.dot(h.astype(jnp.bfloat16), w2_ref[...],
                  preferred_element_type=jnp.float32)
    o_ref[...] = out + b2_ref[...]


def prepare_params(w1, b1, w2, b2):
    """One-time zero-pad of hidden/output dims + bf16 cast (biases stay f32)."""
    w1p = jnp.zeros((IN_FEATURES, HID_P), jnp.bfloat16)
    w1p = w1p.at[:, :HIDDEN].set(w1.astype(jnp.bfloat16))
    b1p = jnp.zeros((1, HID_P), jnp.float32)
    b1p = b1p.at[0, :HIDDEN].set(b1.astype(jnp.float32))
    w2p = jnp.zeros((HID_P, OUT_P), jnp.bfloat16)
    w2p = w2p.at[:HIDDEN, :OUT_FEATURES].set(w2.astype(jnp.bfloat16))
    b2p = jnp.zeros((1, OUT_P), jnp.float32)
    b2p = b2p.at[0, :OUT_FEATURES].set(b2.astype(jnp.float32))
    return w1p, b1p, w2p, b2p


@jax.jit
def fcnn_forward(x, w1p, b1p, w2p, b2p):
    """x: [B, 1632] f32 -> [B, 96] f32, using pre-padded bf16 weights."""
    B = x.shape[0]

    if B <= MAX_TB:
        # Single batch tile equal to the full array dim (bypasses the 8-row
        # divisibility rule); no padding, no extra HBM pass for x.
        TB = B
        B_pad = B
        xp = x
    else:
        TB = MAX_TB
        B_pad = pl.cdiv(B, TB) * TB
        xp = jnp.pad(x, ((0, B_pad - B), (0, 0))) if B_pad != B else x

    grid = (B_pad // TB,)

    out = pl.pallas_call(
        fcnn_kernel,
        out_shape=jax.ShapeDtypeStruct((B_pad, OUT_P), jnp.float32),
        grid_spec=pltpu.PrefetchScalarGridSpec(
            num_scalar_prefetch=0,
            grid=grid,
            in_specs=[
                pl.BlockSpec((TB, IN_FEATURES), lambda b: (b, 0)),   # x tile
                pl.BlockSpec((IN_FEATURES, HID_P), lambda b: (0, 0)),  # W1 (resident)
                pl.BlockSpec((1, HID_P), lambda b: (0, 0)),          # b1
                pl.BlockSpec((HID_P, OUT_P), lambda b: (0, 0)),      # W2 (resident)
                pl.BlockSpec((1, OUT_P), lambda b: (0, 0)),          # b2
            ],
            out_specs=pl.BlockSpec((TB, OUT_P), lambda b: (b, 0)),
        ),
        compiler_params=pltpu.CompilerParams(
            dimension_semantics=("parallel",),
            vmem_limit_bytes=32 << 20,
        ),
    )(xp, w1p, b1p, w2p, b2p)

    return out[:B, :OUT_FEATURES]


def init_params(key):
    """Deterministic synthetic parameters matching the PyTorch layer shapes."""
    k1, k2, k3, k4 = jax.random.split(key, 4)
    # PyTorch Linear default init: U(-1/sqrt(fan_in), 1/sqrt(fan_in))
    bound1 = 1.0 / jnp.sqrt(IN_FEATURES)
    bound2 = 1.0 / jnp.sqrt(HIDDEN)
    w1 = jax.random.uniform(k1, (IN_FEATURES, HIDDEN), jnp.float32, -bound1, bound1)
    b1 = jax.random.uniform(k2, (HIDDEN,), jnp.float32, -bound1, bound1)
    w2 = jax.random.uniform(k3, (HIDDEN, OUT_FEATURES), jnp.float32, -bound2, bound2)
    b2 = jax.random.uniform(k4, (OUT_FEATURES,), jnp.float32, -bound2, bound2)
    return w1, b1, w2, b2


if __name__ == "__main__":
    key = jax.random.PRNGKey(0)
    k_x, k_p = jax.random.split(key)

    B = 2
    x = jax.random.normal(k_x, (B, IN_FEATURES), jnp.float32)
    w1, b1, w2, b2 = init_params(k_p)

    # Pad + cast weights once (amortized over all forward calls).
    w1p, b1p, w2p, b2p = prepare_params(w1, b1, w2, b2)

    out = fcnn_forward(x, w1p, b1p, w2p, b2p)
    out = jax.block_until_ready(out)

    # Pure-JAX reference on the same bf16-rounded weights/inputs (f32 math).
    x_r = x.astype(jnp.bfloat16).astype(jnp.float32)
    w1_r = w1.astype(jnp.bfloat16).astype(jnp.float32)
    w2_r = w2.astype(jnp.bfloat16).astype(jnp.float32)
    h_ref = x_r @ w1_r + b1
    h_ref = jnp.where(h_ref > 0, h_ref, NEG_SLOPE * h_ref)
    ref = h_ref @ w2_r + b2

    assert out.shape == (B, OUT_FEATURES), out.shape
    max_err = float(jnp.max(jnp.abs(out - ref)))
    assert jnp.allclose(out, ref, atol=3e-2, rtol=3e-2), max_err

    print("KERNEL_OK")
</pallas_src>

<mosaic_0001>
module attributes {stable_mosaic.version = 11 : i64} {
  func.func @fcnn_kernel(%arg0: i32, %arg1: memref<2x1632xf32, #tpu.memory_space<vmem>>, %arg2: memref<1632x1024xbf16, #tpu.memory_space<vmem>>, %arg3: memref<1x1024xf32, #tpu.memory_space<vmem>>, %arg4: memref<1024x128xbf16, #tpu.memory_space<vmem>>, %arg5: memref<1x128xf32, #tpu.memory_space<vmem>>, %arg6: memref<2x128xf32, #tpu.memory_space<vmem>>) attributes {dimension_semantics = [#tpu.dimension_semantics<parallel>], iteration_bounds = array<i64: 1>, scalar_prefetch = 0 : i64, scratch_operands = 0 : i64, tpu.core_type = #tpu.core_type<tc>, window_params = [{transform_indices = @transform_0, window_bounds = array<i64: 2, 1632>}, {pipeline_mode = #tpu.pipeline_mode<synchronous>, transform_indices = @transform_1, window_bounds = array<i64: 1632, 1024>}, {pipeline_mode = #tpu.pipeline_mode<synchronous>, transform_indices = @transform_2, window_bounds = array<i64: 1, 1024>}, {pipeline_mode = #tpu.pipeline_mode<synchronous>, transform_indices = @transform_3, window_bounds = array<i64: 1024, 128>}, {pipeline_mode = #tpu.pipeline_mode<synchronous>, transform_indices = @transform_4, window_bounds = array<i64: 1, 128>}, {transform_indices = @transform_5, window_bounds = array<i64: 2, 128>}]} {
    %c0 = arith.constant 0 : index
    %c0_0 = arith.constant 0 : index
    %0 = vector.load %arg1[%c0, %c0_0] : memref<2x1632xf32, #tpu.memory_space<vmem>>, vector<2x1632xf32>
    %1 = arith.truncf %0 : vector<2x1632xf32> to vector<2x1632xbf16>
    %c0_1 = arith.constant 0 : index
    %c0_2 = arith.constant 0 : index
    %2 = vector.load %arg2[%c0_1, %c0_2] : memref<1632x1024xbf16, #tpu.memory_space<vmem>>, vector<1632x1024xbf16>
    %cst = arith.constant dense<0.000000e+00> : vector<2x1024xf32>
    %3 = tpu.matmul %1, %2, %cst {dimension_numbers = #tpu.dot_dimension_numbers<[1], [0], [0], [1], [0, 0, 1, 1], [], []>} : vector<2x1632xbf16>, vector<1632x1024xbf16>, vector<2x1024xf32> -> vector<2x1024xf32>
    %c0_3 = arith.constant 0 : index
    %c0_4 = arith.constant 0 : index
    %4 = vector.load %arg3[%c0_3, %c0_4] : memref<1x1024xf32, #tpu.memory_space<vmem>>, vector<1x1024xf32>
    %5 = vector.broadcast %4 : vector<1x1024xf32> to vector<2x1024xf32>
    %6 = arith.addf %3, %5 : vector<2x1024xf32>
    %cst_5 = arith.constant 0.000000e+00 : f32
    %7 = vector.broadcast %cst_5 : f32 to vector<2x1024xf32>
    %8 = arith.cmpf ogt, %6, %7 : vector<2x1024xf32>
    %cst_6 = arith.constant 0.00999999977 : f32
    %9 = vector.broadcast %cst_6 : f32 to vector<2x1024xf32>
    %10 = arith.mulf %9, %6 : vector<2x1024xf32>
    %11 = arith.select %8, %6, %10 : vector<2x1024xi1>, vector<2x1024xf32>
    %12 = arith.truncf %11 : vector<2x1024xf32> to vector<2x1024xbf16>
    %c0_7 = arith.constant 0 : index
    %c0_8 = arith.constant 0 : index
    %13 = vector.load %arg4[%c0_7, %c0_8] : memref<1024x128xbf16, #tpu.memory_space<vmem>>, vector<1024x128xbf16>
    %cst_9 = arith.constant dense<0.000000e+00> : vector<2x128xf32>
    %14 = tpu.matmul %12, %13, %cst_9 {dimension_numbers = #tpu.dot_dimension_numbers<[1], [0], [0], [1], [0, 0, 1, 1], [], []>} : vector<2x1024xbf16>, vector<1024x128xbf16>, vector<2x128xf32> -> vector<2x128xf32>
    %c0_10 = arith.constant 0 : index
    %c0_11 = arith.constant 0 : index
    %15 = vector.load %arg5[%c0_10, %c0_11] : memref<1x128xf32, #tpu.memory_space<vmem>>, vector<1x128xf32>
    %16 = vector.broadcast %15 : vector<1x128xf32> to vector<2x128xf32>
    %17 = arith.addf %14, %16 : vector<2x128xf32>
    %c0_12 = arith.constant 0 : index
    %c0_13 = arith.constant 0 : index
    %18 = vector.load %arg6[%c0_12, %c0_13] : memref<2x128xf32, #tpu.memory_space<vmem>>, vector<2x128xf32>
    tpu.vector_store %arg6[%c0_12, %c0_13], %17 {strides = array<i32>} : memref<2x128xf32, #tpu.memory_space<vmem>>, vector<2x128xf32>,
    return
  }
  func.func @transform_0(%arg0: i32) -> (i32, i32) {
    %c0_i32 = arith.constant 0 : i32
    %c0_i32_0 = arith.constant 0 : i32
    return %arg0, %c0_i32 : i32, i32
  }
  func.func @transform_1(%arg0: i32) -> (i32, i32) {
    %c0_i32 = arith.constant 0 : i32
    %c0_i32_0 = arith.constant 0 : i32
    %c0_i32_1 = arith.constant 0 : i32
    return %c0_i32, %c0_i32_0 : i32, i32
  }
  func.func @transform_2(%arg0: i32) -> (i32, i32) {
    %c0_i32 = arith.constant 0 : i32
    %c0_i32_0 = arith.constant 0 : i32
    %c0_i32_1 = arith.constant 0 : i32
    return %c0_i32, %c0_i32_0 : i32, i32
  }
  func.func @transform_3(%arg0: i32) -> (i32, i32) {
    %c0_i32 = arith.constant 0 : i32
    %c0_i32_0 = arith.constant 0 : i32
    %c0_i32_1 = arith.constant 0 : i32
    return %c0_i32, %c0_i32_0 : i32, i32
  }
  func.func @transform_4(%arg0: i32) -> (i32, i32) {
    %c0_i32 = arith.constant 0 : i32
    %c0_i32_0 = arith.constant 0 : i32
    %c0_i32_1 = arith.constant 0 : i32
    return %c0_i32, %c0_i32_0 : i32, i32
  }
  func.func @transform_5(%arg0: i32) -> (i32, i32) {
    %c0_i32 = arith.constant 0 : i32
    %c0_i32_0 = arith.constant 0 : i32
    return %arg0, %c0_i32 : i32, i32
  }
}

</mosaic_0001>

<llo_original>
// kernel: fcnn_forward.1
$region0: #{fcnn_forward.1}
  #allocation0 [shape = 'u32[]', space=smem, size = 0x4, offset = 0x4, fixed_abs, tag = 'smem constant byte address 0x4 - core index']
  #allocation1 [shape = 'u32[144,128]{1,0:T(1,128)}', space=vmem, size = 0x12000, scoped, tag = 'internal scratch']
  %s0 = inlined_call_operand.hbm [shape: f32[2,1632], index: 0, kind: input, shape index: {}]
  %s1 = inlined_call_operand.hbm [shape: bf16[1632,1024], index: 1, kind: input, shape index: {}]
  %s2 = inlined_call_operand.hbm [shape: f32[1,1024], index: 2, kind: input, shape index: {}]
  %s3 = inlined_call_operand.hbm [shape: bf16[1024,128], index: 3, kind: input, shape index: {}]
  %s4 = inlined_call_operand.hbm [shape: f32[1,128], index: 4, kind: input, shape index: {}]
  %s5 = inlined_call_operand.hbm [shape: f32[2,128], index: 5, kind: output, shape index: {}]
  %s6 = sld [smem:[#allocation0]]
  $region50: #{fcnn_forward.1} parent=0
    _
  %s8 = ssub.s32 1, %s6
  %s9 = scalar_select 0, %s8, %s6
  $region1: #{fcnn_forward.1} parent=0
    #allocation2 [shape = 'u8[13312]{0}', space=vmem, size = 0x3400, scoped, tag = 'input window, operand 0, single buffered']
    #allocation3 [shape = 's32[1]{0}', space=sflag, size = 0x4, scoped, tag = 'scoped memory for fcnn_forward.1']
    #allocation4 [shape = 's32[1]{0}', space=sflag, size = 0x4, scoped, tag = 'scoped memory for fcnn_forward.1']
    #allocation5 [shape = 'u8[3342336]{0}', space=vmem, size = 0x330000, scoped, tag = 'input window, operand 1, single buffered']
    #allocation6 [shape = 's32[1]{0}', space=sflag, size = 0x4, scoped, tag = 'scoped memory for fcnn_forward.1']
    #allocation7 [shape = 'u8[4096]{0}', space=vmem, size = 0x1000, scoped, tag = 'input window, operand 2, single buffered']
    #allocation8 [shape = 'u8[262144]{0}', space=vmem, size = 0x40000, scoped, tag = 'input window, operand 3, single buffered']
    #allocation9 [shape = 's32[1]{0}', space=sflag, size = 0x4, scoped, tag = 'scoped memory for fcnn_forward.1']
    #allocation10 [shape = 'u8[512]{0}', space=vmem, size = 0x400, scoped, tag = 'input window, operand 4, single buffered']
    #allocation11 [shape = 'u8[1024]{0}', space=vmem, size = 0x400, scoped, tag = 'output window, operand 0, single buffered']
    %10 = vsyncpa [#allocation3], 0
    %11 = vsyncpa [#allocation6], 0
    %12 = vsyncpa [#allocation9], 0
    %13 = vsyncpa [#allocation4], 0
    // Predicated region
    $region2: #{fcnn_forward.1} parent=1 // pred_check
      _
    $region3: #{fcnn_forward.1} parent=1 // pred_check_branch
      %15 = sbr.rel (0) target = $region5
    $region4: #{fcnn_forward.1} parent=1 // pred_region
      %s17 = ssub.s32 416, 416
      %18 = vsyncadd [#allocation3], %s17
      %s20 = sshll.u32 [#allocation2], 4
      %s21 = int_to_ptr.vmem [resolvable:$true] %s20
      %23 = dma.hbm_to_vmem [thread:$0]  %s0, 416, %s21, [#allocation3]
    $region5: #{fcnn_forward.1} parent=1 // pred_fallthru
      _
    // Predicated region
    $region6: #{fcnn_forward.1} parent=1 // pred_check
      _
    $region7: #{fcnn_forward.1} parent=1 // pred_check_branch
      %25 = sbr.rel (0) target = $region9
    $region8: #{fcnn_forward.1} parent=1 // pred_region
      %s27 = ssub.s32 104448, 104448
      %28 = vsyncadd [#allocation6], %s27
      %s29 = sshll.u32 [#allocation5], 4
      %s30 = int_to_ptr.vmem [resolvable:$true] %s29
      %35 = dma.hbm_to_vmem [thread:$0]  %s1, 104448, %s30, [#allocation6], 512, 512, 32
    $region9: #{fcnn_forward.1} parent=1 // pred_fallthru
      _
    // Predicated region
    $region10: #{fcnn_forward.1} parent=1 // pred_check
      _
    $region11: #{fcnn_forward.1} parent=1 // pred_check_branch
      %37 = sbr.rel (0) target = $region13
    $region12: #{fcnn_forward.1} parent=1 // pred_region
      %s39 = ssub.s32 128, 128
      %40 = vsyncadd [#allocation6], %s39
      %s42 = sshll.u32 [#allocation7], 4
      %s43 = int_to_ptr.vmem [resolvable:$true] %s42
      %45 = dma.hbm_to_vmem [thread:$0]  %s2, 128, %s43, [#allocation6]
    $region13: #{fcnn_forward.1} parent=1 // pred_fallthru
      _
    // Predicated region
    $region14: #{fcnn_forward.1} parent=1 // pred_check
      _
    $region15: #{fcnn_forward.1} parent=1 // pred_check_branch
      %47 = sbr.rel (0) target = $region17
    $region16: #{fcnn_forward.1} parent=1 // pred_region
      %s49 = ssub.s32 8192, 8192
      %50 = vsyncadd [#allocation9], %s49
      %s51 = sshll.u32 [#allocation8], 4
      %s52 = int_to_ptr.vmem [resolvable:$true] %s51
      %57 = dma.hbm_to_vmem [thread:$0]  %s3, 8192, %s52, [#allocation9], 64, 64, 4
    $region17: #{fcnn_forward.1} parent=1 // pred_fallthru
      _
    // Predicated region
    $region18: #{fcnn_forward.1} parent=1 // pred_check
      _
    $region19: #{fcnn_forward.1} parent=1 // pred_check_branch
      %59 = sbr.rel (0) target = $region21
    $region20: #{fcnn_forward.1} parent=1 // pred_region
      %s61 = ssub.s32 16, 16
      %62 = vsyncadd [#allocation9], %s61
      %s64 = sshll.u32 [#allocation10], 4
      %s65 = int_to_ptr.vmem [resolvable:$true] %s64
      %67 = dma.hbm_to_vmem [thread:$0]  %s4, 16, %s65, [#allocation9]
    $region21: #{fcnn_forward.1} parent=1 // pred_fallthru
      _
    // Predicated region
    $region22: #{fcnn_forward.1} parent=1 // pred_check
      _
    $region23: #{fcnn_forward.1} parent=1 // pred_check_branch
      %69 = sbr.rel (0) target = $region25
    $region24: #{fcnn_forward.1} parent=1 // pred_region
      %70 = dma.done [#allocation3], 416
    $region25: #{fcnn_forward.1} parent=1 // pred_fallthru
      _
    // Predicated region
    $region26: #{fcnn_forward.1} parent=1 // pred_check
      _
    $region27: #{fcnn_forward.1} parent=1 // pred_check_branch
      %72 = sbr.rel (0) target = $region29
    $region28: #{fcnn_forward.1} parent=1 // pred_region
      %73 = dma.done [#allocation6], 104448
    $region29: #{fcnn_forward.1} parent=1 // pred_fallthru
      _
    // Predicated region
    $region30: #{fcnn_forward.1} parent=1 // pred_check
      _
    $region31: #{fcnn_forward.1} parent=1 // pred_check_branch
      %75 = sbr.rel (0) target = $region33
    $region32: #{fcnn_forward.1} parent=1 // pred_region
      %76 = dma.done [#allocation6], 128
    $region33: #{fcnn_forward.1} parent=1 // pred_fallthru
      _
    // Predicated region
    $region34: #{fcnn_forward.1} parent=1 // pred_check
      _
    $region35: #{fcnn_forward.1} parent=1 // pred_check_branch
      %78 = sbr.rel (0) target = $region37
    $region36: #{fcnn_forward.1} parent=1 // pred_region
      %79 = dma.done [#allocation9], 8192
    $region37: #{fcnn_forward.1} parent=1 // pred_fallthru
      _
    // Predicated region
    $region38: #{fcnn_forward.1} parent=1 // pred_check
      _
    $region39: #{fcnn_forward.1} parent=1 // pred_check_branch
      %81 = sbr.rel (0) target = $region41
    $region40: #{fcnn_forward.1} parent=1 // pred_region
      %82 = dma.done [#allocation9], 16
    $region41: #{fcnn_forward.1} parent=1 // pred_fallthru
      _
    %v84 = vld [vmem:[#allocation2] sm:$0xff]
    %v85 = vld [vmem:[#allocation2 + $0x8] sm:$0xff]
    %v86 = vld [vmem:[#allocation2 + $0x10] sm:$0xff]
    %v87 = vld [vmem:[#allocation2 + $0x18] sm:$0x3]
    %v92 = vcombine.high %v84, %v84
    %v94 = vunpack.c.l.s4 1983009808
    %v95 = vunpack.c.0.s8 %v94
    %v96 = vlaneseq
    %v97 = vshrl.u32 %v96, 7
    %v98 = vsub.s32 %v95, %v97
    %v99 = vrot.slane %v84, %v98
    %v101 = vunpack.c.l.s4 1983009808
    %v102 = vunpack.c.0.s8 %v101
    %v103 = vlaneseq
    %v104 = vshrl.u32 %v103, 7
    %v105 = vsub.s32 %v102, %v104
    %v106 = vrot.slane %v92, %v105
    %v107 = vcombine.high %v99, %v99
    %v108 = vcombine.high %v106, %v106
    %v109 = vcombine.high %v85, %v85
    %v111 = vunpack.c.l.s4 1983009808
    %v112 = vunpack.c.0.s8 %v111
    %v113 = vlaneseq
    %v114 = vshrl.u32 %v113, 7
    %v115 = vsub.s32 %v112, %v114
    %v116 = vrot.slane %v85, %v115
    %v118 = vunpack.c.l.s4 1983009808
    %v119 = vunpack.c.0.s8 %v118
    %v120 = vlaneseq
    %v121 = vshrl.u32 %v120, 7
    %v122 = vsub.s32 %v119, %v121
    %v123 = vrot.slane %v109, %v122
    %v124 = vcombine.high %v116, %v116
    %v125 = vcombine.high %v123, %v123
    %v126 = vcombine.high %v86, %v86
    %v128 = vunpack.c.l.s4 1983009808
    %v129 = vunpack.c.0.s8 %v128
    %v130 = vlaneseq
    %v131 = vshrl.u32 %v130, 7
    %v132 = vsub.s32 %v129, %v131
    %v133 = vrot.slane %v86, %v132
    %v135 = vunpack.c.l.s4 1983009808
    %v136 = vunpack.c.0.s8 %v135
    %v137 = vlaneseq
    %v138 = vshrl.u32 %v137, 7
    %v139 = vsub.s32 %v136, %v138
    %v140 = vrot.slane %v126, %v139
    %v141 = vcombine.high %v133, %v133
    %v142 = vcombine.high %v140, %v140
    %v144 = vunpack.c.l.s4 1983009808
    %v145 = vunpack.c.0.s8 %v144
    %v146 = vlaneseq
    %v147 = vshrl.u32 %v146, 7
    %v148 = vsub.s32 %v145, %v147
    %v149 = vrot.slane %v87, %v148
    %v163 = vpack.c.bf16 %v99, %v99
    %v164 = vpack.c.bf16 %v107, %v107
    %v165 = vpack.c.bf16 %v106, %v106
    %v166 = vpack.c.bf16 %v108, %v108
    %v167 = vpack.c.bf16 %v116, %v116
    %v168 = vpack.c.bf16 %v124, %v124
    %v169 = vpack.c.bf16 %v123, %v123
    %v170 = vpack.c.bf16 %v125, %v125
    %v171 = vpack.c.bf16 %v133, %v133
    %v172 = vpack.c.bf16 %v141, %v141
    %v173 = vpack.c.bf16 %v140, %v140
    %v174 = vpack.c.bf16 %v142, %v142
    %v175 = vpack.c.bf16 %v149, %v149
    %v176 = vld [vmem:[#allocation5] sm:$0xff]
    %v177 = vld [vmem:[#allocation5 + $0x8] sm:$0xff]
    %v178 = vld [vmem:[#allocation5 + $0x10] sm:$0xff]
    %v179 = vld [vmem:[#allocation5 + $0x18] sm:$0xff]
    %v180 = vld [vmem:[#allocation5 + $0x20] sm:$0xff]
    %v181 = vld [vmem:[#allocation5 + $0x28] sm:$0xff]
    %v182 = vld [vmem:[#allocation5 + $0x30] sm:$0xff]
    %v183 = vld [vmem:[#allocation5 + $0x38] sm:$0xff]
    %v184 = vld [vmem:[#allocation5 + $0x40] sm:$0xff]
    %v185 = vld [vmem:[#allocation5 + $0x48] sm:$0xff]
    %v186 = vld [vmem:[#allocation5 + $0x50] sm:$0xff]
    %v187 = vld [vmem:[#allocation5 + $0x58] sm:$0xff]
    %v188 = vld [vmem:[#allocation5 + $0x60] sm:$0xff]
    %v189 = vld [vmem:[#allocation5 + $0x68] sm:$0xff]
    %v190 = vld [vmem:[#allocation5 + $0x70] sm:$0xff]
    %v191 = vld [vmem:[#allocation5 + $0x78] sm:$0xff]
    %v192 = vld [vmem:[#allocation5 + $0x80] sm:$0xff]
    %v193 = vld [vmem:[#allocation5 + $0x88] sm:$0xff]
    %v194 = vld [vmem:[#allocation5 + $0x90] sm:$0xff]
    %v195 = vld [vmem:[#allocation5 + $0x98] sm:$0xff]
    %v196 = vld [vmem:[#allocation5 + $0xa0] sm:$0xff]
    %v197 = vld [vmem:[#allocation5 + $0xa8] sm:$0xff]
    %v198 = vld [vmem:[#allocation5 + $0xb0] sm:$0xff]
    %v199 = vld [vmem:[#allocation5 + $0xb8] sm:$0xff]
    %v200 = vld [vmem:[#allocation5 + $0xc0] sm:$0xff]
    %v201 = vld [vmem:[#allocation5 + $0xc8] sm:$0xff]
    %v202 = vld [vmem:[#allocation5 + $0xd0] sm:$0xff]
    %v203 = vld [vmem:[#allocation5 + $0xd8] sm:$0xff]
    %v204 = vld [vmem:[#allocation5 + $0xe0] sm:$0xff]
    %v205 = vld [vmem:[#allocation5 + $0xe8] sm:$0xff]
    %v206 = vld [vmem:[#allocation5 + $0xf0] sm:$0xff]
    %v207 = vld [vmem:[#allocation5 + $0xf8] sm:$0xff]
    %v208 = vld [vmem:[#allocation5 + $0x100] sm:$0xff]
    %v209 = vld [vmem:[#allocation5 + $0x108] sm:$0xff]
    %v210 = vld [vmem:[#allocation5 + $0x110] sm:$0xff]
    %v211 = vld [vmem:[#allocation5 + $0x118] sm:$0xff]
    %v212 = vld [vmem:[#allocation5 + $0x120] sm:$0xff]
    %v213 = vld [vmem:[#allocation5 + $0x128] sm:$0xff]
    %v214 = vld [vmem:[#allocation5 + $0x130] sm:$0xff]
    %v215 = vld [vmem:[#allocation5 + $0x138] sm:$0xff]
    %v216 = vld [vmem:[#allocation5 + $0x140] sm:$0xff]
    %v217 = vld [vmem:[#allocation5 + $0x148] sm:$0xff]
    %v218 = vld [vmem:[#allocation5 + $0x150] sm:$0xff]
    %v219 = vld [vmem:[#allocation5 + $0x158] sm:$0xff]
    %v220 = vld [vmem:[#allocation5 + $0x160] sm:$0xff]
    %v221 = vld [vmem:[#allocation5 + $0x168] sm:$0xff]
    %v222 = vld [vmem:[#allocation5 + $0x170] sm:$0xff]
    %v223 = vld [vmem:[#allocation5 + $0x178] sm:$0xff]
    %v224 = vld [vmem:[#allocation5 + $0x180] sm:$0xff]
    %v225 = vld [vmem:[#allocation5 + $0x188] sm:$0xff]
    %v226 = vld [vmem:[#allocation5 + $0x190] sm:$0xff]
    %v227 = vld [vmem:[#allocation5 + $0x198] sm:$0xff]
    %v228 = vld [vmem:[#allocation5 + $0x1a0] sm:$0xff]
    %v229 = vld [vmem:[#allocation5 + $0x1a8] sm:$0xff]
    %v230 = vld [vmem:[#allocation5 + $0x1b0] sm:$0xff]
    %v231 = vld [vmem:[#allocation5 + $0x1b8] sm:$0xff]
    %v232 = vld [vmem:[#allocation5 + $0x1c0] sm:$0xff]
    %v233 = vld [vmem:[#allocation5 + $0x1c8] sm:$0xff]
    %v234 = vld [vmem:[#allocation5 + $0x1d0] sm:$0xff]
    %v235 = vld [vmem:[#allocation5 + $0x1d8] sm:$0xff]
    %v236 = vld [vmem:[#allocation5 + $0x1e0] sm:$0xff]
    %v237 = vld [vmem:[#allocation5 + $0x1e8] sm:$0xff]
    %v238 = vld [vmem:[#allocation5 + $0x1f0] sm:$0xff]
    %v239 = vld [vmem:[#allocation5 + $0x1f8] sm:$0xff]
    %v240 = vld [vmem:[#allocation5 + $0x200] sm:$0xff]
    %v241 = vld [vmem:[#allocation5 + $0x208] sm:$0xff]
    %v242 = vld [vmem:[#allocation5 + $0x210] sm:$0xff]
    %v243 = vld [vmem:[#allocation5 + $0x218] sm:$0xff]
    %v244 = vld [vmem:[#allocation5 + $0x220] sm:$0xff]
    %v245 = vld [vmem:[#allocation5 + $0x228] sm:$0xff]
    %v246 = vld [vmem:[#allocation5 + $0x230] sm:$0xff]
    %v247 = vld [vmem:[#allocation5 + $0x238] sm:$0xff]
    %v248 = vld [vmem:[#allocation5 + $0x240] sm:$0xff]
    %v249 = vld [vmem:[#allocation5 + $0x248] sm:$0xff]
    %v250 = vld [vmem:[#allocation5 + $0x250] sm:$0xff]
    %v251 = vld [vmem:[#allocation5 + $0x258] sm:$0xff]
    %v252 = vld [vmem:[#allocation5 + $0x260] sm:$0xff]
    %v253 = vld [vmem:[#allocation5 + $0x268] sm:$0xff]
    %v254 = vld [vmem:[#allocation5 + $0x270] sm:$0xff]
    %v255 = vld [vmem:[#allocation5 + $0x278] sm:$0xff]
    %v256 = vld [vmem:[#allocation5 + $0x280] sm:$0xff]
    %v257 = vld [vmem:[#allocation5 + $0x288] sm:$0xff]
    %v258 = vld [vmem:[#allocation5 + $0x290] sm:$0xff]
    %v259 = vld [vmem:[#allocation5 + $0x298] sm:$0xff]
    %v260 = vld [vmem:[#allocation5 + $0x2a0] sm:$0xff]
    %v261 = vld [vmem:[#allocation5 + $0x2a8] sm:$0xff]
    %v262 = vld [vmem:[#allocation5 + $0x2b0] sm:$0xff]
    %v263 = vld [vmem:[#allocation5 + $0x2b8] sm:$0xff]
    %v264 = vld [vmem:[#allocation5 + $0x2c0] sm:$0xff]
    %v265 = vld [vmem:[#allocation5 + $0x2c8] sm:$0xff]
    %v266 = vld [vmem:[#allocation5 + $0x2d0] sm:$0xff]
    %v267 = vld [vmem:[#allocation5 + $0x2d8] sm:$0xff]
    %v268 = vld [vmem:[#allocation5 + $0x2e0] sm:$0xff]
    %v269 = vld [vmem:[#allocation5 + $0x2e8] sm:$0xff]
    %v270 = vld [vmem:[#allocation5 + $0x2f0] sm:$0xff]
    %v271 = vld [vmem:[#allocation5 + $0x2f8] sm:$0xff]
    %v272 = vld [vmem:[#allocation5 + $0x300] sm:$0xff]
    %v273 = vld [vmem:[#allocation5 + $0x308] sm:$0xff]
    %v274 = vld [vmem:[#allocation5 + $0x310] sm:$0xff]
    %v275 = vld [vmem:[#allocation5 + $0x318] sm:$0xff]
    %v276 = vld [vmem:[#allocation5 + $0x320] sm:$0xff]
    %v277 = vld [vmem:[#allocation5 + $0x328] sm:$0xff]
    %v278 = vld [vmem:[#allocation5 + $0x330] sm:$0xff]
    %v279 = vld [vmem:[#allocation5 + $0x338] sm:$0xff]
    %v280 = vld [vmem:[#allocation5 + $0x340] sm:$0xff]
    %v281 = vld [vmem:[#allocation5 + $0x348] sm:$0xff]
    %v282 = vld [vmem:[#allocation5 + $0x350] sm:$0xff]
    %v283 = vld [vmem:[#allocation5 + $0x358] sm:$0xff]
    %v284 = vld [vmem:[#allocation5 + $0x360] sm:$0xff]
    %v285 = vld [vmem:[#allocation5 + $0x368] sm:$0xff]
    %v286 = vld [vmem:[#allocation5 + $0x370] sm:$0xff]
    %v287 = vld [vmem:[#allocation5 + $0x378] sm:$0xff]
    %v288 = vld [vmem:[#allocation5 + $0x380] sm:$0xff]
    %v289 = vld [vmem:[#allocation5 + $0x388] sm:$0xff]
    %v290 = vld [vmem:[#allocation5 + $0x390] sm:$0xff]
    %v291 = vld [vmem:[#allocation5 + $0x398] sm:$0xff]
    %v292 = vld [vmem:[#allocation5 + $0x3a0] sm:$0xff]
    %v293 = vld [vmem:[#allocation5 + $0x3a8] sm:$0xff]
    %v294 = vld [vmem:[#allocation5 + $0x3b0] sm:$0xff]
    %v295 = vld [vmem:[#allocation5 + $0x3b8] sm:$0xff]
    %v296 = vld [vmem:[#allocation5 + $0x3c0] sm:$0xff]
    %v297 = vld [vmem:[#allocation5 + $0x3c8] sm:$0xff]
    %v298 = vld [vmem:[#allocation5 + $0x3d0] sm:$0xff]
    %v299 = vld [vmem:[#allocation5 + $0x3d8] sm:$0xff]
    %v300 = vld [vmem:[#allocation5 + $0x3e0] sm:$0xff]
    %v301 = vld [vmem:[#allocation5 + $0x3e8] sm:$0xff]
    %v302 = vld [vmem:[#allocation5 + $0x3f0] sm:$0xff]
    %v303 = vld [vmem:[#allocation5 + $0x3f8] sm:$0xff]
    %v304 = vld [vmem:[#allocation5 + $0x400] sm:$0xff]
    %v305 = vld [vmem:[#allocation5 + $0x408] sm:$0xff]
    %v306 = vld [vmem:[#allocation5 + $0x410] sm:$0xff]
    %v307 = vld [vmem:[#allocation5 + $0x418] sm:$0xff]
    %v308 = vld [vmem:[#allocation5 + $0x420] sm:$0xff]
    %v309 = vld [vmem:[#allocation5 + $0x428] sm:$0xff]
    %v310 = vld [vmem:[#allocation5 + $0x430] sm:$0xff]
    %v311 = vld [vmem:[#allocation5 + $0x438] sm:$0xff]
    %v312 = vld [vmem:[#allocation5 + $0x440] sm:$0xff]
    %v313 = vld [vmem:[#allocation5 + $0x448] sm:$0xff]
    %v314 = vld [vmem:[#allocation5 + $0x450] sm:$0xff]
    %v315 = vld [vmem:[#allocation5 + $0x458] sm:$0xff]
    %v316 = vld [vmem:[#allocation5 + $0x460] sm:$0xff]
    %v317 = vld [vmem:[#allocation5 + $0x468] sm:$0xff]
    %v318 = vld [vmem:[#allocation5 + $0x470] sm:$0xff]
    %v319 = vld [vmem:[#allocation5 + $0x478] sm:$0xff]
    %v320 = vld [vmem:[#allocation5 + $0x480] sm:$0xff]
    %v321 = vld [vmem:[#allocation5 + $0x488] sm:$0xff]
    %v322 = vld [vmem:[#allocation5 + $0x490] sm:$0xff]
    %v323 = vld [vmem:[#allocation5 + $0x498] sm:$0xff]
    %v324 = vld [vmem:[#allocation5 + $0x4a0] sm:$0xff]
    %v325 = vld [vmem:[#allocation5 + $0x4a8] sm:$0xff]
    %v326 = vld [vmem:[#allocation5 + $0x4b0] sm:$0xff]
    %v327 = vld [vmem:[#allocation5 + $0x4b8] sm:$0xff]
    %v328 = vld [vmem:[#allocation5 + $0x4c0] sm:$0xff]
    %v329 = vld [vmem:[#allocation5 + $0x4c8] sm:$0xff]
    %v330 = vld [vmem:[#allocation5 + $0x4d0] sm:$0xff]
    %v331 = vld [vmem:[#allocation5 + $0x4d8] sm:$0xff]
    %v332 = vld [vmem:[#allocation5 + $0x4e0] sm:$0xff]
    %v333 = vld [vmem:[#allocation5 + $0x4e8] sm:$0xff]
    %v334 = vld [vmem:[#allocation5 + $0x4f0] sm:$0xff]
    %v335 = vld [vmem:[#allocation5 + $0x4f8] sm:$0xff]
    %v336 = vld [vmem:[#allocation5 + $0x500] sm:$0xff]
    %v337 = vld [vmem:[#allocation5 + $0x508] sm:$0xff]
    %v338 = vld [vmem:[#allocation5 + $0x510] sm:$0xff]
    %v339 = vld [vmem:[#allocation5 + $0x518] sm:$0xff]
    %v340 = vld [vmem:[#allocation5 + $0x520] sm:$0xff]
    %v341 = vld [vmem:[#allocation5 + $0x528] sm:$0xff]
    %v342 = vld [vmem:[#allocation5 + $0x530] sm:$0xff]
    %v343 = vld [vmem:[#allocation5 + $0x538] sm:$0xff]
    %v344 = vld [vmem:[#allocation5 + $0x540] sm:$0xff]
    %v345 = vld [vmem:[#allocation5 + $0x548] sm:$0xff]
    %v346 = vld [vmem:[#allocation5 + $0x550] sm:$0xff]
    %v347 = vld [vmem:[#allocation5 + $0x558] sm:$0xff]
    %v348 = vld [vmem:[#allocation5 + $0x560] sm:$0xff]
    %v349 = vld [vmem:[#allocation5 + $0x568] sm:$0xff]
    %v350 = vld [vmem:[#allocation5 + $0x570] sm:$0xff]
    %v351 = vld [vmem:[#allocation5 + $0x578] sm:$0xff]
    %v352 = vld [vmem:[#allocation5 + $0x580] sm:$0xff]
    %v353 = vld [vmem:[#allocation5 + $0x588] sm:$0xff]
    %v354 = vld [vmem:[#allocation5 + $0x590] sm:$0xff]
    %v355 = vld [vmem:[#allocation5 + $0x598] sm:$0xff]
    %v356 = vld [vmem:[#allocation5 + $0x5a0] sm:$0xff]
    %v357 = vld [vmem:[#allocation5 + $0x5a8] sm:$0xff]
    %v358 = vld [vmem:[#allocation5 + $0x5b0] sm:$0xff]
    %v359 = vld [vmem:[#allocation5 + $0x5b8] sm:$0xff]
    %v360 = vld [vmem:[#allocation5 + $0x5c0] sm:$0xff]
    %v361 = vld [vmem:[#allocation5 + $0x5c8] sm:$0xff]
    %v362 = vld [vmem:[#allocation5 + $0x5d0] sm:$0xff]
    %v363 = vld [vmem:[#allocation5 + $0x5d8] sm:$0xff]
    %v364 = vld [vmem:[#allocation5 + $0x5e0] sm:$0xff]
    %v365 = vld [vmem:[#allocation5 + $0x5e8] sm:$0xff]
    %v366 = vld [vmem:[#allocation5 + $0x5f0] sm:$0xff]
    %v367 = vld [vmem:[#allocation5 + $0x5f8] sm:$0xff]
    %v368 = vld [vmem:[#allocation5 + $0x600] sm:$0xff]
    %v369 = vld [vmem:[#allocation5 + $0x608] sm:$0xff]
    %v370 = vld [vmem:[#allocation5 + $0x610] sm:$0xff]
    %v371 = vld [vmem:[#allocation5 + $0x618] sm:$0xff]
    %v372 = vld [vmem:[#allocation5 + $0x620] sm:$0xff]
    %v373 = vld [vmem:[#allocation5 + $0x628] sm:$0xff]
    %v374 = vld [vmem:[#allocation5 + $0x630] sm:$0xff]
    %v375 = vld [vmem:[#allocation5 + $0x638] sm:$0xff]
    %v376 = vld [vmem:[#allocation5 + $0x640] sm:$0xff]
    %v377 = vld [vmem:[#allocation5 + $0x648] sm:$0xff]
    %v378 = vld [vmem:[#allocation5 + $0x650] sm:$0xff]
    %v379 = vld [vmem:[#allocation5 + $0x658] sm:$0xff]
    %v380 = vld [vmem:[#allocation5 + $0x660] sm:$0xff]
    %v381 = vld [vmem:[#allocation5 + $0x668] sm:$0xff]
    %v382 = vld [vmem:[#allocation5 + $0x670] sm:$0xff]
    %v383 = vld [vmem:[#allocation5 + $0x678] sm:$0xff]
    %v384 = vld [vmem:[#allocation5 + $0x680] sm:$0xff]
    %v385 = vld [vmem:[#allocation5 + $0x688] sm:$0xff]
    %v386 = vld [vmem:[#allocation5 + $0x690] sm:$0xff]
    %v387 = vld [vmem:[#allocation5 + $0x698] sm:$0xff]
    %v388 = vld [vmem:[#allocation5 + $0x6a0] sm:$0xff]
    %v389 = vld [vmem:[#allocation5 + $0x6a8] sm:$0xff]
    %v390 = vld [vmem:[#allocation5 + $0x6b0] sm:$0xff]
    %v391 = vld [vmem:[#allocation5 + $0x6b8] sm:$0xff]
    %v392 = vld [vmem:[#allocation5 + $0x6c0] sm:$0xff]
    %v393 = vld [vmem:[#allocation5 + $0x6c8] sm:$0xff]
    %v394 = vld [vmem:[#allocation5 + $0x6d0] sm:$0xff]
    %v395 = vld [vmem:[#allocation5 + $0x6d8] sm:$0xff]
    %v396 = vld [vmem:[#allocation5 + $0x6e0] sm:$0xff]
    %v397 = vld [vmem:[#allocation5 + $0x6e8] sm:$0xff]
    %v398 = vld [vmem:[#allocation5 + $0x6f0] sm:$0xff]
    %v399 = vld [vmem:[#allocation5 + $0x6f8] sm:$0xff]
    %v400 = vld [vmem:[#allocation5 + $0x700] sm:$0xff]
    %v401 = vld [vmem:[#allocation5 + $0x708] sm:$0xff]
    %v402 = vld [vmem:[#allocation5 + $0x710] sm:$0xff]
    %v403 = vld [vmem:[#allocation5 + $0x718] sm:$0xff]
    %v404 = vld [vmem:[#allocation5 + $0x720] sm:$0xff]
    %v405 = vld [vmem:[#allocation5 + $0x728] sm:$0xff]
    %v406 = vld [vmem:[#allocation5 + $0x730] sm:$0xff]
    %v407 = vld [vmem:[#allocation5 + $0x738] sm:$0xff]
    %v408 = vld [vmem:[#allocation5 + $0x740] sm:$0xff]
    %v409 = vld [vmem:[#allocation5 + $0x748] sm:$0xff]
    %v410 = vld [vmem:[#allocation5 + $0x750] sm:$0xff]
    %v411 = vld [vmem:[#allocation5 + $0x758] sm:$0xff]
    %v412 = vld [vmem:[#allocation5 + $0x760] sm:$0xff]
    %v413 = vld [vmem:[#allocation5 + $0x768] sm:$0xff]
    %v414 = vld [vmem:[#allocation5 + $0x770] sm:$0xff]
    %v415 = vld [vmem:[#allocation5 + $0x778] sm:$0xff]
    %v416 = vld [vmem:[#allocation5 + $0x780] sm:$0xff]
    %v417 = vld [vmem:[#allocation5 + $0x788] sm:$0xff]
    %v418 = vld [vmem:[#allocation5 + $0x790] sm:$0xff]
    %v419 = vld [vmem:[#allocation5 + $0x798] sm:$0xff]
    %v420 = vld [vmem:[#allocation5 + $0x7a0] sm:$0xff]
    %v421 = vld [vmem:[#allocation5 + $0x7a8] sm:$0xff]
    %v422 = vld [vmem:[#allocation5 + $0x7b0] sm:$0xff]
    %v423 = vld [vmem:[#allocation5 + $0x7b8] sm:$0xff]
    %v424 = vld [vmem:[#allocation5 + $0x7c0] sm:$0xff]
    %v425 = vld [vmem:[#allocation5 + $0x7c8] sm:$0xff]
    %v426 = vld [vmem:[#allocation5 + $0x7d0] sm:$0xff]
    %v427 = vld [vmem:[#allocation5 + $0x7d8] sm:$0xff]
    %v428 = vld [vmem:[#allocation5 + $0x7e0] sm:$0xff]
    %v429 = vld [vmem:[#allocation5 + $0x7e8] sm:$0xff]
    %v430 = vld [vmem:[#allocation5 + $0x7f0] sm:$0xff]
    %v431 = vld [vmem:[#allocation5 + $0x7f8] sm:$0xff]
    %v432 = vld [vmem:[#allocation5 + $0x800] sm:$0xff]
    %v433 = vld [vmem:[#allocation5 + $0x808] sm:$0xff]
    %v434 = vld [vmem:[#allocation5 + $0x810] sm:$0xff]
    %v435 = vld [vmem:[#allocation5 + $0x818] sm:$0xff]
    %v436 = vld [vmem:[#allocation5 + $0x820] sm:$0xff]
    %v437 = vld [vmem:[#allocation5 + $0x828] sm:$0xff]
    %v438 = vld [vmem:[#allocation5 + $0x830] sm:$0xff]
    %v439 = vld [vmem:[#allocation5 + $0x838] sm:$0xff]
    %v440 = vld [vmem:[#allocation5 + $0x840] sm:$0xff]
    %v441 = vld [vmem:[#allocation5 + $0x848] sm:$0xff]
    %v442 = vld [vmem:[#allocation5 + $0x850] sm:$0xff]
    %v443 = vld [vmem:[#allocation5 + $0x858] sm:$0xff]
    %v444 = vld [vmem:[#allocation5 + $0x860] sm:$0xff]
    %v445 = vld [vmem:[#allocation5 + $0x868] sm:$0xff]
    %v446 = vld [vmem:[#allocation5 + $0x870] sm:$0xff]
    %v447 = vld [vmem:[#allocation5 + $0x878] sm:$0xff]
    %v448 = vld [vmem:[#allocation5 + $0x880] sm:$0xff]
    %v449 = vld [vmem:[#allocation5 + $0x888] sm:$0xff]
    %v450 = vld [vmem:[#allocation5 + $0x890] sm:$0xff]
    %v451 = vld [vmem:[#allocation5 + $0x898] sm:$0xff]
    %v452 = vld [vmem:[#allocation5 + $0x8a0] sm:$0xff]
    %v453 = vld [vmem:[#allocation5 + $0x8a8] sm:$0xff]
    %v454 = vld [vmem:[#allocation5 + $0x8b0] sm:$0xff]
    %v455 = vld [vmem:[#allocation5 + $0x8b8] sm:$0xff]
    %v456 = vld [vmem:[#allocation5 + $0x8c0] sm:$0xff]
    %v457 = vld [vmem:[#allocation5 + $0x8c8] sm:$0xff]
    %v458 = vld [vmem:[#allocation5 + $0x8d0] sm:$0xff]
    %v459 = vld [vmem:[#allocation5 + $0x8d8] sm:$0xff]
    %v460 = vld [vmem:[#allocation5 + $0x8e0] sm:$0xff]
    %v461 = vld [vmem:[#allocation5 + $0x8e8] sm:$0xff]
    %v462 = vld [vmem:[#allocation5 + $0x8f0] sm:$0xff]
    %v463 = vld [vmem:[#allocation5 + $0x8f8] sm:$0xff]
    %v464 = vld [vmem:[#allocation5 + $0x900] sm:$0xff]
    %v465 = vld [vmem:[#allocation5 + $0x908] sm:$0xff]
    %v466 = vld [vmem:[#allocation5 + $0x910] sm:$0xff]
    %v467 = vld [vmem:[#allocation5 + $0x918] sm:$0xff]
    %v468 = vld [vmem:[#allocation5 + $0x920] sm:$0xff]
    %v469 = vld [vmem:[#allocation5 + $0x928] sm:$0xff]
    %v470 = vld [vmem:[#allocation5 + $0x930] sm:$0xff]
    %v471 = vld [vmem:[#allocation5 + $0x938] sm:$0xff]
    %v472 = vld [vmem:[#allocation5 + $0x940] sm:$0xff]
    %v473 = vld [vmem:[#allocation5 + $0x948] sm:$0xff]
    %v474 = vld [vmem:[#allocation5 + $0x950] sm:$0xff]
    %v475 = vld [vmem:[#allocation5 + $0x958] sm:$0xff]
    %v476 = vld [vmem:[#allocation5 + $0x960] sm:$0xff]
    %v477 = vld [vmem:[#allocation5 + $0x968] sm:$0xff]
    %v478 = vld [vmem:[#allocation5 + $0x970] sm:$0xff]
    %v479 = vld [vmem:[#allocation5 + $0x978] sm:$0xff]
    %v480 = vld [vmem:[#allocation5 + $0x980] sm:$0xff]
    %v481 = vld [vmem:[#allocation5 + $0x988] sm:$0xff]
    %v482 = vld [vmem:[#allocation5 + $0x990] sm:$0xff]
    %v483 = vld [vmem:[#allocation5 + $0x998] sm:$0xff]
    %v484 = vld [vmem:[#allocation5 + $0x9a0] sm:$0xff]
    %v485 = vld [vmem:[#allocation5 + $0x9a8] sm:$0xff]
    %v486 = vld [vmem:[#allocation5 + $0x9b0] sm:$0xff]
    %v487 = vld [vmem:[#allocation5 + $0x9b8] sm:$0xff]
    %v488 = vld [vmem:[#allocation5 + $0x9c0] sm:$0xff]
    %v489 = vld [vmem:[#allocation5 + $0x9c8] sm:$0xff]
    %v490 = vld [vmem:[#allocation5 + $0x9d0] sm:$0xff]
    %v491 = vld [vmem:[#allocation5 + $0x9d8] sm:$0xff]
    %v492 = vld [vmem:[#allocation5 + $0x9e0] sm:$0xff]
    %v493 = vld [vmem:[#allocation5 + $0x9e8] sm:$0xff]
    %v494 = vld [vmem:[#allocation5 + $0x9f0] sm:$0xff]
    %v495 = vld [vmem:[#allocation5 + $0x9f8] sm:$0xff]
    %v496 = vld [vmem:[#allocation5 + $0xa00] sm:$0xff]
    %v497 = vld [vmem:[#allocation5 + $0xa08] sm:$0xff]
    %v498 = vld [vmem:[#allocation5 + $0xa10] sm:$0xff]
    %v499 = vld [vmem:[#allocation5 + $0xa18] sm:$0xff]
    %v500 = vld [vmem:[#allocation5 + $0xa20] sm:$0xff]
    %v501 = vld [vmem:[#allocation5 + $0xa28] sm:$0xff]
    %v502 = vld [vmem:[#allocation5 + $0xa30] sm:$0xff]
    %v503 = vld [vmem:[#allocation5 + $0xa38] sm:$0xff]
    %v504 = vld [vmem:[#allocation5 + $0xa40] sm:$0xff]
    %v505 = vld [vmem:[#allocation5 + $0xa48] sm:$0xff]
    %v506 = vld [vmem:[#allocation5 + $0xa50] sm:$0xff]
    %v507 = vld [vmem:[#allocation5 + $0xa58] sm:$0xff]
    %v508 = vld [vmem:[#allocation5 + $0xa60] sm:$0xff]
    %v509 = vld [vmem:[#allocation5 + $0xa68] sm:$0xff]
    %v510 = vld [vmem:[#allocation5 + $0xa70] sm:$0xff]
    %v511 = vld [vmem:[#allocation5 + $0xa78] sm:$0xff]
    %v512 = vld [vmem:[#allocation5 + $0xa80] sm:$0xff]
    %v513 = vld [vmem:[#allocation5 + $0xa88] sm:$0xff]
    %v514 = vld [vmem:[#allocation5 + $0xa90] sm:$0xff]
    %v515 = vld [vmem:[#allocation5 + $0xa98] sm:$0xff]
    %v516 = vld [vmem:[#allocation5 + $0xaa0] sm:$0xff]
    %v517 = vld [vmem:[#allocation5 + $0xaa8] sm:$0xff]
    %v518 = vld [vmem:[#allocation5 + $0xab0] sm:$0xff]
    %v519 = vld [vmem:[#allocation5 + $0xab8] sm:$0xff]
    %v520 = vld [vmem:[#allocation5 + $0xac0] sm:$0xff]
    %v521 = vld [vmem:[#allocation5 + $0xac8] sm:$0xff]
    %v522 = vld [vmem:[#allocation5 + $0xad0] sm:$0xff]
    %v523 = vld [vmem:[#allocation5 + $0xad8] sm:$0xff]
    %v524 = vld [vmem:[#allocation5 + $0xae0] sm:$0xff]
    %v525 = vld [vmem:[#allocation5 + $0xae8] sm:$0xff]
    %v526 = vld [vmem:[#allocation5 + $0xaf0] sm:$0xff]
    %v527 = vld [vmem:[#allocation5 + $0xaf8] sm:$0xff]
    %v528 = vld [vmem:[#allocation5 + $0xb00] sm:$0xff]
    %v529 = vld [vmem:[#allocation5 + $0xb08] sm:$0xff]
    %v530 = vld [vmem:[#allocation5 + $0xb10] sm:$0xff]
    %v531 = vld [vmem:[#allocation5 + $0xb18] sm:$0xff]
    %v532 = vld [vmem:[#allocation5 + $0xb20] sm:$0xff]
    %v533 = vld [vmem:[#allocation5 + $0xb28] sm:$0xff]
    %v534 = vld [vmem:[#allocation5 + $0xb30] sm:$0xff]
    %v535 = vld [vmem:[#allocation5 + $0xb38] sm:$0xff]
    %v536 = vld [vmem:[#allocation5 + $0xb40] sm:$0xff]
    %v537 = vld [vmem:[#allocation5 + $0xb48] sm:$0xff]
    %v538 = vld [vmem:[#allocation5 + $0xb50] sm:$0xff]
    %v539 = vld [vmem:[#allocation5 + $0xb58] sm:$0xff]
    %v540 = vld [vmem:[#allocation5 + $0xb60] sm:$0xff]
    %v541 = vld [vmem:[#allocation5 + $0xb68] sm:$0xff]
    %v542 = vld [vmem:[#allocation5 + $0xb70] sm:$0xff]
    %v543 = vld [vmem:[#allocation5 + $0xb78] sm:$0xff]
    %v544 = vld [vmem:[#allocation5 + $0xb80] sm:$0xff]
    %v545 = vld [vmem:[#allocation5 + $0xb88] sm:$0xff]
    %v546 = vld [vmem:[#allocation5 + $0xb90] sm:$0xff]
    %v547 = vld [vmem:[#allocation5 + $0xb98] sm:$0xff]
    %v548 = vld [vmem:[#allocation5 + $0xba0] sm:$0xff]
    %v549 = vld [vmem:[#allocation5 + $0xba8] sm:$0xff]
    %v550 = vld [vmem:[#allocation5 + $0xbb0] sm:$0xff]
    %v551 = vld [vmem:[#allocation5 + $0xbb8] sm:$0xff]
    %v552 = vld [vmem:[#allocation5 + $0xbc0] sm:$0xff]
    %v553 = vld [vmem:[#allocation5 + $0xbc8] sm:$0xff]
    %v554 = vld [vmem:[#allocation5 + $0xbd0] sm:$0xff]
    %v555 = vld [vmem:[#allocation5 + $0xbd8] sm:$0xff]
    %v556 = vld [vmem:[#allocation5 + $0xbe0] sm:$0xff]
    %v557 = vld [vmem:[#allocation5 + $0xbe8] sm:$0xff]
    %v558 = vld [vmem:[#allocation5 + $0xbf0] sm:$0xff]
    %v559 = vld [vmem:[#allocation5 + $0xbf8] sm:$0xff]
    %v560 = vld [vmem:[#allocation5 + $0xc00] sm:$0xff]
    %v561 = vld [vmem:[#allocation5 + $0xc08] sm:$0xff]
    %v562 = vld [vmem:[#allocation5 + $0xc10] sm:$0xff]
    %v563 = vld [vmem:[#allocation5 + $0xc18] sm:$0xff]
    %v564 = vld [vmem:[#allocation5 + $0xc20] sm:$0xff]
    %v565 = vld [vmem:[#allocation5 + $0xc28] sm:$0xff]
    %v566 = vld [vmem:[#allocation5 + $0xc30] sm:$0xff]
    %v567 = vld [vmem:[#allocation5 + $0xc38] sm:$0xff]
    %v568 = vld [vmem:[#allocation5 + $0xc40] sm:$0xff]
    %v569 = vld [vmem:[#allocation5 + $0xc48] sm:$0xff]
    %v570 = vld [vmem:[#allocation5 + $0xc50] sm:$0xff]
    %v571 = vld [vmem:[#allocation5 + $0xc58] sm:$0xff]
    %v572 = vld [vmem:[#allocation5 + $0xc60] sm:$0xff]
    %v573 = vld [vmem:[#allocation5 + $0xc68] sm:$0xff]
    %v574 = vld [vmem:[#allocation5 + $0xc70] sm:$0xff]
    %v575 = vld [vmem:[#allocation5 + $0xc78] sm:$0xff]
    %v576 = vld [vmem:[#allocation5 + $0xc80] sm:$0xff]
    %v577 = vld [vmem:[#allocation5 + $0xc88] sm:$0xff]
    %v578 = vld [vmem:[#allocation5 + $0xc90] sm:$0xff]
    %v579 = vld [vmem:[#allocation5 + $0xc98] sm:$0xff]
    %v580 = vld [vmem:[#allocation5 + $0xca0] sm:$0xff]
    %v581 = vld [vmem:[#allocation5 + $0xca8] sm:$0xff]
    %v582 = vld [vmem:[#allocation5 + $0xcb0] sm:$0xff]
    %v583 = vld [vmem:[#allocation5 + $0xcb8] sm:$0xff]
    %v584 = vld [vmem:[#allocation5 + $0xcc0] sm:$0xff]
    %v585 = vld [vmem:[#allocation5 + $0xcc8] sm:$0xff]
    %v586 = vld [vmem:[#allocation5 + $0xcd0] sm:$0xff]
    %v587 = vld [vmem:[#allocation5 + $0xcd8] sm:$0xff]
    %v588 = vld [vmem:[#allocation5 + $0xce0] sm:$0xff]
    %v589 = vld [vmem:[#allocation5 + $0xce8] sm:$0xff]
    %v590 = vld [vmem:[#allocation5 + $0xcf0] sm:$0xff]
    %v591 = vld [vmem:[#allocation5 + $0xcf8] sm:$0xff]
    %v592 = vld [vmem:[#allocation5 + $0xd00] sm:$0xff]
    %v593 = vld [vmem:[#allocation5 + $0xd08] sm:$0xff]
    %v594 = vld [vmem:[#allocation5 + $0xd10] sm:$0xff]
    %v595 = vld [vmem:[#allocation5 + $0xd18] sm:$0xff]
    %v596 = vld [vmem:[#allocation5 + $0xd20] sm:$0xff]
    %v597 = vld [vmem:[#allocation5 + $0xd28] sm:$0xff]
    %v598 = vld [vmem:[#allocation5 + $0xd30] sm:$0xff]
    %v599 = vld [vmem:[#allocation5 + $0xd38] sm:$0xff]
    %v600 = vld [vmem:[#allocation5 + $0xd40] sm:$0xff]
    %v601 = vld [vmem:[#allocation5 + $0xd48] sm:$0xff]
    %v602 = vld [vmem:[#allocation5 + $0xd50] sm:$0xff]
    %v603 = vld [vmem:[#allocation5 + $0xd58] sm:$0xff]
    %v604 = vld [vmem:[#allocation5 + $0xd60] sm:$0xff]
    %v605 = vld [vmem:[#allocation5 + $0xd68] sm:$0xff]
    %v606 = vld [vmem:[#allocation5 + $0xd70] sm:$0xff]
    %v607 = vld [vmem:[#allocation5 + $0xd78] sm:$0xff]
    %v608 = vld [vmem:[#allocation5 + $0xd80] sm:$0xff]
    %v609 = vld [vmem:[#allocation5 + $0xd88] sm:$0xff]
    %v610 = vld [vmem:[#allocation5 + $0xd90] sm:$0xff]
    %v611 = vld [vmem:[#allocation5 + $0xd98] sm:$0xff]
    %v612 = vld [vmem:[#allocation5 + $0xda0] sm:$0xff]
    %v613 = vld [vmem:[#allocation5 + $0xda8] sm:$0xff]
    %v614 = vld [vmem:[#allocation5 + $0xdb0] sm:$0xff]
    %v615 = vld [vmem:[#allocation5 + $0xdb8] sm:$0xff]
    %v616 = vld [vmem:[#allocation5 + $0xdc0] sm:$0xff]
    %v617 = vld [vmem:[#allocation5 + $0xdc8] sm:$0xff]
    %v618 = vld [vmem:[#allocation5 + $0xdd0] sm:$0xff]
    %v619 = vld [vmem:[#allocation5 + $0xdd8] sm:$0xff]
    %v620 = vld [vmem:[#allocation5 + $0xde0] sm:$0xff]
    %v621 = vld [vmem:[#allocation5 + $0xde8] sm:$0xff]
    %v622 = vld [vmem:[#allocation5 + $0xdf0] sm:$0xff]
    %v623 = vld [vmem:[#allocation5 + $0xdf8] sm:$0xff]
    %v624 = vld [vmem:[#allocation5 + $0xe00] sm:$0xff]
    %v625 = vld [vmem:[#allocation5 + $0xe08] sm:$0xff]
    %v626 = vld [vmem:[#allocation5 + $0xe10] sm:$0xff]
    %v627 = vld [vmem:[#allocation5 + $0xe18] sm:$0xff]
    %v628 = vld [vmem:[#allocation5 + $0xe20] sm:$0xff]
    %v629 = vld [vmem:[#allocation5 + $0xe28] sm:$0xff]
    %v630 = vld [vmem:[#allocation5 + $0xe30] sm:$0xff]
    %v631 = vld [vmem:[#allocation5 + $0xe38] sm:$0xff]
    %v632 = vld [vmem:[#allocation5 + $0xe40] sm:$0xff]
    %v633 = vld [vmem:[#allocation5 + $0xe48] sm:$0xff]
    %v634 = vld [vmem:[#allocation5 + $0xe50] sm:$0xff]
    %v635 = vld [vmem:[#allocation5 + $0xe58] sm:$0xff]
    %v636 = vld [vmem:[#allocation5 + $0xe60] sm:$0xff]
    %v637 = vld [vmem:[#allocation5 + $0xe68] sm:$0xff]
    %v638 = vld [vmem:[#allocation5 + $0xe70] sm:$0xff]
    %v639 = vld [vmem:[#allocation5 + $0xe78] sm:$0xff]
    %v640 = vld [vmem:[#allocation5 + $0xe80] sm:$0xff]
    %v641 = vld [vmem:[#allocation5 + $0xe88] sm:$0xff]
    %v642 = vld [vmem:[#allocation5 + $0xe90] sm:$0xff]
    %v643 = vld [vmem:[#allocation5 + $0xe98] sm:$0xff]
    %v644 = vld [vmem:[#allocation5 + $0xea0] sm:$0xff]
    %v645 = vld [vmem:[#allocation5 + $0xea8] sm:$0xff]
    %v646 = vld [vmem:[#allocation5 + $0xeb0] sm:$0xff]
    %v647 = vld [vmem:[#allocation5 + $0xeb8] sm:$0xff]
    %v648 = vld [vmem:[#allocation5 + $0xec0] sm:$0xff]
    %v649 = vld [vmem:[#allocation5 + $0xec8] sm:$0xff]
    %v650 = vld [vmem:[#allocation5 + $0xed0] sm:$0xff]
    %v651 = vld [vmem:[#allocation5 + $0xed8] sm:$0xff]
    %v652 = vld [vmem:[#allocation5 + $0xee0] sm:$0xff]
    %v653 = vld [vmem:[#allocation5 + $0xee8] sm:$0xff]
    %v654 = vld [vmem:[#allocation5 + $0xef0] sm:$0xff]
    %v655 = vld [vmem:[#allocation5 + $0xef8] sm:$0xff]
    %v656 = vld [vmem:[#allocation5 + $0xf00] sm:$0xff]
    %v657 = vld [vmem:[#allocation5 + $0xf08] sm:$0xff]
    %v658 = vld [vmem:[#allocation5 + $0xf10] sm:$0xff]
    %v659 = vld [vmem:[#allocation5 + $0xf18] sm:$0xff]
    %v660 = vld [vmem:[#allocation5 + $0xf20] sm:$0xff]
    %v661 = vld [vmem:[#allocation5 + $0xf28] sm:$0xff]
    %v662 = vld [vmem:[#allocation5 + $0xf30] sm:$0xff]
    %v663 = vld [vmem:[#allocation5 + $0xf38] sm:$0xff]
    %v664 = vld [vmem:[#allocation5 + $0xf40] sm:$0xff]
    %v665 = vld [vmem:[#allocation5 + $0xf48] sm:$0xff]
    %v666 = vld [vmem:[#allocation5 + $0xf50] sm:$0xff]
    %v667 = vld [vmem:[#allocation5 + $0xf58] sm:$0xff]
    %v668 = vld [vmem:[#allocation5 + $0xf60] sm:$0xff]
    %v669 = vld [vmem:[#allocation5 + $0xf68] sm:$0xff]
    %v670 = vld [vmem:[#allocation5 + $0xf70] sm:$0xff]
    %v671 = vld [vmem:[#allocation5 + $0xf78] sm:$0xff]
    %v672 = vld [vmem:[#allocation5 + $0xf80] sm:$0xff]
    %v673 = vld [vmem:[#allocation5 + $0xf88] sm:$0xff]
    %v674 = vld [vmem:[#allocation5 + $0xf90] sm:$0xff]
    %v675 = vld [vmem:[#allocation5 + $0xf98] sm:$0xff]
    %v676 = vld [vmem:[#allocation5 + $0xfa0] sm:$0xff]
    %v677 = vld [vmem:[#allocation5 + $0xfa8] sm:$0xff]
    %v678 = vld [vmem:[#allocation5 + $0xfb0] sm:$0xff]
    %v679 = vld [vmem:[#allocation5 + $0xfb8] sm:$0xff]
    %v680 = vld [vmem:[#allocation5 + $0xfc0] sm:$0xff]
    %v681 = vld [vmem:[#allocation5 + $0xfc8] sm:$0xff]
    %v682 = vld [vmem:[#allocation5 + $0xfd0] sm:$0xff]
    %v683 = vld [vmem:[#allocation5 + $0xfd8] sm:$0xff]
    %v684 = vld [vmem:[#allocation5 + $0xfe0] sm:$0xff]
    %v685 = vld [vmem:[#allocation5 + $0xfe8] sm:$0xff]
    %v686 = vld [vmem:[#allocation5 + $0xff0] sm:$0xff]
    %v687 = vld [vmem:[#allocation5 + $0xff8] sm:$0xff]
    %v688 = vld [vmem:[#allocation5 + $0x1000] sm:$0xff]
    %v689 = vld [vmem:[#allocation5 + $0x1008] sm:$0xff]
    %v690 = vld [vmem:[#allocation5 + $0x1010] sm:$0xff]
    %v691 = vld [vmem:[#allocation5 + $0x1018] sm:$0xff]
    %v692 = vld [vmem:[#allocation5 + $0x1020] sm:$0xff]
    %v693 = vld [vmem:[#allocation5 + $0x1028] sm:$0xff]
    %v694 = vld [vmem:[#allocation5 + $0x1030] sm:$0xff]
    %v695 = vld [vmem:[#allocation5 + $0x1038] sm:$0xff]
    %v696 = vld [vmem:[#allocation5 + $0x1040] sm:$0xff]
    %v697 = vld [vmem:[#allocation5 + $0x1048] sm:$0xff]
    %v698 = vld [vmem:[#allocation5 + $0x1050] sm:$0xff]
    %v699 = vld [vmem:[#allocation5 + $0x1058] sm:$0xff]
    %v700 = vld [vmem:[#allocation5 + $0x1060] sm:$0xff]
    %v701 = vld [vmem:[#allocation5 + $0x1068] sm:$0xff]
    %v702 = vld [vmem:[#allocation5 + $0x1070] sm:$0xff]
    %v703 = vld [vmem:[#allocation5 + $0x1078] sm:$0xff]
    %v704 = vld [vmem:[#allocation5 + $0x1080] sm:$0xff]
    %v705 = vld [vmem:[#allocation5 + $0x1088] sm:$0xff]
    %v706 = vld [vmem:[#allocation5 + $0x1090] sm:$0xff]
    %v707 = vld [vmem:[#allocation5 + $0x1098] sm:$0xff]
    %v708 = vld [vmem:[#allocation5 + $0x10a0] sm:$0xff]
    %v709 = vld [vmem:[#allocation5 + $0x10a8] sm:$0xff]
    %v710 = vld [vmem:[#allocation5 + $0x10b0] sm:$0xff]
    %v711 = vld [vmem:[#allocation5 + $0x10b8] sm:$0xff]
    %v712 = vld [vmem:[#allocation5 + $0x10c0] sm:$0xff]
    %v713 = vld [vmem:[#allocation5 + $0x10c8] sm:$0xff]
    %v714 = vld [vmem:[#allocation5 + $0x10d0] sm:$0xff]
    %v715 = vld [vmem:[#allocation5 + $0x10d8] sm:$0xff]
    %v716 = vld [vmem:[#allocation5 + $0x10e0] sm:$0xff]
    %v717 = vld [vmem:[#allocation5 + $0x10e8] sm:$0xff]
    %v718 = vld [vmem:[#allocation5 + $0x10f0] sm:$0xff]
    %v719 = vld [vmem:[#allocation5 + $0x10f8] sm:$0xff]
    %v720 = vld [vmem:[#allocation5 + $0x1100] sm:$0xff]
    %v721 = vld [vmem:[#allocation5 + $0x1108] sm:$0xff]
    %v722 = vld [vmem:[#allocation5 + $0x1110] sm:$0xff]
    %v723 = vld [vmem:[#allocation5 + $0x1118] sm:$0xff]
    %v724 = vld [vmem:[#allocation5 + $0x1120] sm:$0xff]
    %v725 = vld [vmem:[#allocation5 + $0x1128] sm:$0xff]
    %v726 = vld [vmem:[#allocation5 + $0x1130] sm:$0xff]
    %v727 = vld [vmem:[#allocation5 + $0x1138] sm:$0xff]
    %v728 = vld [vmem:[#allocation5 + $0x1140] sm:$0xff]
    %v729 = vld [vmem:[#allocation5 + $0x1148] sm:$0xff]
    %v730 = vld [vmem:[#allocation5 + $0x1150] sm:$0xff]
    %v731 = vld [vmem:[#allocation5 + $0x1158] sm:$0xff]
    %v732 = vld [vmem:[#allocation5 + $0x1160] sm:$0xff]
    %v733 = vld [vmem:[#allocation5 + $0x1168] sm:$0xff]
    %v734 = vld [vmem:[#allocation5 + $0x1170] sm:$0xff]
    %v735 = vld [vmem:[#allocation5 + $0x1178] sm:$0xff]
    %v736 = vld [vmem:[#allocation5 + $0x1180] sm:$0xff]
    %v737 = vld [vmem:[#allocation5 + $0x1188] sm:$0xff]
    %v738 = vld [vmem:[#allocation5 + $0x1190] sm:$0xff]
    %v739 = vld [vmem:[#allocation5 + $0x1198] sm:$0xff]
    %v740 = vld [vmem:[#allocation5 + $0x11a0] sm:$0xff]
    %v741 = vld [vmem:[#allocation5 + $0x11a8] sm:$0xff]
    %v742 = vld [vmem:[#allocation5 + $0x11b0] sm:$0xff]
    %v743 = vld [vmem:[#allocation5 + $0x11b8] sm:$0xff]
    %v744 = vld [vmem:[#allocation5 + $0x11c0] sm:$0xff]
    %v745 = vld [vmem:[#allocation5 + $0x11c8] sm:$0xff]
    %v746 = vld [vmem:[#allocation5 + $0x11d0] sm:$0xff]
    %v747 = vld [vmem:[#allocation5 + $0x11d8] sm:$0xff]
    %v748 = vld [vmem:[#allocation5 + $0x11e0] sm:$0xff]
    %v749 = vld [vmem:[#allocation5 + $0x11e8] sm:$0xff]
    %v750 = vld [vmem:[#allocation5 + $0x11f0] sm:$0xff]
    %v751 = vld [vmem:[#allocation5 + $0x11f8] sm:$0xff]
    %v752 = vld [vmem:[#allocation5 + $0x1200] sm:$0xff]
    %v753 = vld [vmem:[#allocation5 + $0x1208] sm:$0xff]
    %v754 = vld [vmem:[#allocation5 + $0x1210] sm:$0xff]
    %v755 = vld [vmem:[#allocation5 + $0x1218] sm:$0xff]
    %v756 = vld [vmem:[#allocation5 + $0x1220] sm:$0xff]
    %v757 = vld [vmem:[#allocation5 + $0x1228] sm:$0xff]
    %v758 = vld [vmem:[#allocation5 + $0x1230] sm:$0xff]
    %v759 = vld [vmem:[#allocation5 + $0x1238] sm:$0xff]
    %v760 = vld [vmem:[#allocation5 + $0x1240] sm:$0xff]
    %v761 = vld [vmem:[#allocation5 + $0x1248] sm:$0xff]
    %v762 = vld [vmem:[#allocation5 + $0x1250] sm:$0xff]
    %v763 = vld [vmem:[#allocation5 + $0x1258] sm:$0xff]
    %v764 = vld [vmem:[#allocation5 + $0x1260] sm:$0xff]
    %v765 = vld [vmem:[#allocation5 + $0x1268] sm:$0xff]
    %v766 = vld [vmem:[#allocation5 + $0x1270] sm:$0xff]
    %v767 = vld [vmem:[#allocation5 + $0x1278] sm:$0xff]
    %v768 = vld [vmem:[#allocation5 + $0x1280] sm:$0xff]
    %v769 = vld [vmem:[#allocation5 + $0x1288] sm:$0xff]
    %v770 = vld [vmem:[#allocation5 + $0x1290] sm:$0xff]
    %v771 = vld [vmem:[#allocation5 + $0x1298] sm:$0xff]
    %v772 = vld [vmem:[#allocation5 + $0x12a0] sm:$0xff]
    %v773 = vld [vmem:[#allocation5 + $0x12a8] sm:$0xff]
    %v774 = vld [vmem:[#allocation5 + $0x12b0] sm:$0xff]
    %v775 = vld [vmem:[#allocation5 + $0x12b8] sm:$0xff]
    %v776 = vld [vmem:[#allocation5 + $0x12c0] sm:$0xff]
    %v777 = vld [vmem:[#allocation5 + $0x12c8] sm:$0xff]
    %v778 = vld [vmem:[#allocation5 + $0x12d0] sm:$0xff]
    %v779 = vld [vmem:[#allocation5 + $0x12d8] sm:$0xff]
    %v780 = vld [vmem:[#allocation5 + $0x12e0] sm:$0xff]
    %v781 = vld [vmem:[#allocation5 + $0x12e8] sm:$0xff]
    %v782 = vld [vmem:[#allocation5 + $0x12f0] sm:$0xff]
    %v783 = vld [vmem:[#allocation5 + $0x12f8] sm:$0xff]
    %v784 = vld [vmem:[#allocation5 + $0x1300] sm:$0xff]
    %v785 = vld [vmem:[#allocation5 + $0x1308] sm:$0xff]
    %v786 = vld [vmem:[#allocation5 + $0x1310] sm:$0xff]
    %v787 = vld [vmem:[#allocation5 + $0x1318] sm:$0xff]
    %v788 = vld [vmem:[#allocation5 + $0x1320] sm:$0xff]
    %v789 = vld [vmem:[#allocation5 + $0x1328] sm:$0xff]
    %v790 = vld [vmem:[#allocation5 + $0x1330] sm:$0xff]
    %v791 = vld [vmem:[#allocation5 + $0x1338] sm:$0xff]
    %v792 = vld [vmem:[#allocation5 + $0x1340] sm:$0xff]
    %v793 = vld [vmem:[#allocation5 + $0x1348] sm:$0xff]
    %v794 = vld [vmem:[#allocation5 + $0x1350] sm:$0xff]
    %v795 = vld [vmem:[#allocation5 + $0x1358] sm:$0xff]
    %v796 = vld [vmem:[#allocation5 + $0x1360] sm:$0xff]
    %v797 = vld [vmem:[#allocation5 + $0x1368] sm:$0xff]
    %v798 = vld [vmem:[#allocation5 + $0x1370] sm:$0xff]
    %v799 = vld [vmem:[#allocation5 + $0x1378] sm:$0xff]
    %v800 = vld [vmem:[#allocation5 + $0x1380] sm:$0xff]
    %v801 = vld [vmem:[#allocation5 + $0x1388] sm:$0xff]
    %v802 = vld [vmem:[#allocation5 + $0x1390] sm:$0xff]
    %v803 = vld [vmem:[#allocation5 + $0x1398] sm:$0xff]
    %v804 = vld [vmem:[#allocation5 + $0x13a0] sm:$0xff]
    %v805 = vld [vmem:[#allocation5 + $0x13a8] sm:$0xff]
    %v806 = vld [vmem:[#allocation5 + $0x13b0] sm:$0xff]
    %v807 = vld [vmem:[#allocation5 + $0x13b8] sm:$0xff]
    %v808 = vld [vmem:[#allocation5 + $0x13c0] sm:$0xff]
    %v809 = vld [vmem:[#allocation5 + $0x13c8] sm:$0xff]
    %v810 = vld [vmem:[#allocation5 + $0x13d0] sm:$0xff]
    %v811 = vld [vmem:[#allocation5 + $0x13d8] sm:$0xff]
    %v812 = vld [vmem:[#allocation5 + $0x13e0] sm:$0xff]
    %v813 = vld [vmem:[#allocation5 + $0x13e8] sm:$0xff]
    %v814 = vld [vmem:[#allocation5 + $0x13f0] sm:$0xff]
    %v815 = vld [vmem:[#allocation5 + $0x13f8] sm:$0xff]
    %v816 = vld [vmem:[#allocation5 + $0x1400] sm:$0xff]
    %v817 = vld [vmem:[#allocation5 + $0x1408] sm:$0xff]
    %v818 = vld [vmem:[#allocation5 + $0x1410] sm:$0xff]
    %v819 = vld [vmem:[#allocation5 + $0x1418] sm:$0xff]
    %v820 = vld [vmem:[#allocation5 + $0x1420] sm:$0xff]
    %v821 = vld [vmem:[#allocation5 + $0x1428] sm:$0xff]
    %v822 = vld [vmem:[#allocation5 + $0x1430] sm:$0xff]
    %v823 = vld [vmem:[#allocation5 + $0x1438] sm:$0xff]
    %v824 = vld [vmem:[#allocation5 + $0x1440] sm:$0xff]
    %v825 = vld [vmem:[#allocation5 + $0x1448] sm:$0xff]
    %v826 = vld [vmem:[#allocation5 + $0x1450] sm:$0xff]
    %v827 = vld [vmem:[#allocation5 + $0x1458] sm:$0xff]
    %v828 = vld [vmem:[#allocation5 + $0x1460] sm:$0xff]
    %v829 = vld [vmem:[#allocation5 + $0x1468] sm:$0xff]
    %v830 = vld [vmem:[#allocation5 + $0x1470] sm:$0xff]
    %v831 = vld [vmem:[#allocation5 + $0x1478] sm:$0xff]
    %v832 = vld [vmem:[#allocation5 + $0x1480] sm:$0xff]
    %v833 = vld [vmem:[#allocation5 + $0x1488] sm:$0xff]
    %v834 = vld [vmem:[#allocation5 + $0x1490] sm:$0xff]
    %v835 = vld [vmem:[#allocation5 + $0x1498] sm:$0xff]
    %v836 = vld [vmem:[#allocation5 + $0x14a0] sm:$0xff]
    %v837 = vld [vmem:[#allocation5 + $0x14a8] sm:$0xff]
    %v838 = vld [vmem:[#allocation5 + $0x14b0] sm:$0xff]
    %v839 = vld [vmem:[#allocation5 + $0x14b8] sm:$0xff]
    %v840 = vld [vmem:[#allocation5 + $0x14c0] sm:$0xff]
    %v841 = vld [vmem:[#allocation5 + $0x14c8] sm:$0xff]
    %v842 = vld [vmem:[#allocation5 + $0x14d0] sm:$0xff]
    %v843 = vld [vmem:[#allocation5 + $0x14d8] sm:$0xff]
    %v844 = vld [vmem:[#allocation5 + $0x14e0] sm:$0xff]
    %v845 = vld [vmem:[#allocation5 + $0x14e8] sm:$0xff]
    %v846 = vld [vmem:[#allocation5 + $0x14f0] sm:$0xff]
    %v847 = vld [vmem:[#allocation5 + $0x14f8] sm:$0xff]
    %v848 = vld [vmem:[#allocation5 + $0x1500] sm:$0xff]
    %v849 = vld [vmem:[#allocation5 + $0x1508] sm:$0xff]
    %v850 = vld [vmem:[#allocation5 + $0x1510] sm:$0xff]
    %v851 = vld [vmem:[#allocation5 + $0x1518] sm:$0xff]
    %v852 = vld [vmem:[#allocation5 + $0x1520] sm:$0xff]
    %v853 = vld [vmem:[#allocation5 + $0x1528] sm:$0xff]
    %v854 = vld [vmem:[#allocation5 + $0x1530] sm:$0xff]
    %v855 = vld [vmem:[#allocation5 + $0x1538] sm:$0xff]
    %v856 = vld [vmem:[#allocation5 + $0x1540] sm:$0xff]
    %v857 = vld [vmem:[#allocation5 + $0x1548] sm:$0xff]
    %v858 = vld [vmem:[#allocation5 + $0x1550] sm:$0xff]
    %v859 = vld [vmem:[#allocation5 + $0x1558] sm:$0xff]
    %v860 = vld [vmem:[#allocation5 + $0x1560] sm:$0xff]
    %v861 = vld [vmem:[#allocation5 + $0x1568] sm:$0xff]
    %v862 = vld [vmem:[#allocation5 + $0x1570] sm:$0xff]
    %v863 = vld [vmem:[#allocation5 + $0x1578] sm:$0xff]
    %v864 = vld [vmem:[#allocation5 + $0x1580] sm:$0xff]
    %v865 = vld [vmem:[#allocation5 + $0x1588] sm:$0xff]
    %v866 = vld [vmem:[#allocation5 + $0x1590] sm:$0xff]
    %v867 = vld [vmem:[#allocation5 + $0x1598] sm:$0xff]
    %v868 = vld [vmem:[#allocation5 + $0x15a0] sm:$0xff]
    %v869 = vld [vmem:[#allocation5 + $0x15a8] sm:$0xff]
    %v870 = vld [vmem:[#allocation5 + $0x15b0] sm:$0xff]
    %v871 = vld [vmem:[#allocation5 + $0x15b8] sm:$0xff]
    %v872 = vld [vmem:[#allocation5 + $0x15c0] sm:$0xff]
    %v873 = vld [vmem:[#allocation5 + $0x15c8] sm:$0xff]
    %v874 = vld [vmem:[#allocation5 + $0x15d0] sm:$0xff]
    %v875 = vld [vmem:[#allocation5 + $0x15d8] sm:$0xff]
    %v876 = vld [vmem:[#allocation5 + $0x15e0] sm:$0xff]
    %v877 = vld [vmem:[#allocation5 + $0x15e8] sm:$0xff]
    %v878 = vld [vmem:[#allocation5 + $0x15f0] sm:$0xff]
    %v879 = vld [vmem:[#allocation5 + $0x15f8] sm:$0xff]
    %v880 = vld [vmem:[#allocation5 + $0x1600] sm:$0xff]
    %v881 = vld [vmem:[#allocation5 + $0x1608] sm:$0xff]
    %v882 = vld [vmem:[#allocation5 + $0x1610] sm:$0xff]
    %v883 = vld [vmem:[#allocation5 + $0x1618] sm:$0xff]
    %v884 = vld [vmem:[#allocation5 + $0x1620] sm:$0xff]
    %v885 = vld [vmem:[#allocation5 + $0x1628] sm:$0xff]
    %v886 = vld [vmem:[#allocation5 + $0x1630] sm:$0xff]
    %v887 = vld [vmem:[#allocation5 + $0x1638] sm:$0xff]
    %v888 = vld [vmem:[#allocation5 + $0x1640] sm:$0xff]
    %v889 = vld [vmem:[#allocation5 + $0x1648] sm:$0xff]
    %v890 = vld [vmem:[#allocation5 + $0x1650] sm:$0xff]
    %v891 = vld [vmem:[#allocation5 + $0x1658] sm:$0xff]
    %v892 = vld [vmem:[#allocation5 + $0x1660] sm:$0xff]
    %v893 = vld [vmem:[#allocation5 + $0x1668] sm:$0xff]
    %v894 = vld [vmem:[#allocation5 + $0x1670] sm:$0xff]
    %v895 = vld [vmem:[#allocation5 + $0x1678] sm:$0xff]
    %v896 = vld [vmem:[#allocation5 + $0x1680] sm:$0xff]
    %v897 = vld [vmem:[#allocation5 + $0x1688] sm:$0xff]
    %v898 = vld [vmem:[#allocation5 + $0x1690] sm:$0xff]
    %v899 = vld [vmem:[#allocation5 + $0x1698] sm:$0xff]
    %v900 = vld [vmem:[#allocation5 + $0x16a0] sm:$0xff]
    %v901 = vld [vmem:[#allocation5 + $0x16a8] sm:$0xff]
    %v902 = vld [vmem:[#allocation5 + $0x16b0] sm:$0xff]
    %v903 = vld [vmem:[#allocation5 + $0x16b8] sm:$0xff]
    %v904 = vld [vmem:[#allocation5 + $0x16c0] sm:$0xff]
    %v905 = vld [vmem:[#allocation5 + $0x16c8] sm:$0xff]
    %v906 = vld [vmem:[#allocation5 + $0x16d0] sm:$0xff]
    %v907 = vld [vmem:[#allocation5 + $0x16d8] sm:$0xff]
    %v908 = vld [vmem:[#allocation5 + $0x16e0] sm:$0xff]
    %v909 = vld [vmem:[#allocation5 + $0x16e8] sm:$0xff]
    %v910 = vld [vmem:[#allocation5 + $0x16f0] sm:$0xff]
    %v911 = vld [vmem:[#allocation5 + $0x16f8] sm:$0xff]
    %v912 = vld [vmem:[#allocation5 + $0x1700] sm:$0xff]
    %v913 = vld [vmem:[#allocation5 + $0x1708] sm:$0xff]
    %v914 = vld [vmem:[#allocation5 + $0x1710] sm:$0xff]
    %v915 = vld [vmem:[#allocation5 + $0x1718] sm:$0xff]
    %v916 = vld [vmem:[#allocation5 + $0x1720] sm:$0xff]
    %v917 = vld [vmem:[#allocation5 + $0x1728] sm:$0xff]
    %v918 = vld [vmem:[#allocation5 + $0x1730] sm:$0xff]
    %v919 = vld [vmem:[#allocation5 + $0x1738] sm:$0xff]
    %v920 = vld [vmem:[#allocation5 + $0x1740] sm:$0xff]
    %v921 = vld [vmem:[#allocation5 + $0x1748] sm:$0xff]
    %v922 = vld [vmem:[#allocation5 + $0x1750] sm:$0xff]
    %v923 = vld [vmem:[#allocation5 + $0x1758] sm:$0xff]
    %v924 = vld [vmem:[#allocation5 + $0x1760] sm:$0xff]
    %v925 = vld [vmem:[#allocation5 + $0x1768] sm:$0xff]
    %v926 = vld [vmem:[#allocation5 + $0x1770] sm:$0xff]
    %v927 = vld [vmem:[#allocation5 + $0x1778] sm:$0xff]
    %v928 = vld [vmem:[#allocation5 + $0x1780] sm:$0xff]
    %v929 = vld [vmem:[#allocation5 + $0x1788] sm:$0xff]
    %v930 = vld [vmem:[#allocation5 + $0x1790] sm:$0xff]
    %v931 = vld [vmem:[#allocation5 + $0x1798] sm:$0xff]
    %v932 = vld [vmem:[#allocation5 + $0x17a0] sm:$0xff]
    %v933 = vld [vmem:[#allocation5 + $0x17a8] sm:$0xff]
    %v934 = vld [vmem:[#allocation5 + $0x17b0] sm:$0xff]
    %v935 = vld [vmem:[#allocation5 + $0x17b8] sm:$0xff]
    %v936 = vld [vmem:[#allocation5 + $0x17c0] sm:$0xff]
    %v937 = vld [vmem:[#allocation5 + $0x17c8] sm:$0xff]
    %v938 = vld [vmem:[#allocation5 + $0x17d0] sm:$0xff]
    %v939 = vld [vmem:[#allocation5 + $0x17d8] sm:$0xff]
    %v940 = vld [vmem:[#allocation5 + $0x17e0] sm:$0xff]
    %v941 = vld [vmem:[#allocation5 + $0x17e8] sm:$0xff]
    %v942 = vld [vmem:[#allocation5 + $0x17f0] sm:$0xff]
    %v943 = vld [vmem:[#allocation5 + $0x17f8] sm:$0xff]
    %v944 = vld [vmem:[#allocation5 + $0x1800] sm:$0xff]
    %v945 = vld [vmem:[#allocation5 + $0x1808] sm:$0xff]
    %v946 = vld [vmem:[#allocation5 + $0x1810] sm:$0xff]
    %v947 = vld [vmem:[#allocation5 + $0x1818] sm:$0xff]
    %v948 = vld [vmem:[#allocation5 + $0x1820] sm:$0xff]
    %v949 = vld [vmem:[#allocation5 + $0x1828] sm:$0xff]
    %v950 = vld [vmem:[#allocation5 + $0x1830] sm:$0xff]
    %v951 = vld [vmem:[#allocation5 + $0x1838] sm:$0xff]
    %v952 = vld [vmem:[#allocation5 + $0x1840] sm:$0xff]
    %v953 = vld [vmem:[#allocation5 + $0x1848] sm:$0xff]
    %v954 = vld [vmem:[#allocation5 + $0x1850] sm:$0xff]
    %v955 = vld [vmem:[#allocation5 + $0x1858] sm:$0xff]
    %v956 = vld [vmem:[#allocation5 + $0x1860] sm:$0xff]
    %v957 = vld [vmem:[#allocation5 + $0x1868] sm:$0xff]
    %v958 = vld [vmem:[#allocation5 + $0x1870] sm:$0xff]
    %v959 = vld [vmem:[#allocation5 + $0x1878] sm:$0xff]
    %v960 = vld [vmem:[#allocation5 + $0x1880] sm:$0xff]
    %v961 = vld [vmem:[#allocation5 + $0x1888] sm:$0xff]
    %v962 = vld [vmem:[#allocation5 + $0x1890] sm:$0xff]
    %v963 = vld [vmem:[#allocation5 + $0x1898] sm:$0xff]
    %v964 = vld [vmem:[#allocation5 + $0x18a0] sm:$0xff]
    %v965 = vld [vmem:[#allocation5 + $0x18a8] sm:$0xff]
    %v966 = vld [vmem:[#allocation5 + $0x18b0] sm:$0xff]
    %v967 = vld [vmem:[#allocation5 + $0x18b8] sm:$0xff]
    %v968 = vld [vmem:[#allocation5 + $0x18c0] sm:$0xff]
    %v969 = vld [vmem:[#allocation5 + $0x18c8] sm:$0xff]
    %v970 = vld [vmem:[#allocation5 + $0x18d0] sm:$0xff]
    %v971 = vld [vmem:[#allocation5 + $0x18d8] sm:$0xff]
    %v972 = vld [vmem:[#allocation5 + $0x18e0] sm:$0xff]
    %v973 = vld [vmem:[#allocation5 + $0x18e8] sm:$0xff]
    %v974 = vld [vmem:[#allocation5 + $0x18f0] sm:$0xff]
    %v975 = vld [vmem:[#allocation5 + $0x18f8] sm:$0xff]
    %v976 = vld [vmem:[#allocation5 + $0x1900] sm:$0xff]
    %v977 = vld [vmem:[#allocation5 + $0x1908] sm:$0xff]
    %v978 = vld [vmem:[#allocation5 + $0x1910] sm:$0xff]
    %v979 = vld [vmem:[#allocation5 + $0x1918] sm:$0xff]
    %v980 = vld [vmem:[#allocation5 + $0x1920] sm:$0xff]
    %v981 = vld [vmem:[#allocation5 + $0x1928] sm:$0xff]
    %v982 = vld [vmem:[#allocation5 + $0x1930] sm:$0xff]
    %v983 = vld [vmem:[#allocation5 + $0x1938] sm:$0xff]
    %v984 = vld [vmem:[#allocation5 + $0x1940] sm:$0xff]
    %v985 = vld [vmem:[#allocation5 + $0x1948] sm:$0xff]
    %v986 = vld [vmem:[#allocation5 + $0x1950] sm:$0xff]
    %v987 = vld [vmem:[#allocation5 + $0x1958] sm:$0xff]
    %v988 = vld [vmem:[#allocation5 + $0x1960] sm:$0xff]
    %v989 = vld [vmem:[#allocation5 + $0x1968] sm:$0xff]
    %v990 = vld [vmem:[#allocation5 + $0x1970] sm:$0xff]
    %v991 = vld [vmem:[#allocation5 + $0x1978] sm:$0xff]
    %v992 = vld [vmem:[#allocation7] sm:$0xff]
    %v994 = vlaneseq
    %v995 = vshrl.u32 %v994, 7
    %v996 = vsub.s32 0, %v995
    %v997 = vrot.slane %v992, %v996
    %v998 = vlaneseq
    %v999 = vshrl.u32 %v998, 7
    %v1000 = vsub.s32 1, %v999
    %v1001 = vrot.slane %v992, %v1000
    %v1002 = vlaneseq
    %v1003 = vshrl.u32 %v1002, 7
    %v1004 = vsub.s32 2, %v1003
    %v1005 = vrot.slane %v992, %v1004
    %v1006 = vlaneseq
    %v1007 = vshrl.u32 %v1006, 7
    %v1008 = vsub.s32 3, %v1007
    %v1009 = vrot.slane %v992, %v1008
    %v1010 = vlaneseq
    %v1011 = vshrl.u32 %v1010, 7
    %v1012 = vsub.s32 4, %v1011
    %v1013 = vrot.slane %v992, %v1012
    %v1014 = vlaneseq
    %v1015 = vshrl.u32 %v1014, 7
    %v1016 = vsub.s32 5, %v1015
    %v1017 = vrot.slane %v992, %v1016
    %v1018 = vlaneseq
    %v1019 = vshrl.u32 %v1018, 7
    %v1020 = vsub.s32 6, %v1019
    %v1021 = vrot.slane %v992, %v1020
    %v1022 = vlaneseq
    %v1023 = vshrl.u32 %v1022, 7
    %v1024 = vsub.s32 7, %v1023
    %v1025 = vrot.slane %v992, %v1024
    %v1850 = vunpack.c.l.b16 %v176
    %v1851 = vunpack.c.h.b16 %v176
    %v1852 = vunpack.c.l.b16 %v177
    %v1853 = vunpack.c.h.b16 %v177
    %v1854 = vunpack.c.l.b16 %v178
    %v1855 = vunpack.c.h.b16 %v178
    %v1856 = vunpack.c.l.b16 %v179
    %v1857 = vunpack.c.h.b16 %v179
    %v1858 = vunpack.c.l.b16 %v180
    %v1859 = vunpack.c.h.b16 %v180
    %v1860 = vunpack.c.l.b16 %v181
    %v1861 = vunpack.c.h.b16 %v181
    %v1862 = vunpack.c.l.b16 %v182
    %v1863 = vunpack.c.h.b16 %v182
    %v1864 = vunpack.c.l.b16 %v183
    %v1865 = vunpack.c.h.b16 %v183
    %v1866 = vunpack.c.l.b16 %v184
    %v1867 = vunpack.c.h.b16 %v184
    %v1868 = vunpack.c.l.b16 %v185
    %v1869 = vunpack.c.h.b16 %v185
    %v1870 = vunpack.c.l.b16 %v186
    %v1871 = vunpack.c.h.b16 %v186
    %v1872 = vunpack.c.l.b16 %v187
    %v1873 = vunpack.c.h.b16 %v187
    %v1874 = vunpack.c.l.b16 %v188
    %v1875 = vunpack.c.h.b16 %v188
    %v1876 = vunpack.c.l.b16 %v189
    %v1877 = vunpack.c.h.b16 %v189
    %v1878 = vunpack.c.l.b16 %v190
    %v1879 = vunpack.c.h.b16 %v190
    %v1880 = vunpack.c.l.b16 %v191
    %v1881 = vunpack.c.h.b16 %v191
    %v1882 = vunpack.c.l.b16 %v192
    %v1883 = vunpack.c.h.b16 %v192
    %v1884 = vunpack.c.l.b16 %v193
    %v1885 = vunpack.c.h.b16 %v193
    %v1886 = vunpack.c.l.b16 %v194
    %v1887 = vunpack.c.h.b16 %v194
    %v1888 = vunpack.c.l.b16 %v195
    %v1889 = vunpack.c.h.b16 %v195
    %v1890 = vunpack.c.l.b16 %v196
    %v1891 = vunpack.c.h.b16 %v196
    %v1892 = vunpack.c.l.b16 %v197
    %v1893 = vunpack.c.h.b16 %v197
    %v1894 = vunpack.c.l.b16 %v198
    %v1895 = vunpack.c.h.b16 %v198
    %v1896 = vunpack.c.l.b16 %v199
    %v1897 = vunpack.c.h.b16 %v199
    %v1898 = vunpack.c.l.b16 %v200
    %v1899 = vunpack.c.h.b16 %v200
    %v1900 = vunpack.c.l.b16 %v201
    %v1901 = vunpack.c.h.b16 %v201
    %v1902 = vunpack.c.l.b16 %v202
    %v1903 = vunpack.c.h.b16 %v202
    %v1904 = vunpack.c.l.b16 %v203
    %v1905 = vunpack.c.h.b16 %v203
    %v1906 = vunpack.c.l.b16 %v204
    %v1907 = vunpack.c.h.b16 %v204
    %v1908 = vunpack.c.l.b16 %v205
    %v1909 = vunpack.c.h.b16 %v205
    %v1910 = vunpack.c.l.b16 %v206
    %v1911 = vunpack.c.h.b16 %v206
    %v1912 = vunpack.c.l.b16 %v207
    %v1913 = vunpack.c.h.b16 %v207
    %v1914 = vunpack.c.l.b16 %v208
    %v1915 = vunpack.c.h.b16 %v208
    %v1916 = vunpack.c.l.b16 %v209
    %v1917 = vunpack.c.h.b16 %v209
    %v1918 = vunpack.c.l.b16 %v210
    %v1919 = vunpack.c.h.b16 %v210
    %v1920 = vunpack.c.l.b16 %v211
    %v1921 = vunpack.c.h.b16 %v211
    %v1922 = vunpack.c.l.b16 %v212
    %v1923 = vunpack.c.h.b16 %v212
    %v1924 = vunpack.c.l.b16 %v213
    %v1925 = vunpack.c.h.b16 %v213
    %v1926 = vunpack.c.l.b16 %v214
    %v1927 = vunpack.c.h.b16 %v214
    %v1928 = vunpack.c.l.b16 %v215
    %v1929 = vunpack.c.h.b16 %v215
    %v1930 = vunpack.c.l.b16 %v216
    %v1931 = vunpack.c.h.b16 %v216
    %v1932 = vunpack.c.l.b16 %v217
    %v1933 = vunpack.c.h.b16 %v217
    %v1934 = vunpack.c.l.b16 %v218
    %v1935 = vunpack.c.h.b16 %v218
    %v1936 = vunpack.c.l.b16 %v219
    %v1937 = vunpack.c.h.b16 %v219
    %v1938 = vunpack.c.l.b16 %v220
    %v1939 = vunpack.c.h.b16 %v220
    %v1940 = vunpack.c.l.b16 %v221
    %v1941 = vunpack.c.h.b16 %v221
    %v1942 = vunpack.c.l.b16 %v222
    %v1943 = vunpack.c.h.b16 %v222
    %v1944 = vunpack.c.l.b16 %v223
    %v1945 = vunpack.c.h.b16 %v223
    %v1946 = vunpack.c.l.b16 %v224
    %v1947 = vunpack.c.h.b16 %v224
    %v1948 = vunpack.c.l.b16 %v225
    %v1949 = vunpack.c.h.b16 %v225
    %v1950 = vunpack.c.l.b16 %v226
    %v1951 = vunpack.c.h.b16 %v226
    %v1952 = vunpack.c.l.b16 %v227
    %v1953 = vunpack.c.h.b16 %v227
    %v1954 = vunpack.c.l.b16 %v228
    %v1955 = vunpack.c.h.b16 %v228
    %v1956 = vunpack.c.l.b16 %v229
    %v1957 = vunpack.c.h.b16 %v229
    %v1958 = vunpack.c.l.b16 %v230
    %v1959 = vunpack.c.h.b16 %v230
    %v1960 = vunpack.c.l.b16 %v231
    %v1961 = vunpack.c.h.b16 %v231
    %v1962 = vunpack.c.l.b16 %v232
    %v1963 = vunpack.c.h.b16 %v232
    %v1964 = vunpack.c.l.b16 %v233
    %v1965 = vunpack.c.h.b16 %v233
    %v1966 = vunpack.c.l.b16 %v234
    %v1967 = vunpack.c.h.b16 %v234
    %v1968 = vunpack.c.l.b16 %v235
    %v1969 = vunpack.c.h.b16 %v235
    %v1970 = vunpack.c.l.b16 %v236
    %v1971 = vunpack.c.h.b16 %v236
    %v1972 = vunpack.c.l.b16 %v237
    %v1973 = vunpack.c.h.b16 %v237
    %v1974 = vunpack.c.l.b16 %v238
    %v1975 = vunpack.c.h.b16 %v238
    %v1976 = vunpack.c.l.b16 %v239
    %v1977 = vunpack.c.h.b16 %v239
    %v1978 = vunpack.c.l.b16 %v240
    %v1979 = vunpack.c.h.b16 %v240
    %v1980 = vunpack.c.l.b16 %v241
    %v1981 = vunpack.c.h.b16 %v241
    %v1982 = vunpack.c.l.b16 %v242
    %v1983 = vunpack.c.h.b16 %v242
    %v1984 = vunpack.c.l.b16 %v243
    %v1985 = vunpack.c.h.b16 %v243
    %v1986 = vunpack.c.l.b16 %v244
    %v1987 = vunpack.c.h.b16 %v244
    %v1988 = vunpack.c.l.b16 %v245
    %v1989 = vunpack.c.h.b16 %v245
    %v1990 = vunpack.c.l.b16 %v246
    %v1991 = vunpack.c.h.b16 %v246
    %v1992 = vunpack.c.l.b16 %v247
    %v1993 = vunpack.c.h.b16 %v247
    %v1994 = vunpack.c.l.b16 %v248
    %v1995 = vunpack.c.h.b16 %v248
    %v1996 = vunpack.c.l.b16 %v249
    %v1997 = vunpack.c.h.b16 %v249
    %v1998 = vunpack.c.l.b16 %v250
    %v1999 = vunpack.c.h.b16 %v250
    %v2000 = vunpack.c.l.b16 %v251
    %v2001 = vunpack.c.h.b16 %v251
    %v2002 = vunpack.c.l.b16 %v252
    %v2003 = vunpack.c.h.b16 %v252
    %v2004 = vunpack.c.l.b16 %v253
    %v2005 = vunpack.c.h.b16 %v253
    %v2006 = vunpack.c.l.b16 %v254
    %v2007 = vunpack.c.h.b16 %v254
    %v2008 = vunpack.c.l.b16 %v255
    %v2009 = vunpack.c.h.b16 %v255
    %v2010 = vunpack.c.l.b16 %v256
    %v2011 = vunpack.c.h.b16 %v256
    %v2012 = vunpack.c.l.b16 %v257
    %v2013 = vunpack.c.h.b16 %v257
    %v2014 = vunpack.c.l.b16 %v258
    %v2015 = vunpack.c.h.b16 %v258
    %v2016 = vunpack.c.l.b16 %v259
    %v2017 = vunpack.c.h.b16 %v259
    %v2018 = vunpack.c.l.b16 %v260
    %v2019 = vunpack.c.h.b16 %v260
    %v2020 = vunpack.c.l.b16 %v261
    %v2021 = vunpack.c.h.b16 %v261
    %v2022 = vunpack.c.l.b16 %v262
    %v2023 = vunpack.c.h.b16 %v262
    %v2024 = vunpack.c.l.b16 %v263
    %v2025 = vunpack.c.h.b16 %v263
    %v2026 = vunpack.c.l.b16 %v264
    %v2027 = vunpack.c.h.b16 %v264
    %v2028 = vunpack.c.l.b16 %v265
    %v2029 = vunpack.c.h.b16 %v265
    %v2030 = vunpack.c.l.b16 %v266
    %v2031 = vunpack.c.h.b16 %v266
    %v2032 = vunpack.c.l.b16 %v267
    %v2033 = vunpack.c.h.b16 %v267
    %v2034 = vunpack.c.l.b16 %v268
    %v2035 = vunpack.c.h.b16 %v268
    %v2036 = vunpack.c.l.b16 %v269
    %v2037 = vunpack.c.h.b16 %v269
    %v2038 = vunpack.c.l.b16 %v270
    %v2039 = vunpack.c.h.b16 %v270
    %v2040 = vunpack.c.l.b16 %v271
    %v2041 = vunpack.c.h.b16 %v271
    %v2042 = vunpack.c.l.b16 %v272
    %v2043 = vunpack.c.h.b16 %v272
    %v2044 = vunpack.c.l.b16 %v273
    %v2045 = vunpack.c.h.b16 %v273
    %v2046 = vunpack.c.l.b16 %v274
    %v2047 = vunpack.c.h.b16 %v274
    %v2048 = vunpack.c.l.b16 %v275
    %v2049 = vunpack.c.h.b16 %v275
    %v2050 = vunpack.c.l.b16 %v276
    %v2051 = vunpack.c.h.b16 %v276
    %v2052 = vunpack.c.l.b16 %v277
    %v2053 = vunpack.c.h.b16 %v277
    %v2054 = vunpack.c.l.b16 %v278
    %v2055 = vunpack.c.h.b16 %v278
    %v2056 = vunpack.c.l.b16 %v279
    %v2057 = vunpack.c.h.b16 %v279
    %v2058 = vunpack.c.l.b16 %v280
    %v2059 = vunpack.c.h.b16 %v280
    %v2060 = vunpack.c.l.b16 %v281
    %v2061 = vunpack.c.h.b16 %v281
    %v2062 = vunpack.c.l.b16 %v282
    %v2063 = vunpack.c.h.b16 %v282
    %v2064 = vunpack.c.l.b16 %v283
    %v2065 = vunpack.c.h.b16 %v283
    %v2066 = vunpack.c.l.b16 %v284
    %v2067 = vunpack.c.h.b16 %v284
    %v2068 = vunpack.c.l.b16 %v285
    %v2069 = vunpack.c.h.b16 %v285
    %v2070 = vunpack.c.l.b16 %v286
    %v2071 = vunpack.c.h.b16 %v286
    %v2072 = vunpack.c.l.b16 %v287
    %v2073 = vunpack.c.h.b16 %v287
    %v2074 = vunpack.c.l.b16 %v288
    %v2075 = vunpack.c.h.b16 %v288
    %v2076 = vunpack.c.l.b16 %v289
    %v2077 = vunpack.c.h.b16 %v289
    %v2078 = vunpack.c.l.b16 %v290
    %v2079 = vunpack.c.h.b16 %v290
    %v2080 = vunpack.c.l.b16 %v291
    %v2081 = vunpack.c.h.b16 %v291
    %v2082 = vunpack.c.l.b16 %v292
    %v2083 = vunpack.c.h.b16 %v292
    %v2084 = vunpack.c.l.b16 %v293
    %v2085 = vunpack.c.h.b16 %v293
    %v2086 = vunpack.c.l.b16 %v294
    %v2087 = vunpack.c.h.b16 %v294
    %v2088 = vunpack.c.l.b16 %v295
    %v2089 = vunpack.c.h.b16 %v295
    %v2090 = vunpack.c.l.b16 %v296
    %v2091 = vunpack.c.h.b16 %v296
    %v2092 = vunpack.c.l.b16 %v297
    %v2093 = vunpack.c.h.b16 %v297
    %v2094 = vunpack.c.l.b16 %v298
    %v2095 = vunpack.c.h.b16 %v298
    %v2096 = vunpack.c.l.b16 %v299
    %v2097 = vunpack.c.h.b16 %v299
    %v2098 = vunpack.c.l.b16 %v300
    %v2099 = vunpack.c.h.b16 %v300
    %v2100 = vunpack.c.l.b16 %v301
    %v2101 = vunpack.c.h.b16 %v301
    %v2102 = vunpack.c.l.b16 %v302
    %v2103 = vunpack.c.h.b16 %v302
    %v2104 = vunpack.c.l.b16 %v303
    %v2105 = vunpack.c.h.b16 %v303
    %v2106 = vunpack.c.l.b16 %v304
    %v2107 = vunpack.c.h.b16 %v304
    %v2108 = vunpack.c.l.b16 %v305
    %v2109 = vunpack.c.h.b16 %v305
    %v2110 = vunpack.c.l.b16 %v306
    %v2111 = vunpack.c.h.b16 %v306
    %v2112 = vunpack.c.l.b16 %v307
    %v2113 = vunpack.c.h.b16 %v307
    %v2114 = vunpack.c.l.b16 %v308
    %v2115 = vunpack.c.h.b16 %v308
    %v2116 = vunpack.c.l.b16 %v309
    %v2117 = vunpack.c.h.b16 %v309
    %v2118 = vunpack.c.l.b16 %v310
    %v2119 = vunpack.c.h.b16 %v310
    %v2120 = vunpack.c.l.b16 %v311
    %v2121 = vunpack.c.h.b16 %v311
    %v2122 = vunpack.c.l.b16 %v312
    %v2123 = vunpack.c.h.b16 %v312
    %v2124 = vunpack.c.l.b16 %v313
    %v2125 = vunpack.c.h.b16 %v313
    %v2126 = vunpack.c.l.b16 %v314
    %v2127 = vunpack.c.h.b16 %v314
    %v2128 = vunpack.c.l.b16 %v315
    %v2129 = vunpack.c.h.b16 %v315
    %v2130 = vunpack.c.l.b16 %v316
    %v2131 = vunpack.c.h.b16 %v316
    %v2132 = vunpack.c.l.b16 %v317
    %v2133 = vunpack.c.h.b16 %v317
    %v2134 = vunpack.c.l.b16 %v318
    %v2135 = vunpack.c.h.b16 %v318
    %v2136 = vunpack.c.l.b16 %v319
    %v2137 = vunpack.c.h.b16 %v319
    %v2138 = vunpack.c.l.b16 %v320
    %v2139 = vunpack.c.h.b16 %v320
    %v2140 = vunpack.c.l.b16 %v321
    %v2141 = vunpack.c.h.b16 %v321
    %v2142 = vunpack.c.l.b16 %v322
    %v2143 = vunpack.c.h.b16 %v322
    %v2144 = vunpack.c.l.b16 %v323
    %v2145 = vunpack.c.h.b16 %v323
    %v2146 = vunpack.c.l.b16 %v324
    %v2147 = vunpack.c.h.b16 %v324
    %v2148 = vunpack.c.l.b16 %v325
    %v2149 = vunpack.c.h.b16 %v325
    %v2150 = vunpack.c.l.b16 %v326
    %v2151 = vunpack.c.h.b16 %v326
    %v2152 = vunpack.c.l.b16 %v327
    %v2153 = vunpack.c.h.b16 %v327
    %v2154 = vunpack.c.l.b16 %v328
    %v2155 = vunpack.c.h.b16 %v328
    %v2156 = vunpack.c.l.b16 %v329
    %v2157 = vunpack.c.h.b16 %v329
    %v2158 = vunpack.c.l.b16 %v330
    %v2159 = vunpack.c.h.b16 %v330
    %v2160 = vunpack.c.l.b16 %v331
    %v2161 = vunpack.c.h.b16 %v331
    %v2162 = vunpack.c.l.b16 %v332
    %v2163 = vunpack.c.h.b16 %v332
    %v2164 = vunpack.c.l.b16 %v333
    %v2165 = vunpack.c.h.b16 %v333
    %v2166 = vunpack.c.l.b16 %v334
    %v2167 = vunpack.c.h.b16 %v334
    %v2168 = vunpack.c.l.b16 %v335
    %v2169 = vunpack.c.h.b16 %v335
    %v2170 = vunpack.c.l.b16 %v336
    %v2171 = vunpack.c.h.b16 %v336
    %v2172 = vunpack.c.l.b16 %v337
    %v2173 = vunpack.c.h.b16 %v337
    %v2174 = vunpack.c.l.b16 %v338
    %v2175 = vunpack.c.h.b16 %v338
    %v2176 = vunpack.c.l.b16 %v339
    %v2177 = vunpack.c.h.b16 %v339
    %v2178 = vunpack.c.l.b16 %v340
    %v2179 = vunpack.c.h.b16 %v340
    %v2180 = vunpack.c.l.b16 %v341
    %v2181 = vunpack.c.h.b16 %v341
    %v2182 = vunpack.c.l.b16 %v342
    %v2183 = vunpack.c.h.b16 %v342
    %v2184 = vunpack.c.l.b16 %v343
    %v2185 = vunpack.c.h.b16 %v343
    %v2186 = vunpack.c.l.b16 %v344
    %v2187 = vunpack.c.h.b16 %v344
    %v2188 = vunpack.c.l.b16 %v345
    %v2189 = vunpack.c.h.b16 %v345
    %v2190 = vunpack.c.l.b16 %v346
    %v2191 = vunpack.c.h.b16 %v346
    %v2192 = vunpack.c.l.b16 %v347
    %v2193 = vunpack.c.h.b16 %v347
    %v2194 = vunpack.c.l.b16 %v348
    %v2195 = vunpack.c.h.b16 %v348
    %v2196 = vunpack.c.l.b16 %v349
    %v2197 = vunpack.c.h.b16 %v349
    %v2198 = vunpack.c.l.b16 %v350
    %v2199 = vunpack.c.h.b16 %v350
    %v2200 = vunpack.c.l.b16 %v351
    %v2201 = vunpack.c.h.b16 %v351
    %v2202 = vunpack.c.l.b16 %v352
    %v2203 = vunpack.c.h.b16 %v352
    %v2204 = vunpack.c.l.b16 %v353
    %v2205 = vunpack.c.h.b16 %v353
    %v2206 = vunpack.c.l.b16 %v354
    %v2207 = vunpack.c.h.b16 %v354
    %v2208 = vunpack.c.l.b16 %v355
    %v2209 = vunpack.c.h.b16 %v355
    %v2210 = vunpack.c.l.b16 %v356
    %v2211 = vunpack.c.h.b16 %v356
    %v2212 = vunpack.c.l.b16 %v357
    %v2213 = vunpack.c.h.b16 %v357
    %v2214 = vunpack.c.l.b16 %v358
    %v2215 = vunpack.c.h.b16 %v358
    %v2216 = vunpack.c.l.b16 %v359
    %v2217 = vunpack.c.h.b16 %v359
    %v2218 = vunpack.c.l.b16 %v360
    %v2219 = vunpack.c.h.b16 %v360
    %v2220 = vunpack.c.l.b16 %v361
    %v2221 = vunpack.c.h.b16 %v361
    %v2222 = vunpack.c.l.b16 %v362
    %v2223 = vunpack.c.h.b16 %v362
    %v2224 = vunpack.c.l.b16 %v363
    %v2225 = vunpack.c.h.b16 %v363
    %v2226 = vunpack.c.l.b16 %v364
    %v2227 = vunpack.c.h.b16 %v364
    %v2228 = vunpack.c.l.b16 %v365
    %v2229 = vunpack.c.h.b16 %v365
    %v2230 = vunpack.c.l.b16 %v366
    %v2231 = vunpack.c.h.b16 %v366
    %v2232 = vunpack.c.l.b16 %v367
    %v2233 = vunpack.c.h.b16 %v367
    %v2234 = vunpack.c.l.b16 %v368
    %v2235 = vunpack.c.h.b16 %v368
    %v2236 = vunpack.c.l.b16 %v369
    %v2237 = vunpack.c.h.b16 %v369
    %v2238 = vunpack.c.l.b16 %v370
    %v2239 = vunpack.c.h.b16 %v370
    %v2240 = vunpack.c.l.b16 %v371
    %v2241 = vunpack.c.h.b16 %v371
    %v2242 = vunpack.c.l.b16 %v372
    %v2243 = vunpack.c.h.b16 %v372
    %v2244 = vunpack.c.l.b16 %v373
    %v2245 = vunpack.c.h.b16 %v373
    %v2246 = vunpack.c.l.b16 %v374
    %v2247 = vunpack.c.h.b16 %v374
    %v2248 = vunpack.c.l.b16 %v375
    %v2249 = vunpack.c.h.b16 %v375
    %v2250 = vunpack.c.l.b16 %v376
    %v2251 = vunpack.c.h.b16 %v376
    %v2252 = vunpack.c.l.b16 %v377
    %v2253 = vunpack.c.h.b16 %v377
    %v2254 = vunpack.c.l.b16 %v378
    %v2255 = vunpack.c.h.b16 %v378
    %v2256 = vunpack.c.l.b16 %v379
    %v2257 = vunpack.c.h.b16 %v379
    %v2258 = vunpack.c.l.b16 %v380
    %v2259 = vunpack.c.h.b16 %v380
    %v2260 = vunpack.c.l.b16 %v381
    %v2261 = vunpack.c.h.b16 %v381
    %v2262 = vunpack.c.l.b16 %v382
    %v2263 = vunpack.c.h.b16 %v382
    %v2264 = vunpack.c.l.b16 %v383
    %v2265 = vunpack.c.h.b16 %v383
    %v2266 = vunpack.c.l.b16 %v384
    %v2267 = vunpack.c.h.b16 %v384
    %v2268 = vunpack.c.l.b16 %v385
    %v2269 = vunpack.c.h.b16 %v385
    %v2270 = vunpack.c.l.b16 %v386
    %v2271 = vunpack.c.h.b16 %v386
    %v2272 = vunpack.c.l.b16 %v387
    %v2273 = vunpack.c.h.b16 %v387
    %v2274 = vunpack.c.l.b16 %v388
    %v2275 = vunpack.c.h.b16 %v388
    %v2276 = vunpack.c.l.b16 %v389
    %v2277 = vunpack.c.h.b16 %v389
    %v2278 = vunpack.c.l.b16 %v390
    %v2279 = vunpack.c.h.b16 %v390
    %v2280 = vunpack.c.l.b16 %v391
    %v2281 = vunpack.c.h.b16 %v391
    %v2282 = vunpack.c.l.b16 %v392
    %v2283 = vunpack.c.h.b16 %v392
    %v2284 = vunpack.c.l.b16 %v393
    %v2285 = vunpack.c.h.b16 %v393
    %v2286 = vunpack.c.l.b16 %v394
    %v2287 = vunpack.c.h.b16 %v394
    %v2288 = vunpack.c.l.b16 %v395
    %v2289 = vunpack.c.h.b16 %v395
    %v2290 = vunpack.c.l.b16 %v396
    %v2291 = vunpack.c.h.b16 %v396
    %v2292 = vunpack.c.l.b16 %v397
    %v2293 = vunpack.c.h.b16 %v397
    %v2294 = vunpack.c.l.b16 %v398
    %v2295 = vunpack.c.h.b16 %v398
    %v2296 = vunpack.c.l.b16 %v399
    %v2297 = vunpack.c.h.b16 %v399
    %v2298 = vunpack.c.l.b16 %v400
    %v2299 = vunpack.c.h.b16 %v400
    %v2300 = vunpack.c.l.b16 %v401
    %v2301 = vunpack.c.h.b16 %v401
    %v2302 = vunpack.c.l.b16 %v402
    %v2303 = vunpack.c.h.b16 %v402
    %v2304 = vunpack.c.l.b16 %v403
    %v2305 = vunpack.c.h.b16 %v403
    %v2306 = vunpack.c.l.b16 %v404
    %v2307 = vunpack.c.h.b16 %v404
    %v2308 = vunpack.c.l.b16 %v405
    %v2309 = vunpack.c.h.b16 %v405
    %v2310 = vunpack.c.l.b16 %v406
    %v2311 = vunpack.c.h.b16 %v406
    %v2312 = vunpack.c.l.b16 %v407
    %v2313 = vunpack.c.h.b16 %v407
    %v2314 = vunpack.c.l.b16 %v408
    %v2315 = vunpack.c.h.b16 %v408
    %v2316 = vunpack.c.l.b16 %v409
    %v2317 = vunpack.c.h.b16 %v409
    %v2318 = vunpack.c.l.b16 %v410
    %v2319 = vunpack.c.h.b16 %v410
    %v2320 = vunpack.c.l.b16 %v411
    %v2321 = vunpack.c.h.b16 %v411
    %v2322 = vunpack.c.l.b16 %v412
    %v2323 = vunpack.c.h.b16 %v412
    %v2324 = vunpack.c.l.b16 %v413
    %v2325 = vunpack.c.h.b16 %v413
    %v2326 = vunpack.c.l.b16 %v414
    %v2327 = vunpack.c.h.b16 %v414
    %v2328 = vunpack.c.l.b16 %v415
    %v2329 = vunpack.c.h.b16 %v415
    %v2330 = vunpack.c.l.b16 %v416
    %v2331 = vunpack.c.h.b16 %v416
    %v2332 = vunpack.c.l.b16 %v417
    %v2333 = vunpack.c.h.b16 %v417
    %v2334 = vunpack.c.l.b16 %v418
    %v2335 = vunpack.c.h.b16 %v418
    %v2336 = vunpack.c.l.b16 %v419
    %v2337 = vunpack.c.h.b16 %v419
    %v2338 = vunpack.c.l.b16 %v420
    %v2339 = vunpack.c.h.b16 %v420
    %v2340 = vunpack.c.l.b16 %v421
    %v2341 = vunpack.c.h.b16 %v421
    %v2342 = vunpack.c.l.b16 %v422
    %v2343 = vunpack.c.h.b16 %v422
    %v2344 = vunpack.c.l.b16 %v423
    %v2345 = vunpack.c.h.b16 %v423
    %v2346 = vunpack.c.l.b16 %v424
    %v2347 = vunpack.c.h.b16 %v424
    %v2348 = vunpack.c.l.b16 %v425
    %v2349 = vunpack.c.h.b16 %v425
    %v2350 = vunpack.c.l.b16 %v426
    %v2351 = vunpack.c.h.b16 %v426
    %v2352 = vunpack.c.l.b16 %v427
    %v2353 = vunpack.c.h.b16 %v427
    %v2354 = vunpack.c.l.b16 %v428
    %v2355 = vunpack.c.h.b16 %v428
    %v2356 = vunpack.c.l.b16 %v429
    %v2357 = vunpack.c.h.b16 %v429
    %v2358 = vunpack.c.l.b16 %v430
    %v2359 = vunpack.c.h.b16 %v430
    %v2360 = vunpack.c.l.b16 %v431
    %v2361 = vunpack.c.h.b16 %v431
    %v2362 = vunpack.c.l.b16 %v432
    %v2363 = vunpack.c.h.b16 %v432
    %v2364 = vunpack.c.l.b16 %v433
    %v2365 = vunpack.c.h.b16 %v433
    %v2366 = vunpack.c.l.b16 %v434
    %v2367 = vunpack.c.h.b16 %v434
    %v2368 = vunpack.c.l.b16 %v435
    %v2369 = vunpack.c.h.b16 %v435
    %v2370 = vunpack.c.l.b16 %v436
    %v2371 = vunpack.c.h.b16 %v436
    %v2372 = vunpack.c.l.b16 %v437
    %v2373 = vunpack.c.h.b16 %v437
    %v2374 = vunpack.c.l.b16 %v438
    %v2375 = vunpack.c.h.b16 %v438
    %v2376 = vunpack.c.l.b16 %v439
    %v2377 = vunpack.c.h.b16 %v439
    %v2378 = vunpack.c.l.b16 %v440
    %v2379 = vunpack.c.h.b16 %v440
    %v2380 = vunpack.c.l.b16 %v441
    %v2381 = vunpack.c.h.b16 %v441
    %v2382 = vunpack.c.l.b16 %v442
    %v2383 = vunpack.c.h.b16 %v442
    %v2384 = vunpack.c.l.b16 %v443
    %v2385 = vunpack.c.h.b16 %v443
    %v2386 = vunpack.c.l.b16 %v444
    %v2387 = vunpack.c.h.b16 %v444
    %v2388 = vunpack.c.l.b16 %v445
    %v2389 = vunpack.c.h.b16 %v445
    %v2390 = vunpack.c.l.b16 %v446
    %v2391 = vunpack.c.h.b16 %v446
    %v2392 = vunpack.c.l.b16 %v447
    %v2393 = vunpack.c.h.b16 %v447
    %v2394 = vunpack.c.l.b16 %v448
    %v2395 = vunpack.c.h.b16 %v448
    %v2396 = vunpack.c.l.b16 %v449
    %v2397 = vunpack.c.h.b16 %v449
    %v2398 = vunpack.c.l.b16 %v450
    %v2399 = vunpack.c.h.b16 %v450
    %v2400 = vunpack.c.l.b16 %v451
    %v2401 = vunpack.c.h.b16 %v451
    %v2402 = vunpack.c.l.b16 %v452
    %v2403 = vunpack.c.h.b16 %v452
    %v2404 = vunpack.c.l.b16 %v453
    %v2405 = vunpack.c.h.b16 %v453
    %v2406 = vunpack.c.l.b16 %v454
    %v2407 = vunpack.c.h.b16 %v454
    %v2408 = vunpack.c.l.b16 %v455
    %v2409 = vunpack.c.h.b16 %v455
    %v2410 = vunpack.c.l.b16 %v456
    %v2411 = vunpack.c.h.b16 %v456
    %v2412 = vunpack.c.l.b16 %v457
    %v2413 = vunpack.c.h.b16 %v457
    %v2414 = vunpack.c.l.b16 %v458
    %v2415 = vunpack.c.h.b16 %v458
    %v2416 = vunpack.c.l.b16 %v459
    %v2417 = vunpack.c.h.b16 %v459
    %v2418 = vunpack.c.l.b16 %v460
    %v2419 = vunpack.c.h.b16 %v460
    %v2420 = vunpack.c.l.b16 %v461
    %v2421 = vunpack.c.h.b16 %v461
    %v2422 = vunpack.c.l.b16 %v462
    %v2423 = vunpack.c.h.b16 %v462
    %v2424 = vunpack.c.l.b16 %v463
    %v2425 = vunpack.c.h.b16 %v463
    %v2426 = vunpack.c.l.b16 %v464
    %v2427 = vunpack.c.h.b16 %v464
    %v2428 = vunpack.c.l.b16 %v465
    %v2429 = vunpack.c.h.b16 %v465
    %v2430 = vunpack.c.l.b16 %v466
    %v2431 = vunpack.c.h.b16 %v466
    %v2432 = vunpack.c.l.b16 %v467
    %v2433 = vunpack.c.h.b16 %v467
    %v2434 = vunpack.c.l.b16 %v468
    %v2435 = vunpack.c.h.b16 %v468
    %v2436 = vunpack.c.l.b16 %v469
    %v2437 = vunpack.c.h.b16 %v469
    %v2438 = vunpack.c.l.b16 %v470
    %v2439 = vunpack.c.h.b16 %v470
    %v2440 = vunpack.c.l.b16 %v471
    %v2441 = vunpack.c.h.b16 %v471
    %v2442 = vunpack.c.l.b16 %v472
    %v2443 = vunpack.c.h.b16 %v472
    %v2444 = vunpack.c.l.b16 %v473
    %v2445 = vunpack.c.h.b16 %v473
    %v2446 = vunpack.c.l.b16 %v474
    %v2447 = vunpack.c.h.b16 %v474
    %v2448 = vunpack.c.l.b16 %v475
    %v2449 = vunpack.c.h.b16 %v475
    %v2450 = vunpack.c.l.b16 %v476
    %v2451 = vunpack.c.h.b16 %v476
    %v2452 = vunpack.c.l.b16 %v477
    %v2453 = vunpack.c.h.b16 %v477
    %v2454 = vunpack.c.l.b16 %v478
    %v2455 = vunpack.c.h.b16 %v478
    %v2456 = vunpack.c.l.b16 %v479
    %v2457 = vunpack.c.h.b16 %v479
    %v2458 = vunpack.c.l.b16 %v480
    %v2459 = vunpack.c.h.b16 %v480
    %v2460 = vunpack.c.l.b16 %v481
    %v2461 = vunpack.c.h.b16 %v481
    %v2462 = vunpack.c.l.b16 %v482
    %v2463 = vunpack.c.h.b16 %v482
    %v2464 = vunpack.c.l.b16 %v483
    %v2465 = vunpack.c.h.b16 %v483
    %v2466 = vunpack.c.l.b16 %v484
    %v2467 = vunpack.c.h.b16 %v484
    %v2468 = vunpack.c.l.b16 %v485
    %v2469 = vunpack.c.h.b16 %v485
    %v2470 = vunpack.c.l.b16 %v486
    %v2471 = vunpack.c.h.b16 %v486
    %v2472 = vunpack.c.l.b16 %v487
    %v2473 = vunpack.c.h.b16 %v487
    %v2474 = vunpack.c.l.b16 %v488
    %v2475 = vunpack.c.h.b16 %v488
    %v2476 = vunpack.c.l.b16 %v489
    %v2477 = vunpack.c.h.b16 %v489
    %v2478 = vunpack.c.l.b16 %v490
    %v2479 = vunpack.c.h.b16 %v490
    %v2480 = vunpack.c.l.b16 %v491
    %v2481 = vunpack.c.h.b16 %v491
    %v2482 = vunpack.c.l.b16 %v492
    %v2483 = vunpack.c.h.b16 %v492
    %v2484 = vunpack.c.l.b16 %v493
    %v2485 = vunpack.c.h.b16 %v493
    %v2486 = vunpack.c.l.b16 %v494
    %v2487 = vunpack.c.h.b16 %v494
    %v2488 = vunpack.c.l.b16 %v495
    %v2489 = vunpack.c.h.b16 %v495
    %v2490 = vunpack.c.l.b16 %v496
    %v2491 = vunpack.c.h.b16 %v496
    %v2492 = vunpack.c.l.b16 %v497
    %v2493 = vunpack.c.h.b16 %v497
    %v2494 = vunpack.c.l.b16 %v498
    %v2495 = vunpack.c.h.b16 %v498
    %v2496 = vunpack.c.l.b16 %v499
    %v2497 = vunpack.c.h.b16 %v499
    %v2498 = vunpack.c.l.b16 %v500
    %v2499 = vunpack.c.h.b16 %v500
    %v2500 = vunpack.c.l.b16 %v501
    %v2501 = vunpack.c.h.b16 %v501
    %v2502 = vunpack.c.l.b16 %v502
    %v2503 = vunpack.c.h.b16 %v502
    %v2504 = vunpack.c.l.b16 %v503
    %v2505 = vunpack.c.h.b16 %v503
    %v2506 = vunpack.c.l.b16 %v504
    %v2507 = vunpack.c.h.b16 %v504
    %v2508 = vunpack.c.l.b16 %v505
    %v2509 = vunpack.c.h.b16 %v505
    %v2510 = vunpack.c.l.b16 %v506
    %v2511 = vunpack.c.h.b16 %v506
    %v2512 = vunpack.c.l.b16 %v507
    %v2513 = vunpack.c.h.b16 %v507
    %v2514 = vunpack.c.l.b16 %v508
    %v2515 = vunpack.c.h.b16 %v508
    %v2516 = vunpack.c.l.b16 %v509
    %v2517 = vunpack.c.h.b16 %v509
    %v2518 = vunpack.c.l.b16 %v510
    %v2519 = vunpack.c.h.b16 %v510
    %v2520 = vunpack.c.l.b16 %v511
    %v2521 = vunpack.c.h.b16 %v511
    %v2522 = vunpack.c.l.b16 %v512
    %v2523 = vunpack.c.h.b16 %v512
    %v2524 = vunpack.c.l.b16 %v513
    %v2525 = vunpack.c.h.b16 %v513
    %v2526 = vunpack.c.l.b16 %v514
    %v2527 = vunpack.c.h.b16 %v514
    %v2528 = vunpack.c.l.b16 %v515
    %v2529 = vunpack.c.h.b16 %v515
    %v2530 = vunpack.c.l.b16 %v516
    %v2531 = vunpack.c.h.b16 %v516
    %v2532 = vunpack.c.l.b16 %v517
    %v2533 = vunpack.c.h.b16 %v517
    %v2534 = vunpack.c.l.b16 %v518
    %v2535 = vunpack.c.h.b16 %v518
    %v2536 = vunpack.c.l.b16 %v519
    %v2537 = vunpack.c.h.b16 %v519
    %v2538 = vunpack.c.l.b16 %v520
    %v2539 = vunpack.c.h.b16 %v520
    %v2540 = vunpack.c.l.b16 %v521
    %v2541 = vunpack.c.h.b16 %v521
    %v2542 = vunpack.c.l.b16 %v522
    %v2543 = vunpack.c.h.b16 %v522
    %v2544 = vunpack.c.l.b16 %v523
    %v2545 = vunpack.c.h.b16 %v523
    %v2546 = vunpack.c.l.b16 %v524
    %v2547 = vunpack.c.h.b16 %v524
    %v2548 = vunpack.c.l.b16 %v525
    %v2549 = vunpack.c.h.b16 %v525
    %v2550 = vunpack.c.l.b16 %v526
    %v2551 = vunpack.c.h.b16 %v526
    %v2552 = vunpack.c.l.b16 %v527
    %v2553 = vunpack.c.h.b16 %v527
    %v2554 = vunpack.c.l.b16 %v528
    %v2555 = vunpack.c.h.b16 %v528
    %v2556 = vunpack.c.l.b16 %v529
    %v2557 = vunpack.c.h.b16 %v529
    %v2558 = vunpack.c.l.b16 %v530
    %v2559 = vunpack.c.h.b16 %v530
    %v2560 = vunpack.c.l.b16 %v531
    %v2561 = vunpack.c.h.b16 %v531
    %v2562 = vunpack.c.l.b16 %v532
    %v2563 = vunpack.c.h.b16 %v532
    %v2564 = vunpack.c.l.b16 %v533
    %v2565 = vunpack.c.h.b16 %v533
    %v2566 = vunpack.c.l.b16 %v534
    %v2567 = vunpack.c.h.b16 %v534
    %v2568 = vunpack.c.l.b16 %v535
    %v2569 = vunpack.c.h.b16 %v535
    %v2570 = vunpack.c.l.b16 %v536
    %v2571 = vunpack.c.h.b16 %v536
    %v2572 = vunpack.c.l.b16 %v537
    %v2573 = vunpack.c.h.b16 %v537
    %v2574 = vunpack.c.l.b16 %v538
    %v2575 = vunpack.c.h.b16 %v538
    %v2576 = vunpack.c.l.b16 %v539
    %v2577 = vunpack.c.h.b16 %v539
    %v2578 = vunpack.c.l.b16 %v540
    %v2579 = vunpack.c.h.b16 %v540
    %v2580 = vunpack.c.l.b16 %v541
    %v2581 = vunpack.c.h.b16 %v541
    %v2582 = vunpack.c.l.b16 %v542
    %v2583 = vunpack.c.h.b16 %v542
    %v2584 = vunpack.c.l.b16 %v543
    %v2585 = vunpack.c.h.b16 %v543
    %v2586 = vunpack.c.l.b16 %v544
    %v2587 = vunpack.c.h.b16 %v544
    %v2588 = vunpack.c.l.b16 %v545
    %v2589 = vunpack.c.h.b16 %v545
    %v2590 = vunpack.c.l.b16 %v546
    %v2591 = vunpack.c.h.b16 %v546
    %v2592 = vunpack.c.l.b16 %v547
    %v2593 = vunpack.c.h.b16 %v547
    %v2594 = vunpack.c.l.b16 %v548
    %v2595 = vunpack.c.h.b16 %v548
    %v2596 = vunpack.c.l.b16 %v549
    %v2597 = vunpack.c.h.b16 %v549
    %v2598 = vunpack.c.l.b16 %v550
    %v2599 = vunpack.c.h.b16 %v550
    %v2600 = vunpack.c.l.b16 %v551
    %v2601 = vunpack.c.h.b16 %v551
    %v2602 = vunpack.c.l.b16 %v552
    %v2603 = vunpack.c.h.b16 %v552
    %v2604 = vunpack.c.l.b16 %v553
    %v2605 = vunpack.c.h.b16 %v553
    %v2606 = vunpack.c.l.b16 %v554
    %v2607 = vunpack.c.h.b16 %v554
    %v2608 = vunpack.c.l.b16 %v555
    %v2609 = vunpack.c.h.b16 %v555
    %v2610 = vunpack.c.l.b16 %v556
    %v2611 = vunpack.c.h.b16 %v556
    %v2612 = vunpack.c.l.b16 %v557
    %v2613 = vunpack.c.h.b16 %v557
    %v2614 = vunpack.c.l.b16 %v558
    %v2615 = vunpack.c.h.b16 %v558
    %v2616 = vunpack.c.l.b16 %v559
    %v2617 = vunpack.c.h.b16 %v559
    %v2618 = vunpack.c.l.b16 %v560
    %v2619 = vunpack.c.h.b16 %v560
    %v2620 = vunpack.c.l.b16 %v561
    %v2621 = vunpack.c.h.b16 %v561
    %v2622 = vunpack.c.l.b16 %v562
    %v2623 = vunpack.c.h.b16 %v562
    %v2624 = vunpack.c.l.b16 %v563
    %v2625 = vunpack.c.h.b16 %v563
    %v2626 = vunpack.c.l.b16 %v564
    %v2627 = vunpack.c.h.b16 %v564
    %v2628 = vunpack.c.l.b16 %v565
    %v2629 = vunpack.c.h.b16 %v565
    %v2630 = vunpack.c.l.b16 %v566
    %v2631 = vunpack.c.h.b16 %v566
    %v2632 = vunpack.c.l.b16 %v567
    %v2633 = vunpack.c.h.b16 %v567
    %v2634 = vunpack.c.l.b16 %v568
    %v2635 = vunpack.c.h.b16 %v568
    %v2636 = vunpack.c.l.b16 %v569
    %v2637 = vunpack.c.h.b16 %v569
    %v2638 = vunpack.c.l.b16 %v570
    %v2639 = vunpack.c.h.b16 %v570
    %v2640 = vunpack.c.l.b16 %v571
    %v2641 = vunpack.c.h.b16 %v571
    %v2642 = vunpack.c.l.b16 %v572
    %v2643 = vunpack.c.h.b16 %v572
    %v2644 = vunpack.c.l.b16 %v573
    %v2645 = vunpack.c.h.b16 %v573
    %v2646 = vunpack.c.l.b16 %v574
    %v2647 = vunpack.c.h.b16 %v574
    %v2648 = vunpack.c.l.b16 %v575
    %v2649 = vunpack.c.h.b16 %v575
    %v2650 = vunpack.c.l.b16 %v576
    %v2651 = vunpack.c.h.b16 %v576
    %v2652 = vunpack.c.l.b16 %v577
    %v2653 = vunpack.c.h.b16 %v577
    %v2654 = vunpack.c.l.b16 %v578
    %v2655 = vunpack.c.h.b16 %v578
    %v2656 = vunpack.c.l.b16 %v579
    %v2657 = vunpack.c.h.b16 %v579
    %v2658 = vunpack.c.l.b16 %v580
    %v2659 = vunpack.c.h.b16 %v580
    %v2660 = vunpack.c.l.b16 %v581
    %v2661 = vunpack.c.h.b16 %v581
    %v2662 = vunpack.c.l.b16 %v582
    %v2663 = vunpack.c.h.b16 %v582
    %v2664 = vunpack.c.l.b16 %v583
    %v2665 = vunpack.c.h.b16 %v583
    %v2666 = vunpack.c.l.b16 %v584
    %v2667 = vunpack.c.h.b16 %v584
    %v2668 = vunpack.c.l.b16 %v585
    %v2669 = vunpack.c.h.b16 %v585
    %v2670 = vunpack.c.l.b16 %v586
    %v2671 = vunpack.c.h.b16 %v586
    %v2672 = vunpack.c.l.b16 %v587
    %v2673 = vunpack.c.h.b16 %v587
    %v2674 = vunpack.c.l.b16 %v588
    %v2675 = vunpack.c.h.b16 %v588
    %v2676 = vunpack.c.l.b16 %v589
    %v2677 = vunpack.c.h.b16 %v589
    %v2678 = vunpack.c.l.b16 %v590
    %v2679 = vunpack.c.h.b16 %v590
    %v2680 = vunpack.c.l.b16 %v591
    %v2681 = vunpack.c.h.b16 %v591
    %v2682 = vunpack.c.l.b16 %v592
    %v2683 = vunpack.c.h.b16 %v592
    %v2684 = vunpack.c.l.b16 %v593
    %v2685 = vunpack.c.h.b16 %v593
    %v2686 = vunpack.c.l.b16 %v594
    %v2687 = vunpack.c.h.b16 %v594
    %v2688 = vunpack.c.l.b16 %v595
    %v2689 = vunpack.c.h.b16 %v595
    %v2690 = vunpack.c.l.b16 %v596
    %v2691 = vunpack.c.h.b16 %v596
    %v2692 = vunpack.c.l.b16 %v597
    %v2693 = vunpack.c.h.b16 %v597
    %v2694 = vunpack.c.l.b16 %v598
    %v2695 = vunpack.c.h.b16 %v598
    %v2696 = vunpack.c.l.b16 %v599
    %v2697 = vunpack.c.h.b16 %v599
    %v2698 = vunpack.c.l.b16 %v600
    %v2699 = vunpack.c.h.b16 %v600
    %v2700 = vunpack.c.l.b16 %v601
    %v2701 = vunpack.c.h.b16 %v601
    %v2702 = vunpack.c.l.b16 %v602
    %v2703 = vunpack.c.h.b16 %v602
    %v2704 = vunpack.c.l.b16 %v603
    %v2705 = vunpack.c.h.b16 %v603
    %v2706 = vunpack.c.l.b16 %v604
    %v2707 = vunpack.c.h.b16 %v604
    %v2708 = vunpack.c.l.b16 %v605
    %v2709 = vunpack.c.h.b16 %v605
    %v2710 = vunpack.c.l.b16 %v606
    %v2711 = vunpack.c.h.b16 %v606
    %v2712 = vunpack.c.l.b16 %v607
    %v2713 = vunpack.c.h.b16 %v607
    %v2714 = vunpack.c.l.b16 %v608
    %v2715 = vunpack.c.h.b16 %v608
    %v2716 = vunpack.c.l.b16 %v609
    %v2717 = vunpack.c.h.b16 %v609
    %v2718 = vunpack.c.l.b16 %v610
    %v2719 = vunpack.c.h.b16 %v610
    %v2720 = vunpack.c.l.b16 %v611
    %v2721 = vunpack.c.h.b16 %v611
    %v2722 = vunpack.c.l.b16 %v612
    %v2723 = vunpack.c.h.b16 %v612
    %v2724 = vunpack.c.l.b16 %v613
    %v2725 = vunpack.c.h.b16 %v613
    %v2726 = vunpack.c.l.b16 %v614
    %v2727 = vunpack.c.h.b16 %v614
    %v2728 = vunpack.c.l.b16 %v615
    %v2729 = vunpack.c.h.b16 %v615
    %v2730 = vunpack.c.l.b16 %v616
    %v2731 = vunpack.c.h.b16 %v616
    %v2732 = vunpack.c.l.b16 %v617
    %v2733 = vunpack.c.h.b16 %v617
    %v2734 = vunpack.c.l.b16 %v618
    %v2735 = vunpack.c.h.b16 %v618
    %v2736 = vunpack.c.l.b16 %v619
    %v2737 = vunpack.c.h.b16 %v619
    %v2738 = vunpack.c.l.b16 %v620
    %v2739 = vunpack.c.h.b16 %v620
    %v2740 = vunpack.c.l.b16 %v621
    %v2741 = vunpack.c.h.b16 %v621
    %v2742 = vunpack.c.l.b16 %v622
    %v2743 = vunpack.c.h.b16 %v622
    %v2744 = vunpack.c.l.b16 %v623
    %v2745 = vunpack.c.h.b16 %v623
    %v2746 = vunpack.c.l.b16 %v624
    %v2747 = vunpack.c.h.b16 %v624
    %v2748 = vunpack.c.l.b16 %v625
    %v2749 = vunpack.c.h.b16 %v625
    %v2750 = vunpack.c.l.b16 %v626
    %v2751 = vunpack.c.h.b16 %v626
    %v2752 = vunpack.c.l.b16 %v627
    %v2753 = vunpack.c.h.b16 %v627
    %v2754 = vunpack.c.l.b16 %v628
    %v2755 = vunpack.c.h.b16 %v628
    %v2756 = vunpack.c.l.b16 %v629
    %v2757 = vunpack.c.h.b16 %v629
    %v2758 = vunpack.c.l.b16 %v630
    %v2759 = vunpack.c.h.b16 %v630
    %v2760 = vunpack.c.l.b16 %v631
    %v2761 = vunpack.c.h.b16 %v631
    %v2762 = vunpack.c.l.b16 %v632
    %v2763 = vunpack.c.h.b16 %v632
    %v2764 = vunpack.c.l.b16 %v633
    %v2765 = vunpack.c.h.b16 %v633
    %v2766 = vunpack.c.l.b16 %v634
    %v2767 = vunpack.c.h.b16 %v634
    %v2768 = vunpack.c.l.b16 %v635
    %v2769 = vunpack.c.h.b16 %v635
    %v2770 = vunpack.c.l.b16 %v636
    %v2771 = vunpack.c.h.b16 %v636
    %v2772 = vunpack.c.l.b16 %v637
    %v2773 = vunpack.c.h.b16 %v637
    %v2774 = vunpack.c.l.b16 %v638
    %v2775 = vunpack.c.h.b16 %v638
    %v2776 = vunpack.c.l.b16 %v639
    %v2777 = vunpack.c.h.b16 %v639
    %v2778 = vunpack.c.l.b16 %v640
    %v2779 = vunpack.c.h.b16 %v640
    %v2780 = vunpack.c.l.b16 %v641
    %v2781 = vunpack.c.h.b16 %v641
    %v2782 = vunpack.c.l.b16 %v642
    %v2783 = vunpack.c.h.b16 %v642
    %v2784 = vunpack.c.l.b16 %v643
    %v2785 = vunpack.c.h.b16 %v643
    %v2786 = vunpack.c.l.b16 %v644
    %v2787 = vunpack.c.h.b16 %v644
    %v2788 = vunpack.c.l.b16 %v645
    %v2789 = vunpack.c.h.b16 %v645
    %v2790 = vunpack.c.l.b16 %v646
    %v2791 = vunpack.c.h.b16 %v646
    %v2792 = vunpack.c.l.b16 %v647
    %v2793 = vunpack.c.h.b16 %v647
    %v2794 = vunpack.c.l.b16 %v648
    %v2795 = vunpack.c.h.b16 %v648
    %v2796 = vunpack.c.l.b16 %v649
    %v2797 = vunpack.c.h.b16 %v649
    %v2798 = vunpack.c.l.b16 %v650
    %v2799 = vunpack.c.h.b16 %v650
    %v2800 = vunpack.c.l.b16 %v651
    %v2801 = vunpack.c.h.b16 %v651
    %v2802 = vunpack.c.l.b16 %v652
    %v2803 = vunpack.c.h.b16 %v652
    %v2804 = vunpack.c.l.b16 %v653
    %v2805 = vunpack.c.h.b16 %v653
    %v2806 = vunpack.c.l.b16 %v654
    %v2807 = vunpack.c.h.b16 %v654
    %v2808 = vunpack.c.l.b16 %v655
    %v2809 = vunpack.c.h.b16 %v655
    %v2810 = vunpack.c.l.b16 %v656
    %v2811 = vunpack.c.h.b16 %v656
    %v2812 = vunpack.c.l.b16 %v657
    %v2813 = vunpack.c.h.b16 %v657
    %v2814 = vunpack.c.l.b16 %v658
    %v2815 = vunpack.c.h.b16 %v658
    %v2816 = vunpack.c.l.b16 %v659
    %v2817 = vunpack.c.h.b16 %v659
    %v2818 = vunpack.c.l.b16 %v660
    %v2819 = vunpack.c.h.b16 %v660
    %v2820 = vunpack.c.l.b16 %v661
    %v2821 = vunpack.c.h.b16 %v661
    %v2822 = vunpack.c.l.b16 %v662
    %v2823 = vunpack.c.h.b16 %v662
    %v2824 = vunpack.c.l.b16 %v663
    %v2825 = vunpack.c.h.b16 %v663
    %v2826 = vunpack.c.l.b16 %v664
    %v2827 = vunpack.c.h.b16 %v664
    %v2828 = vunpack.c.l.b16 %v665
    %v2829 = vunpack.c.h.b16 %v665
    %v2830 = vunpack.c.l.b16 %v666
    %v2831 = vunpack.c.h.b16 %v666
    %v2832 = vunpack.c.l.b16 %v667
    %v2833 = vunpack.c.h.b16 %v667
    %v2834 = vunpack.c.l.b16 %v668
    %v2835 = vunpack.c.h.b16 %v668
    %v2836 = vunpack.c.l.b16 %v669
    %v2837 = vunpack.c.h.b16 %v669
    %v2838 = vunpack.c.l.b16 %v670
    %v2839 = vunpack.c.h.b16 %v670
    %v2840 = vunpack.c.l.b16 %v671
    %v2841 = vunpack.c.h.b16 %v671
    %v2842 = vunpack.c.l.b16 %v672
    %v2843 = vunpack.c.h.b16 %v672
    %v2844 = vunpack.c.l.b16 %v673
    %v2845 = vunpack.c.h.b16 %v673
    %v2846 = vunpack.c.l.b16 %v674
    %v2847 = vunpack.c.h.b16 %v674
    %v2848 = vunpack.c.l.b16 %v675
    %v2849 = vunpack.c.h.b16 %v675
    %v2850 = vunpack.c.l.b16 %v676
    %v2851 = vunpack.c.h.b16 %v676
    %v2852 = vunpack.c.l.b16 %v677
    %v2853 = vunpack.c.h.b16 %v677
    %v2854 = vunpack.c.l.b16 %v678
    %v2855 = vunpack.c.h.b16 %v678
    %v2856 = vunpack.c.l.b16 %v679
    %v2857 = vunpack.c.h.b16 %v679
    %v2858 = vunpack.c.l.b16 %v680
    %v2859 = vunpack.c.h.b16 %v680
    %v2860 = vunpack.c.l.b16 %v681
    %v2861 = vunpack.c.h.b16 %v681
    %v2862 = vunpack.c.l.b16 %v682
    %v2863 = vunpack.c.h.b16 %v682
    %v2864 = vunpack.c.l.b16 %v683
    %v2865 = vunpack.c.h.b16 %v683
    %v2866 = vunpack.c.l.b16 %v684
    %v2867 = vunpack.c.h.b16 %v684
    %v2868 = vunpack.c.l.b16 %v685
    %v2869 = vunpack.c.h.b16 %v685
    %v2870 = vunpack.c.l.b16 %v686
    %v2871 = vunpack.c.h.b16 %v686
    %v2872 = vunpack.c.l.b16 %v687
    %v2873 = vunpack.c.h.b16 %v687
    %v2874 = vunpack.c.l.b16 %v688
    %v2875 = vunpack.c.h.b16 %v688
    %v2876 = vunpack.c.l.b16 %v689
    %v2877 = vunpack.c.h.b16 %v689
    %v2878 = vunpack.c.l.b16 %v690
    %v2879 = vunpack.c.h.b16 %v690
    %v2880 = vunpack.c.l.b16 %v691
    %v2881 = vunpack.c.h.b16 %v691
    %v2882 = vunpack.c.l.b16 %v692
    %v2883 = vunpack.c.h.b16 %v692
    %v2884 = vunpack.c.l.b16 %v693
    %v2885 = vunpack.c.h.b16 %v693
    %v2886 = vunpack.c.l.b16 %v694
    %v2887 = vunpack.c.h.b16 %v694
    %v2888 = vunpack.c.l.b16 %v695
    %v2889 = vunpack.c.h.b16 %v695
    %v2890 = vunpack.c.l.b16 %v696
    %v2891 = vunpack.c.h.b16 %v696
    %v2892 = vunpack.c.l.b16 %v697
    %v2893 = vunpack.c.h.b16 %v697
    %v2894 = vunpack.c.l.b16 %v698
    %v2895 = vunpack.c.h.b16 %v698
    %v2896 = vunpack.c.l.b16 %v699
    %v2897 = vunpack.c.h.b16 %v699
    %v2898 = vunpack.c.l.b16 %v700
    %v2899 = vunpack.c.h.b16 %v700
    %v2900 = vunpack.c.l.b16 %v701
    %v2901 = vunpack.c.h.b16 %v701
    %v2902 = vunpack.c.l.b16 %v702
    %v2903 = vunpack.c.h.b16 %v702
    %v2904 = vunpack.c.l.b16 %v703
    %v2905 = vunpack.c.h.b16 %v703
    %v2906 = vunpack.c.l.b16 %v704
    %v2907 = vunpack.c.h.b16 %v704
    %v2908 = vunpack.c.l.b16 %v705
    %v2909 = vunpack.c.h.b16 %v705
    %v2910 = vunpack.c.l.b16 %v706
    %v2911 = vunpack.c.h.b16 %v706
    %v2912 = vunpack.c.l.b16 %v707
    %v2913 = vunpack.c.h.b16 %v707
    %v2914 = vunpack.c.l.b16 %v708
    %v2915 = vunpack.c.h.b16 %v708
    %v2916 = vunpack.c.l.b16 %v709
    %v2917 = vunpack.c.h.b16 %v709
    %v2918 = vunpack.c.l.b16 %v710
    %v2919 = vunpack.c.h.b16 %v710
    %v2920 = vunpack.c.l.b16 %v711
    %v2921 = vunpack.c.h.b16 %v711
    %v2922 = vunpack.c.l.b16 %v712
    %v2923 = vunpack.c.h.b16 %v712
    %v2924 = vunpack.c.l.b16 %v713
    %v2925 = vunpack.c.h.b16 %v713
    %v2926 = vunpack.c.l.b16 %v714
    %v2927 = vunpack.c.h.b16 %v714
    %v2928 = vunpack.c.l.b16 %v715
    %v2929 = vunpack.c.h.b16 %v715
    %v2930 = vunpack.c.l.b16 %v716
    %v2931 = vunpack.c.h.b16 %v716
    %v2932 = vunpack.c.l.b16 %v717
    %v2933 = vunpack.c.h.b16 %v717
    %v2934 = vunpack.c.l.b16 %v718
    %v2935 = vunpack.c.h.b16 %v718
    %v2936 = vunpack.c.l.b16 %v719
    %v2937 = vunpack.c.h.b16 %v719
    %v2938 = vunpack.c.l.b16 %v720
    %v2939 = vunpack.c.h.b16 %v720
    %v2940 = vunpack.c.l.b16 %v721
    %v2941 = vunpack.c.h.b16 %v721
    %v2942 = vunpack.c.l.b16 %v722
    %v2943 = vunpack.c.h.b16 %v722
    %v2944 = vunpack.c.l.b16 %v723
    %v2945 = vunpack.c.h.b16 %v723
    %v2946 = vunpack.c.l.b16 %v724
    %v2947 = vunpack.c.h.b16 %v724
    %v2948 = vunpack.c.l.b16 %v725
    %v2949 = vunpack.c.h.b16 %v725
    %v2950 = vunpack.c.l.b16 %v726
    %v2951 = vunpack.c.h.b16 %v726
    %v2952 = vunpack.c.l.b16 %v727
    %v2953 = vunpack.c.h.b16 %v727
    %v2954 = vunpack.c.l.b16 %v728
    %v2955 = vunpack.c.h.b16 %v728
    %v2956 = vunpack.c.l.b16 %v729
    %v2957 = vunpack.c.h.b16 %v729
    %v2958 = vunpack.c.l.b16 %v730
    %v2959 = vunpack.c.h.b16 %v730
    %v2960 = vunpack.c.l.b16 %v731
    %v2961 = vunpack.c.h.b16 %v731
    %v2962 = vunpack.c.l.b16 %v732
    %v2963 = vunpack.c.h.b16 %v732
    %v2964 = vunpack.c.l.b16 %v733
    %v2965 = vunpack.c.h.b16 %v733
    %v2966 = vunpack.c.l.b16 %v734
    %v2967 = vunpack.c.h.b16 %v734
    %v2968 = vunpack.c.l.b16 %v735
    %v2969 = vunpack.c.h.b16 %v735
    %v2970 = vunpack.c.l.b16 %v736
    %v2971 = vunpack.c.h.b16 %v736
    %v2972 = vunpack.c.l.b16 %v737
    %v2973 = vunpack.c.h.b16 %v737
    %v2974 = vunpack.c.l.b16 %v738
    %v2975 = vunpack.c.h.b16 %v738
    %v2976 = vunpack.c.l.b16 %v739
    %v2977 = vunpack.c.h.b16 %v739
    %v2978 = vunpack.c.l.b16 %v740
    %v2979 = vunpack.c.h.b16 %v740
    %v2980 = vunpack.c.l.b16 %v741
    %v2981 = vunpack.c.h.b16 %v741
    %v2982 = vunpack.c.l.b16 %v742
    %v2983 = vunpack.c.h.b16 %v742
    %v2984 = vunpack.c.l.b16 %v743
    %v2985 = vunpack.c.h.b16 %v743
    %v2986 = vunpack.c.l.b16 %v744
    %v2987 = vunpack.c.h.b16 %v744
    %v2988 = vunpack.c.l.b16 %v745
    %v2989 = vunpack.c.h.b16 %v745
    %v2990 = vunpack.c.l.b16 %v746
    %v2991 = vunpack.c.h.b16 %v746
    %v2992 = vunpack.c.l.b16 %v747
    %v2993 = vunpack.c.h.b16 %v747
    %v2994 = vunpack.c.l.b16 %v748
    %v2995 = vunpack.c.h.b16 %v748
    %v2996 = vunpack.c.l.b16 %v749
    %v2997 = vunpack.c.h.b16 %v749
    %v2998 = vunpack.c.l.b16 %v750
    %v2999 = vunpack.c.h.b16 %v750
    %v3000 = vunpack.c.l.b16 %v751
    %v3001 = vunpack.c.h.b16 %v751
    %v3002 = vunpack.c.l.b16 %v752
    %v3003 = vunpack.c.h.b16 %v752
    %v3004 = vunpack.c.l.b16 %v753
    %v3005 = vunpack.c.h.b16 %v753
    %v3006 = vunpack.c.l.b16 %v754
    %v3007 = vunpack.c.h.b16 %v754
    %v3008 = vunpack.c.l.b16 %v755
    %v3009 = vunpack.c.h.b16 %v755
    %v3010 = vunpack.c.l.b16 %v756
    %v3011 = vunpack.c.h.b16 %v756
    %v3012 = vunpack.c.l.b16 %v757
    %v3013 = vunpack.c.h.b16 %v757
    %v3014 = vunpack.c.l.b16 %v758
    %v3015 = vunpack.c.h.b16 %v758
    %v3016 = vunpack.c.l.b16 %v759
    %v3017 = vunpack.c.h.b16 %v759
    %v3018 = vunpack.c.l.b16 %v760
    %v3019 = vunpack.c.h.b16 %v760
    %v3020 = vunpack.c.l.b16 %v761
    %v3021 = vunpack.c.h.b16 %v761
    %v3022 = vunpack.c.l.b16 %v762
    %v3023 = vunpack.c.h.b16 %v762
    %v3024 = vunpack.c.l.b16 %v763
    %v3025 = vunpack.c.h.b16 %v763
    %v3026 = vunpack.c.l.b16 %v764
    %v3027 = vunpack.c.h.b16 %v764
    %v3028 = vunpack.c.l.b16 %v765
    %v3029 = vunpack.c.h.b16 %v765
    %v3030 = vunpack.c.l.b16 %v766
    %v3031 = vunpack.c.h.b16 %v766
    %v3032 = vunpack.c.l.b16 %v767
    %v3033 = vunpack.c.h.b16 %v767
    %v3034 = vunpack.c.l.b16 %v768
    %v3035 = vunpack.c.h.b16 %v768
    %v3036 = vunpack.c.l.b16 %v769
    %v3037 = vunpack.c.h.b16 %v769
    %v3038 = vunpack.c.l.b16 %v770
    %v3039 = vunpack.c.h.b16 %v770
    %v3040 = vunpack.c.l.b16 %v771
    %v3041 = vunpack.c.h.b16 %v771
    %v3042 = vunpack.c.l.b16 %v772
    %v3043 = vunpack.c.h.b16 %v772
    %v3044 = vunpack.c.l.b16 %v773
    %v3045 = vunpack.c.h.b16 %v773
    %v3046 = vunpack.c.l.b16 %v774
    %v3047 = vunpack.c.h.b16 %v774
    %v3048 = vunpack.c.l.b16 %v775
    %v3049 = vunpack.c.h.b16 %v775
    %v3050 = vunpack.c.l.b16 %v776
    %v3051 = vunpack.c.h.b16 %v776
    %v3052 = vunpack.c.l.b16 %v777
    %v3053 = vunpack.c.h.b16 %v777
    %v3054 = vunpack.c.l.b16 %v778
    %v3055 = vunpack.c.h.b16 %v778
    %v3056 = vunpack.c.l.b16 %v779
    %v3057 = vunpack.c.h.b16 %v779
    %v3058 = vunpack.c.l.b16 %v780
    %v3059 = vunpack.c.h.b16 %v780
    %v3060 = vunpack.c.l.b16 %v781
    %v3061 = vunpack.c.h.b16 %v781
    %v3062 = vunpack.c.l.b16 %v782
    %v3063 = vunpack.c.h.b16 %v782
    %v3064 = vunpack.c.l.b16 %v783
    %v3065 = vunpack.c.h.b16 %v783
    %v3066 = vunpack.c.l.b16 %v784
    %v3067 = vunpack.c.h.b16 %v784
    %v3068 = vunpack.c.l.b16 %v785
    %v3069 = vunpack.c.h.b16 %v785
    %v3070 = vunpack.c.l.b16 %v786
    %v3071 = vunpack.c.h.b16 %v786
    %v3072 = vunpack.c.l.b16 %v787
    %v3073 = vunpack.c.h.b16 %v787
    %v3074 = vunpack.c.l.b16 %v788
    %v3075 = vunpack.c.h.b16 %v788
    %v3076 = vunpack.c.l.b16 %v789
    %v3077 = vunpack.c.h.b16 %v789
    %v3078 = vunpack.c.l.b16 %v790
    %v3079 = vunpack.c.h.b16 %v790
    %v3080 = vunpack.c.l.b16 %v791
    %v3081 = vunpack.c.h.b16 %v791
    %v3082 = vunpack.c.l.b16 %v792
    %v3083 = vunpack.c.h.b16 %v792
    %v3084 = vunpack.c.l.b16 %v793
    %v3085 = vunpack.c.h.b16 %v793
    %v3086 = vunpack.c.l.b16 %v794
    %v3087 = vunpack.c.h.b16 %v794
    %v3088 = vunpack.c.l.b16 %v795
    %v3089 = vunpack.c.h.b16 %v795
    %v3090 = vunpack.c.l.b16 %v796
    %v3091 = vunpack.c.h.b16 %v796
    %v3092 = vunpack.c.l.b16 %v797
    %v3093 = vunpack.c.h.b16 %v797
    %v3094 = vunpack.c.l.b16 %v798
    %v3095 = vunpack.c.h.b16 %v798
    %v3096 = vunpack.c.l.b16 %v799
    %v3097 = vunpack.c.h.b16 %v799
    %v3098 = vunpack.c.l.b16 %v800
    %v3099 = vunpack.c.h.b16 %v800
    %v3100 = vunpack.c.l.b16 %v801
    %v3101 = vunpack.c.h.b16 %v801
    %v3102 = vunpack.c.l.b16 %v802
    %v3103 = vunpack.c.h.b16 %v802
    %v3104 = vunpack.c.l.b16 %v803
    %v3105 = vunpack.c.h.b16 %v803
    %v3106 = vunpack.c.l.b16 %v804
    %v3107 = vunpack.c.h.b16 %v804
    %v3108 = vunpack.c.l.b16 %v805
    %v3109 = vunpack.c.h.b16 %v805
    %v3110 = vunpack.c.l.b16 %v806
    %v3111 = vunpack.c.h.b16 %v806
    %v3112 = vunpack.c.l.b16 %v807
    %v3113 = vunpack.c.h.b16 %v807
    %v3114 = vunpack.c.l.b16 %v808
    %v3115 = vunpack.c.h.b16 %v808
    %v3116 = vunpack.c.l.b16 %v809
    %v3117 = vunpack.c.h.b16 %v809
    %v3118 = vunpack.c.l.b16 %v810
    %v3119 = vunpack.c.h.b16 %v810
    %v3120 = vunpack.c.l.b16 %v811
    %v3121 = vunpack.c.h.b16 %v811
    %v3122 = vunpack.c.l.b16 %v812
    %v3123 = vunpack.c.h.b16 %v812
    %v3124 = vunpack.c.l.b16 %v813
    %v3125 = vunpack.c.h.b16 %v813
    %v3126 = vunpack.c.l.b16 %v814
    %v3127 = vunpack.c.h.b16 %v814
    %v3128 = vunpack.c.l.b16 %v815
    %v3129 = vunpack.c.h.b16 %v815
    %v3130 = vunpack.c.l.b16 %v816
    %v3131 = vunpack.c.h.b16 %v816
    %v3132 = vunpack.c.l.b16 %v817
    %v3133 = vunpack.c.h.b16 %v817
    %v3134 = vunpack.c.l.b16 %v818
    %v3135 = vunpack.c.h.b16 %v818
    %v3136 = vunpack.c.l.b16 %v819
    %v3137 = vunpack.c.h.b16 %v819
    %v3138 = vunpack.c.l.b16 %v820
    %v3139 = vunpack.c.h.b16 %v820
    %v3140 = vunpack.c.l.b16 %v821
    %v3141 = vunpack.c.h.b16 %v821
    %v3142 = vunpack.c.l.b16 %v822
    %v3143 = vunpack.c.h.b16 %v822
    %v3144 = vunpack.c.l.b16 %v823
    %v3145 = vunpack.c.h.b16 %v823
    %v3146 = vunpack.c.l.b16 %v824
    %v3147 = vunpack.c.h.b16 %v824
    %v3148 = vunpack.c.l.b16 %v825
    %v3149 = vunpack.c.h.b16 %v825
    %v3150 = vunpack.c.l.b16 %v826
    %v3151 = vunpack.c.h.b16 %v826
    %v3152 = vunpack.c.l.b16 %v827
    %v3153 = vunpack.c.h.b16 %v827
    %v3154 = vunpack.c.l.b16 %v828
    %v3155 = vunpack.c.h.b16 %v828
    %v3156 = vunpack.c.l.b16 %v829
    %v3157 = vunpack.c.h.b16 %v829
    %v3158 = vunpack.c.l.b16 %v830
    %v3159 = vunpack.c.h.b16 %v830
    %v3160 = vunpack.c.l.b16 %v831
    %v3161 = vunpack.c.h.b16 %v831
    %v3162 = vunpack.c.l.b16 %v832
    %v3163 = vunpack.c.h.b16 %v832
    %v3164 = vunpack.c.l.b16 %v833
    %v3165 = vunpack.c.h.b16 %v833
    %v3166 = vunpack.c.l.b16 %v834
    %v3167 = vunpack.c.h.b16 %v834
    %v3168 = vunpack.c.l.b16 %v835
    %v3169 = vunpack.c.h.b16 %v835
    %v3170 = vunpack.c.l.b16 %v836
    %v3171 = vunpack.c.h.b16 %v836
    %v3172 = vunpack.c.l.b16 %v837
    %v3173 = vunpack.c.h.b16 %v837
    %v3174 = vunpack.c.l.b16 %v838
    %v3175 = vunpack.c.h.b16 %v838
    %v3176 = vunpack.c.l.b16 %v839
    %v3177 = vunpack.c.h.b16 %v839
    %v3178 = vunpack.c.l.b16 %v840
    %v3179 = vunpack.c.h.b16 %v840
    %v3180 = vunpack.c.l.b16 %v841
    %v3181 = vunpack.c.h.b16 %v841
    %v3182 = vunpack.c.l.b16 %v842
    %v3183 = vunpack.c.h.b16 %v842
    %v3184 = vunpack.c.l.b16 %v843
    %v3185 = vunpack.c.h.b16 %v843
    %v3186 = vunpack.c.l.b16 %v844
    %v3187 = vunpack.c.h.b16 %v844
    %v3188 = vunpack.c.l.b16 %v845
    %v3189 = vunpack.c.h.b16 %v845
    %v3190 = vunpack.c.l.b16 %v846
    %v3191 = vunpack.c.h.b16 %v846
    %v3192 = vunpack.c.l.b16 %v847
    %v3193 = vunpack.c.h.b16 %v847
    %v3194 = vunpack.c.l.b16 %v848
    %v3195 = vunpack.c.h.b16 %v848
    %v3196 = vunpack.c.l.b16 %v849
    %v3197 = vunpack.c.h.b16 %v849
    %v3198 = vunpack.c.l.b16 %v850
    %v3199 = vunpack.c.h.b16 %v850
    %v3200 = vunpack.c.l.b16 %v851
    %v3201 = vunpack.c.h.b16 %v851
    %v3202 = vunpack.c.l.b16 %v852
    %v3203 = vunpack.c.h.b16 %v852
    %v3204 = vunpack.c.l.b16 %v853
    %v3205 = vunpack.c.h.b16 %v853
    %v3206 = vunpack.c.l.b16 %v854
    %v3207 = vunpack.c.h.b16 %v854
    %v3208 = vunpack.c.l.b16 %v855
    %v3209 = vunpack.c.h.b16 %v855
    %v3210 = vunpack.c.l.b16 %v856
    %v3211 = vunpack.c.h.b16 %v856
    %v3212 = vunpack.c.l.b16 %v857
    %v3213 = vunpack.c.h.b16 %v857
    %v3214 = vunpack.c.l.b16 %v858
    %v3215 = vunpack.c.h.b16 %v858
    %v3216 = vunpack.c.l.b16 %v859
    %v3217 = vunpack.c.h.b16 %v859
    %v3218 = vunpack.c.l.b16 %v860
    %v3219 = vunpack.c.h.b16 %v860
    %v3220 = vunpack.c.l.b16 %v861
    %v3221 = vunpack.c.h.b16 %v861
    %v3222 = vunpack.c.l.b16 %v862
    %v3223 = vunpack.c.h.b16 %v862
    %v3224 = vunpack.c.l.b16 %v863
    %v3225 = vunpack.c.h.b16 %v863
    %v3226 = vunpack.c.l.b16 %v864
    %v3227 = vunpack.c.h.b16 %v864
    %v3228 = vunpack.c.l.b16 %v865
    %v3229 = vunpack.c.h.b16 %v865
    %v3230 = vunpack.c.l.b16 %v866
    %v3231 = vunpack.c.h.b16 %v866
    %v3232 = vunpack.c.l.b16 %v867
    %v3233 = vunpack.c.h.b16 %v867
    %v3234 = vunpack.c.l.b16 %v868
    %v3235 = vunpack.c.h.b16 %v868
    %v3236 = vunpack.c.l.b16 %v869
    %v3237 = vunpack.c.h.b16 %v869
    %v3238 = vunpack.c.l.b16 %v870
    %v3239 = vunpack.c.h.b16 %v870
    %v3240 = vunpack.c.l.b16 %v871
    %v3241 = vunpack.c.h.b16 %v871
    %v3242 = vunpack.c.l.b16 %v872
    %v3243 = vunpack.c.h.b16 %v872
    %v3244 = vunpack.c.l.b16 %v873
    %v3245 = vunpack.c.h.b16 %v873
    %v3246 = vunpack.c.l.b16 %v874
    %v3247 = vunpack.c.h.b16 %v874
    %v3248 = vunpack.c.l.b16 %v875
    %v3249 = vunpack.c.h.b16 %v875
    %v3250 = vunpack.c.l.b16 %v876
    %v3251 = vunpack.c.h.b16 %v876
    %v3252 = vunpack.c.l.b16 %v877
    %v3253 = vunpack.c.h.b16 %v877
    %v3254 = vunpack.c.l.b16 %v878
    %v3255 = vunpack.c.h.b16 %v878
    %v3256 = vunpack.c.l.b16 %v879
    %v3257 = vunpack.c.h.b16 %v879
    %v3258 = vunpack.c.l.b16 %v880
    %v3259 = vunpack.c.h.b16 %v880
    %v3260 = vunpack.c.l.b16 %v881
    %v3261 = vunpack.c.h.b16 %v881
    %v3262 = vunpack.c.l.b16 %v882
    %v3263 = vunpack.c.h.b16 %v882
    %v3264 = vunpack.c.l.b16 %v883
    %v3265 = vunpack.c.h.b16 %v883
    %v3266 = vunpack.c.l.b16 %v884
    %v3267 = vunpack.c.h.b16 %v884
    %v3268 = vunpack.c.l.b16 %v885
    %v3269 = vunpack.c.h.b16 %v885
    %v3270 = vunpack.c.l.b16 %v886
    %v3271 = vunpack.c.h.b16 %v886
    %v3272 = vunpack.c.l.b16 %v887
    %v3273 = vunpack.c.h.b16 %v887
    %v3274 = vunpack.c.l.b16 %v888
    %v3275 = vunpack.c.h.b16 %v888
    %v3276 = vunpack.c.l.b16 %v889
    %v3277 = vunpack.c.h.b16 %v889
    %v3278 = vunpack.c.l.b16 %v890
    %v3279 = vunpack.c.h.b16 %v890
    %v3280 = vunpack.c.l.b16 %v891
    %v3281 = vunpack.c.h.b16 %v891
    %v3282 = vunpack.c.l.b16 %v892
    %v3283 = vunpack.c.h.b16 %v892
    %v3284 = vunpack.c.l.b16 %v893
    %v3285 = vunpack.c.h.b16 %v893
    %v3286 = vunpack.c.l.b16 %v894
    %v3287 = vunpack.c.h.b16 %v894
    %v3288 = vunpack.c.l.b16 %v895
    %v3289 = vunpack.c.h.b16 %v895
    %v3290 = vunpack.c.l.b16 %v896
    %v3291 = vunpack.c.h.b16 %v896
    %v3292 = vunpack.c.l.b16 %v897
    %v3293 = vunpack.c.h.b16 %v897
    %v3294 = vunpack.c.l.b16 %v898
    %v3295 = vunpack.c.h.b16 %v898
    %v3296 = vunpack.c.l.b16 %v899
    %v3297 = vunpack.c.h.b16 %v899
    %v3298 = vunpack.c.l.b16 %v900
    %v3299 = vunpack.c.h.b16 %v900
    %v3300 = vunpack.c.l.b16 %v901
    %v3301 = vunpack.c.h.b16 %v901
    %v3302 = vunpack.c.l.b16 %v902
    %v3303 = vunpack.c.h.b16 %v902
    %v3304 = vunpack.c.l.b16 %v903
    %v3305 = vunpack.c.h.b16 %v903
    %v3306 = vunpack.c.l.b16 %v904
    %v3307 = vunpack.c.h.b16 %v904
    %v3308 = vunpack.c.l.b16 %v905
    %v3309 = vunpack.c.h.b16 %v905
    %v3310 = vunpack.c.l.b16 %v906
    %v3311 = vunpack.c.h.b16 %v906
    %v3312 = vunpack.c.l.b16 %v907
    %v3313 = vunpack.c.h.b16 %v907
    %v3314 = vunpack.c.l.b16 %v908
    %v3315 = vunpack.c.h.b16 %v908
    %v3316 = vunpack.c.l.b16 %v909
    %v3317 = vunpack.c.h.b16 %v909
    %v3318 = vunpack.c.l.b16 %v910
    %v3319 = vunpack.c.h.b16 %v910
    %v3320 = vunpack.c.l.b16 %v911
    %v3321 = vunpack.c.h.b16 %v911
    %v3322 = vunpack.c.l.b16 %v912
    %v3323 = vunpack.c.h.b16 %v912
    %v3324 = vunpack.c.l.b16 %v913
    %v3325 = vunpack.c.h.b16 %v913
    %v3326 = vunpack.c.l.b16 %v914
    %v3327 = vunpack.c.h.b16 %v914
    %v3328 = vunpack.c.l.b16 %v915
    %v3329 = vunpack.c.h.b16 %v915
    %v3330 = vunpack.c.l.b16 %v916
    %v3331 = vunpack.c.h.b16 %v916
    %v3332 = vunpack.c.l.b16 %v917
    %v3333 = vunpack.c.h.b16 %v917
    %v3334 = vunpack.c.l.b16 %v918
    %v3335 = vunpack.c.h.b16 %v918
    %v3336 = vunpack.c.l.b16 %v919
    %v3337 = vunpack.c.h.b16 %v919
    %v3338 = vunpack.c.l.b16 %v920
    %v3339 = vunpack.c.h.b16 %v920
    %v3340 = vunpack.c.l.b16 %v921
    %v3341 = vunpack.c.h.b16 %v921
    %v3342 = vunpack.c.l.b16 %v922
    %v3343 = vunpack.c.h.b16 %v922
    %v3344 = vunpack.c.l.b16 %v923
    %v3345 = vunpack.c.h.b16 %v923
    %v3346 = vunpack.c.l.b16 %v924
    %v3347 = vunpack.c.h.b16 %v924
    %v3348 = vunpack.c.l.b16 %v925
    %v3349 = vunpack.c.h.b16 %v925
    %v3350 = vunpack.c.l.b16 %v926
    %v3351 = vunpack.c.h.b16 %v926
    %v3352 = vunpack.c.l.b16 %v927
    %v3353 = vunpack.c.h.b16 %v927
    %v3354 = vunpack.c.l.b16 %v928
    %v3355 = vunpack.c.h.b16 %v928
    %v3356 = vunpack.c.l.b16 %v929
    %v3357 = vunpack.c.h.b16 %v929
    %v3358 = vunpack.c.l.b16 %v930
    %v3359 = vunpack.c.h.b16 %v930
    %v3360 = vunpack.c.l.b16 %v931
    %v3361 = vunpack.c.h.b16 %v931
    %v3362 = vunpack.c.l.b16 %v932
    %v3363 = vunpack.c.h.b16 %v932
    %v3364 = vunpack.c.l.b16 %v933
    %v3365 = vunpack.c.h.b16 %v933
    %v3366 = vunpack.c.l.b16 %v934
    %v3367 = vunpack.c.h.b16 %v934
    %v3368 = vunpack.c.l.b16 %v935
    %v3369 = vunpack.c.h.b16 %v935
    %v3370 = vunpack.c.l.b16 %v936
    %v3371 = vunpack.c.h.b16 %v936
    %v3372 = vunpack.c.l.b16 %v937
    %v3373 = vunpack.c.h.b16 %v937
    %v3374 = vunpack.c.l.b16 %v938
    %v3375 = vunpack.c.h.b16 %v938
    %v3376 = vunpack.c.l.b16 %v939
    %v3377 = vunpack.c.h.b16 %v939
    %v3378 = vunpack.c.l.b16 %v940
    %v3379 = vunpack.c.h.b16 %v940
    %v3380 = vunpack.c.l.b16 %v941
    %v3381 = vunpack.c.h.b16 %v941
    %v3382 = vunpack.c.l.b16 %v942
    %v3383 = vunpack.c.h.b16 %v942
    %v3384 = vunpack.c.l.b16 %v943
    %v3385 = vunpack.c.h.b16 %v943
    %v3386 = vunpack.c.l.b16 %v944
    %v3387 = vunpack.c.h.b16 %v944
    %v3388 = vunpack.c.l.b16 %v945
    %v3389 = vunpack.c.h.b16 %v945
    %v3390 = vunpack.c.l.b16 %v946
    %v3391 = vunpack.c.h.b16 %v946
    %v3392 = vunpack.c.l.b16 %v947
    %v3393 = vunpack.c.h.b16 %v947
    %v3394 = vunpack.c.l.b16 %v948
    %v3395 = vunpack.c.h.b16 %v948
    %v3396 = vunpack.c.l.b16 %v949
    %v3397 = vunpack.c.h.b16 %v949
    %v3398 = vunpack.c.l.b16 %v950
    %v3399 = vunpack.c.h.b16 %v950
    %v3400 = vunpack.c.l.b16 %v951
    %v3401 = vunpack.c.h.b16 %v951
    %v3402 = vunpack.c.l.b16 %v952
    %v3403 = vunpack.c.h.b16 %v952
    %v3404 = vunpack.c.l.b16 %v953
    %v3405 = vunpack.c.h.b16 %v953
    %v3406 = vunpack.c.l.b16 %v954
    %v3407 = vunpack.c.h.b16 %v954
    %v3408 = vunpack.c.l.b16 %v955
    %v3409 = vunpack.c.h.b16 %v955
    %v3410 = vunpack.c.l.b16 %v956
    %v3411 = vunpack.c.h.b16 %v956
    %v3412 = vunpack.c.l.b16 %v957
    %v3413 = vunpack.c.h.b16 %v957
    %v3414 = vunpack.c.l.b16 %v958
    %v3415 = vunpack.c.h.b16 %v958
    %v3416 = vunpack.c.l.b16 %v959
    %v3417 = vunpack.c.h.b16 %v959
    %v3418 = vunpack.c.l.b16 %v960
    %v3419 = vunpack.c.h.b16 %v960
    %v3420 = vunpack.c.l.b16 %v961
    %v3421 = vunpack.c.h.b16 %v961
    %v3422 = vunpack.c.l.b16 %v962
    %v3423 = vunpack.c.h.b16 %v962
    %v3424 = vunpack.c.l.b16 %v963
    %v3425 = vunpack.c.h.b16 %v963
    %v3426 = vunpack.c.l.b16 %v964
    %v3427 = vunpack.c.h.b16 %v964
    %v3428 = vunpack.c.l.b16 %v965
    %v3429 = vunpack.c.h.b16 %v965
    %v3430 = vunpack.c.l.b16 %v966
    %v3431 = vunpack.c.h.b16 %v966
    %v3432 = vunpack.c.l.b16 %v967
    %v3433 = vunpack.c.h.b16 %v967
    %v3434 = vunpack.c.l.b16 %v968
    %v3435 = vunpack.c.h.b16 %v968
    %v3436 = vunpack.c.l.b16 %v969
    %v3437 = vunpack.c.h.b16 %v969
    %v3438 = vunpack.c.l.b16 %v970
    %v3439 = vunpack.c.h.b16 %v970
    %v3440 = vunpack.c.l.b16 %v971
    %v3441 = vunpack.c.h.b16 %v971
    %v3442 = vunpack.c.l.b16 %v972
    %v3443 = vunpack.c.h.b16 %v972
    %v3444 = vunpack.c.l.b16 %v973
    %v3445 = vunpack.c.h.b16 %v973
    %v3446 = vunpack.c.l.b16 %v974
    %v3447 = vunpack.c.h.b16 %v974
    %v3448 = vunpack.c.l.b16 %v975
    %v3449 = vunpack.c.h.b16 %v975
    %v3450 = vunpack.c.l.b16 %v976
    %v3451 = vunpack.c.h.b16 %v976
    %v3452 = vunpack.c.l.b16 %v977
    %v3453 = vunpack.c.h.b16 %v977
    %v3454 = vunpack.c.l.b16 %v978
    %v3455 = vunpack.c.h.b16 %v978
    %v3456 = vunpack.c.l.b16 %v979
    %v3457 = vunpack.c.h.b16 %v979
    %v3458 = vunpack.c.l.b16 %v980
    %v3459 = vunpack.c.h.b16 %v980
    %v3460 = vunpack.c.l.b16 %v981
    %v3461 = vunpack.c.h.b16 %v981
    %v3462 = vunpack.c.l.b16 %v982
    %v3463 = vunpack.c.h.b16 %v982
    %v3464 = vunpack.c.l.b16 %v983
    %v3465 = vunpack.c.h.b16 %v983
    %v3466 = vunpack.c.l.b16 %v984
    %v3467 = vunpack.c.h.b16 %v984
    %v3468 = vunpack.c.l.b16 %v985
    %v3469 = vunpack.c.h.b16 %v985
    %v3470 = vunpack.c.l.b16 %v986
    %v3471 = vunpack.c.h.b16 %v986
    %v3472 = vunpack.c.l.b16 %v987
    %v3473 = vunpack.c.h.b16 %v987
    %v3474 = vunpack.c.l.b16 %v988
    %v3475 = vunpack.c.h.b16 %v988
    %v3476 = vunpack.c.l.b16 %v989
    %v3477 = vunpack.c.h.b16 %v989
    %v3478 = vunpack.c.l.b16 %v990
    %v3479 = vunpack.c.h.b16 %v990
    %v3480 = vunpack.c.l.b16 %v991
    %v3481 = vunpack.c.h.b16 %v991
    %v3482 = vpack.c.b16 %v1858, %v1850
    %v3483 = vpack.c.b16 %v1859, %v1851
    %v3484 = vpack.c.b16 %v1860, %v1852
    %v3485 = vpack.c.b16 %v1861, %v1853
    %v3486 = vpack.c.b16 %v1862, %v1854
    %v3487 = vpack.c.b16 %v1863, %v1855
    %v3488 = vpack.c.b16 %v1864, %v1856
    %v3489 = vpack.c.b16 %v1865, %v1857
    %v3490 = vpack.c.b16 %v1874, %v1866
    %v3491 = vpack.c.b16 %v1875, %v1867
    %v3492 = vpack.c.b16 %v1876, %v1868
    %v3493 = vpack.c.b16 %v1877, %v1869
    %v3494 = vpack.c.b16 %v1878, %v1870
    %v3495 = vpack.c.b16 %v1879, %v1871
    %v3496 = vpack.c.b16 %v1880, %v1872
    %v3497 = vpack.c.b16 %v1881, %v1873
    %v3498 = vpack.c.b16 %v1890, %v1882
    %v3499 = vpack.c.b16 %v1891, %v1883
    %v3500 = vpack.c.b16 %v1892, %v1884
    %v3501 = vpack.c.b16 %v1893, %v1885
    %v3502 = vpack.c.b16 %v1894, %v1886
    %v3503 = vpack.c.b16 %v1895, %v1887
    %v3504 = vpack.c.b16 %v1896, %v1888
    %v3505 = vpack.c.b16 %v1897, %v1889
    %v3506 = vpack.c.b16 %v1906, %v1898
    %v3507 = vpack.c.b16 %v1907, %v1899
    %v3508 = vpack.c.b16 %v1908, %v1900
    %v3509 = vpack.c.b16 %v1909, %v1901
    %v3510 = vpack.c.b16 %v1910, %v1902
    %v3511 = vpack.c.b16 %v1911, %v1903
    %v3512 = vpack.c.b16 %v1912, %v1904
    %v3513 = vpack.c.b16 %v1913, %v1905
    %v3514 = vpack.c.b16 %v1922, %v1914
    %v3515 = vpack.c.b16 %v1923, %v1915
    %v3516 = vpack.c.b16 %v1924, %v1916
    %v3517 = vpack.c.b16 %v1925, %v1917
    %v3518 = vpack.c.b16 %v1926, %v1918
    %v3519 = vpack.c.b16 %v1927, %v1919
    %v3520 = vpack.c.b16 %v1928, %v1920
    %v3521 = vpack.c.b16 %v1929, %v1921
    %v3522 = vpack.c.b16 %v1938, %v1930
    %v3523 = vpack.c.b16 %v1939, %v1931
    %v3524 = vpack.c.b16 %v1940, %v1932
    %v3525 = vpack.c.b16 %v1941, %v1933
    %v3526 = vpack.c.b16 %v1942, %v1934
    %v3527 = vpack.c.b16 %v1943, %v1935
    %v3528 = vpack.c.b16 %v1944, %v1936
    %v3529 = vpack.c.b16 %v1945, %v1937
    %v3530 = vpack.c.b16 %v1954, %v1946
    %v3531 = vpack.c.b16 %v1955, %v1947
    %v3532 = vpack.c.b16 %v1956, %v1948
    %v3533 = vpack.c.b16 %v1957, %v1949
    %v3534 = vpack.c.b16 %v1958, %v1950
    %v3535 = vpack.c.b16 %v1959, %v1951
    %v3536 = vpack.c.b16 %v1960, %v1952
    %v3537 = vpack.c.b16 %v1961, %v1953
    %v3538 = vpack.c.b16 %v1970, %v1962
    %v3539 = vpack.c.b16 %v1971, %v1963
    %v3540 = vpack.c.b16 %v1972, %v1964
    %v3541 = vpack.c.b16 %v1973, %v1965
    %v3542 = vpack.c.b16 %v1974, %v1966
    %v3543 = vpack.c.b16 %v1975, %v1967
    %v3544 = vpack.c.b16 %v1976, %v1968
    %v3545 = vpack.c.b16 %v1977, %v1969
    %v3546 = vpack.c.b16 %v1986, %v1978
    %v3547 = vpack.c.b16 %v1987, %v1979
    %v3548 = vpack.c.b16 %v1988, %v1980
    %v3549 = vpack.c.b16 %v1989, %v1981
    %v3550 = vpack.c.b16 %v1990, %v1982
    %v3551 = vpack.c.b16 %v1991, %v1983
    %v3552 = vpack.c.b16 %v1992, %v1984
    %v3553 = vpack.c.b16 %v1993, %v1985
    %v3554 = vpack.c.b16 %v2002, %v1994
    %v3555 = vpack.c.b16 %v2003, %v1995
    %v3556 = vpack.c.b16 %v2004, %v1996
    %v3557 = vpack.c.b16 %v2005, %v1997
    %v3558 = vpack.c.b16 %v2006, %v1998
    %v3559 = vpack.c.b16 %v2007, %v1999
    %v3560 = vpack.c.b16 %v2008, %v2000
    %v3561 = vpack.c.b16 %v2009, %v2001
    %v3562 = vpack.c.b16 %v2018, %v2010
    %v3563 = vpack.c.b16 %v2019, %v2011
    %v3564 = vpack.c.b16 %v2020, %v2012
    %v3565 = vpack.c.b16 %v2021, %v2013
    %v3566 = vpack.c.b16 %v2022, %v2014
    %v3567 = vpack.c.b16 %v2023, %v2015
    %v3568 = vpack.c.b16 %v2024, %v2016
    %v3569 = vpack.c.b16 %v2025, %v2017
    %v3570 = vpack.c.b16 %v2034, %v2026
    %v3571 = vpack.c.b16 %v2035, %v2027
    %v3572 = vpack.c.b16 %v2036, %v2028
    %v3573 = vpack.c.b16 %v2037, %v2029
    %v3574 = vpack.c.b16 %v2038, %v2030
    %v3575 = vpack.c.b16 %v2039, %v2031
    %v3576 = vpack.c.b16 %v2040, %v2032
    %v3577 = vpack.c.b16 %v2041, %v2033
    %v3578 = vpack.c.b16 %v2050, %v2042
    %v3579 = vpack.c.b16 %v2051, %v2043
    %v3580 = vpack.c.b16 %v2052, %v2044
    %v3581 = vpack.c.b16 %v2053, %v2045
    %v3582 = vpack.c.b16 %v2054, %v2046
    %v3583 = vpack.c.b16 %v2055, %v2047
    %v3584 = vpack.c.b16 %v2056, %v2048
    %v3585 = vpack.c.b16 %v2057, %v2049
    %v3586 = vpack.c.b16 %v2066, %v2058
    %v3587 = vpack.c.b16 %v2067, %v2059
    %v3588 = vpack.c.b16 %v2068, %v2060
    %v3589 = vpack.c.b16 %v2069, %v2061
    %v3590 = vpack.c.b16 %v2070, %v2062
    %v3591 = vpack.c.b16 %v2071, %v2063
    %v3592 = vpack.c.b16 %v2072, %v2064
    %v3593 = vpack.c.b16 %v2073, %v2065
    %v3594 = vpack.c.b16 %v2082, %v2074
    %v3595 = vpack.c.b16 %v2083, %v2075
    %v3596 = vpack.c.b16 %v2084, %v2076
    %v3597 = vpack.c.b16 %v2085, %v2077
    %v3598 = vpack.c.b16 %v2086, %v2078
    %v3599 = vpack.c.b16 %v2087, %v2079
    %v3600 = vpack.c.b16 %v2088, %v2080
    %v3601 = vpack.c.b16 %v2089, %v2081
    %v3602 = vpack.c.b16 %v2098, %v2090
    %v3603 = vpack.c.b16 %v2099, %v2091
    %v3604 = vpack.c.b16 %v2100, %v2092
    %v3605 = vpack.c.b16 %v2101, %v2093
    %v3606 = vpack.c.b16 %v2102, %v2094
    %v3607 = vpack.c.b16 %v2103, %v2095
    %v3608 = vpack.c.b16 %v2104, %v2096
    %v3609 = vpack.c.b16 %v2105, %v2097
    %v3610 = vpack.c.b16 %v2114, %v2106
    %v3611 = vpack.c.b16 %v2115, %v2107
    %v3612 = vpack.c.b16 %v2116, %v2108
    %v3613 = vpack.c.b16 %v2117, %v2109
    %v3614 = vpack.c.b16 %v2118, %v2110
    %v3615 = vpack.c.b16 %v2119, %v2111
    %v3616 = vpack.c.b16 %v2120, %v2112
    %v3617 = vpack.c.b16 %v2121, %v2113
    %v3618 = vpack.c.b16 %v2130, %v2122
    %v3619 = vpack.c.b16 %v2131, %v2123
    %v3620 = vpack.c.b16 %v2132, %v2124
    %v3621 = vpack.c.b16 %v2133, %v2125
    %v3622 = vpack.c.b16 %v2134, %v2126
    %v3623 = vpack.c.b16 %v2135, %v2127
    %v3624 = vpack.c.b16 %v2136, %v2128
    %v3625 = vpack.c.b16 %v2137, %v2129
    %v3626 = vpack.c.b16 %v2146, %v2138
    %v3627 = vpack.c.b16 %v2147, %v2139
    %v3628 = vpack.c.b16 %v2148, %v2140
    %v3629 = vpack.c.b16 %v2149, %v2141
    %v3630 = vpack.c.b16 %v2150, %v2142
    %v3631 = vpack.c.b16 %v2151, %v2143
    %v3632 = vpack.c.b16 %v2152, %v2144
    %v3633 = vpack.c.b16 %v2153, %v2145
    %v3634 = vpack.c.b16 %v2162, %v2154
    %v3635 = vpack.c.b16 %v2163, %v2155
    %v3636 = vpack.c.b16 %v2164, %v2156
    %v3637 = vpack.c.b16 %v2165, %v2157
    %v3638 = vpack.c.b16 %v2166, %v2158
    %v3639 = vpack.c.b16 %v2167, %v2159
    %v3640 = vpack.c.b16 %v2168, %v2160
    %v3641 = vpack.c.b16 %v2169, %v2161
    %v3642 = vpack.c.b16 %v2178, %v2170
    %v3643 = vpack.c.b16 %v2179, %v2171
    %v3644 = vpack.c.b16 %v2180, %v2172
    %v3645 = vpack.c.b16 %v2181, %v2173
    %v3646 = vpack.c.b16 %v2182, %v2174
    %v3647 = vpack.c.b16 %v2183, %v2175
    %v3648 = vpack.c.b16 %v2184, %v2176
    %v3649 = vpack.c.b16 %v2185, %v2177
    %v3650 = vpack.c.b16 %v2194, %v2186
    %v3651 = vpack.c.b16 %v2195, %v2187
    %v3652 = vpack.c.b16 %v2196, %v2188
    %v3653 = vpack.c.b16 %v2197, %v2189
    %v3654 = vpack.c.b16 %v2198, %v2190
    %v3655 = vpack.c.b16 %v2199, %v2191
    %v3656 = vpack.c.b16 %v2200, %v2192
    %v3657 = vpack.c.b16 %v2201, %v2193
    %v3658 = vpack.c.b16 %v2210, %v2202
    %v3659 = vpack.c.b16 %v2211, %v2203
    %v3660 = vpack.c.b16 %v2212, %v2204
    %v3661 = vpack.c.b16 %v2213, %v2205
    %v3662 = vpack.c.b16 %v2214, %v2206
    %v3663 = vpack.c.b16 %v2215, %v2207
    %v3664 = vpack.c.b16 %v2216, %v2208
    %v3665 = vpack.c.b16 %v2217, %v2209
    %v3666 = vpack.c.b16 %v2226, %v2218
    %v3667 = vpack.c.b16 %v2227, %v2219
    %v3668 = vpack.c.b16 %v2228, %v2220
    %v3669 = vpack.c.b16 %v2229, %v2221
    %v3670 = vpack.c.b16 %v2230, %v2222
    %v3671 = vpack.c.b16 %v2231, %v2223
    %v3672 = vpack.c.b16 %v2232, %v2224
    %v3673 = vpack.c.b16 %v2233, %v2225
    %v3674 = vpack.c.b16 %v2242, %v2234
    %v3675 = vpack.c.b16 %v2243, %v2235
    %v3676 = vpack.c.b16 %v2244, %v2236
    %v3677 = vpack.c.b16 %v2245, %v2237
    %v3678 = vpack.c.b16 %v2246, %v2238
    %v3679 = vpack.c.b16 %v2247, %v2239
    %v3680 = vpack.c.b16 %v2248, %v2240
    %v3681 = vpack.c.b16 %v2249, %v2241
    %v3682 = vpack.c.b16 %v2258, %v2250
    %v3683 = vpack.c.b16 %v2259, %v2251
    %v3684 = vpack.c.b16 %v2260, %v2252
    %v3685 = vpack.c.b16 %v2261, %v2253
    %v3686 = vpack.c.b16 %v2262, %v2254
    %v3687 = vpack.c.b16 %v2263, %v2255
    %v3688 = vpack.c.b16 %v2264, %v2256
    %v3689 = vpack.c.b16 %v2265, %v2257
    %v3690 = vpack.c.b16 %v2274, %v2266
    %v3691 = vpack.c.b16 %v2275, %v2267
    %v3692 = vpack.c.b16 %v2276, %v2268
    %v3693 = vpack.c.b16 %v2277, %v2269
    %v3694 = vpack.c.b16 %v2278, %v2270
    %v3695 = vpack.c.b16 %v2279, %v2271
    %v3696 = vpack.c.b16 %v2280, %v2272
    %v3697 = vpack.c.b16 %v2281, %v2273
    %v3698 = vpack.c.b16 %v2290, %v2282
    %v3699 = vpack.c.b16 %v2291, %v2283
    %v3700 = vpack.c.b16 %v2292, %v2284
    %v3701 = vpack.c.b16 %v2293, %v2285
    %v3702 = vpack.c.b16 %v2294, %v2286
    %v3703 = vpack.c.b16 %v2295, %v2287
    %v3704 = vpack.c.b16 %v2296, %v2288
    %v3705 = vpack.c.b16 %v2297, %v2289
    %v3706 = vpack.c.b16 %v2306, %v2298
    %v3707 = vpack.c.b16 %v2307, %v2299
    %v3708 = vpack.c.b16 %v2308, %v2300
    %v3709 = vpack.c.b16 %v2309, %v2301
    %v3710 = vpack.c.b16 %v2310, %v2302
    %v3711 = vpack.c.b16 %v2311, %v2303
    %v3712 = vpack.c.b16 %v2312, %v2304
    %v3713 = vpack.c.b16 %v2313, %v2305
    %v3714 = vpack.c.b16 %v2322, %v2314
    %v3715 = vpack.c.b16 %v2323, %v2315
    %v3716 = vpack.c.b16 %v2324, %v2316
    %v3717 = vpack.c.b16 %v2325, %v2317
    %v3718 = vpack.c.b16 %v2326, %v2318
    %v3719 = vpack.c.b16 %v2327, %v2319
    %v3720 = vpack.c.b16 %v2328, %v2320
    %v3721 = vpack.c.b16 %v2329, %v2321
    %v3722 = vpack.c.b16 %v2338, %v2330
    %v3723 = vpack.c.b16 %v2339, %v2331
    %v3724 = vpack.c.b16 %v2340, %v2332
    %v3725 = vpack.c.b16 %v2341, %v2333
    %v3726 = vpack.c.b16 %v2342, %v2334
    %v3727 = vpack.c.b16 %v2343, %v2335
    %v3728 = vpack.c.b16 %v2344, %v2336
    %v3729 = vpack.c.b16 %v2345, %v2337
    %v3730 = vpack.c.b16 %v2354, %v2346
    %v3731 = vpack.c.b16 %v2355, %v2347
    %v3732 = vpack.c.b16 %v2356, %v2348
    %v3733 = vpack.c.b16 %v2357, %v2349
    %v3734 = vpack.c.b16 %v2358, %v2350
    %v3735 = vpack.c.b16 %v2359, %v2351
    %v3736 = vpack.c.b16 %v2360, %v2352
    %v3737 = vpack.c.b16 %v2361, %v2353
    %v3738 = vpack.c.b16 %v2370, %v2362
    %v3739 = vpack.c.b16 %v2371, %v2363
    %v3740 = vpack.c.b16 %v2372, %v2364
    %v3741 = vpack.c.b16 %v2373, %v2365
    %v3742 = vpack.c.b16 %v2374, %v2366
    %v3743 = vpack.c.b16 %v2375, %v2367
    %v3744 = vpack.c.b16 %v2376, %v2368
    %v3745 = vpack.c.b16 %v2377, %v2369
    %v3746 = vpack.c.b16 %v2386, %v2378
    %v3747 = vpack.c.b16 %v2387, %v2379
    %v3748 = vpack.c.b16 %v2388, %v2380
    %v3749 = vpack.c.b16 %v2389, %v2381
    %v3750 = vpack.c.b16 %v2390, %v2382
    %v3751 = vpack.c.b16 %v2391, %v2383
    %v3752 = vpack.c.b16 %v2392, %v2384
    %v3753 = vpack.c.b16 %v2393, %v2385
    %v3754 = vpack.c.b16 %v2402, %v2394
    %v3755 = vpack.c.b16 %v2403, %v2395
    %v3756 = vpack.c.b16 %v2404, %v2396
    %v3757 = vpack.c.b16 %v2405, %v2397
    %v3758 = vpack.c.b16 %v2406, %v2398
    %v3759 = vpack.c.b16 %v2407, %v2399
    %v3760 = vpack.c.b16 %v2408, %v2400
    %v3761 = vpack.c.b16 %v2409, %v2401
    %v3762 = vpack.c.b16 %v2418, %v2410
    %v3763 = vpack.c.b16 %v2419, %v2411
    %v3764 = vpack.c.b16 %v2420, %v2412
    %v3765 = vpack.c.b16 %v2421, %v2413
    %v3766 = vpack.c.b16 %v2422, %v2414
    %v3767 = vpack.c.b16 %v2423, %v2415
    %v3768 = vpack.c.b16 %v2424, %v2416
    %v3769 = vpack.c.b16 %v2425, %v2417
    %v3770 = vpack.c.b16 %v2434, %v2426
    %v3771 = vpack.c.b16 %v2435, %v2427
    %v3772 = vpack.c.b16 %v2436, %v2428
    %v3773 = vpack.c.b16 %v2437, %v2429
    %v3774 = vpack.c.b16 %v2438, %v2430
    %v3775 = vpack.c.b16 %v2439, %v2431
    %v3776 = vpack.c.b16 %v2440, %v2432
    %v3777 = vpack.c.b16 %v2441, %v2433
    %v3778 = vpack.c.b16 %v2450, %v2442
    %v3779 = vpack.c.b16 %v2451, %v2443
    %v3780 = vpack.c.b16 %v2452, %v2444
    %v3781 = vpack.c.b16 %v2453, %v2445
    %v3782 = vpack.c.b16 %v2454, %v2446
    %v3783 = vpack.c.b16 %v2455, %v2447
    %v3784 = vpack.c.b16 %v2456, %v2448
    %v3785 = vpack.c.b16 %v2457, %v2449
    %v3786 = vpack.c.b16 %v2466, %v2458
    %v3787 = vpack.c.b16 %v2467, %v2459
    %v3788 = vpack.c.b16 %v2468, %v2460
    %v3789 = vpack.c.b16 %v2469, %v2461
    %v3790 = vpack.c.b16 %v2470, %v2462
    %v3791 = vpack.c.b16 %v2471, %v2463
    %v3792 = vpack.c.b16 %v2472, %v2464
    %v3793 = vpack.c.b16 %v2473, %v2465
    %v3794 = vpack.c.b16 %v2482, %v2474
    %v3795 = vpack.c.b16 %v2483, %v2475
    %v3796 = vpack.c.b16 %v2484, %v2476
    %v3797 = vpack.c.b16 %v2485, %v2477
    %v3798 = vpack.c.b16 %v2486, %v2478
    %v3799 = vpack.c.b16 %v2487, %v2479
    %v3800 = vpack.c.b16 %v2488, %v2480
    %v3801 = vpack.c.b16 %v2489, %v2481
    %v3802 = vpack.c.b16 %v2498, %v2490
    %v3803 = vpack.c.b16 %v2499, %v2491
    %v3804 = vpack.c.b16 %v2500, %v2492
    %v3805 = vpack.c.b16 %v2501, %v2493
    %v3806 = vpack.c.b16 %v2502, %v2494
    %v3807 = vpack.c.b16 %v2503, %v2495
    %v3808 = vpack.c.b16 %v2504, %v2496
    %v3809 = vpack.c.b16 %v2505, %v2497
    %v3810 = vpack.c.b16 %v2514, %v2506
    %v3811 = vpack.c.b16 %v2515, %v2507
    %v3812 = vpack.c.b16 %v2516, %v2508
    %v3813 = vpack.c.b16 %v2517, %v2509
    %v3814 = vpack.c.b16 %v2518, %v2510
    %v3815 = vpack.c.b16 %v2519, %v2511
    %v3816 = vpack.c.b16 %v2520, %v2512
    %v3817 = vpack.c.b16 %v2521, %v2513
    %v3818 = vpack.c.b16 %v2530, %v2522
    %v3819 = vpack.c.b16 %v2531, %v2523
    %v3820 = vpack.c.b16 %v2532, %v2524
    %v3821 = vpack.c.b16 %v2533, %v2525
    %v3822 = vpack.c.b16 %v2534, %v2526
    %v3823 = vpack.c.b16 %v2535, %v2527
    %v3824 = vpack.c.b16 %v2536, %v2528
    %v3825 = vpack.c.b16 %v2537, %v2529
    %v3826 = vpack.c.b16 %v2546, %v2538
    %v3827 = vpack.c.b16 %v2547, %v2539
    %v3828 = vpack.c.b16 %v2548, %v2540
    %v3829 = vpack.c.b16 %v2549, %v2541
    %v3830 = vpack.c.b16 %v2550, %v2542
    %v3831 = vpack.c.b16 %v2551, %v2543
    %v3832 = vpack.c.b16 %v2552, %v2544
    %v3833 = vpack.c.b16 %v2553, %v2545
    %v3834 = vpack.c.b16 %v2562, %v2554
    %v3835 = vpack.c.b16 %v2563, %v2555
    %v3836 = vpack.c.b16 %v2564, %v2556
    %v3837 = vpack.c.b16 %v2565, %v2557
    %v3838 = vpack.c.b16 %v2566, %v2558
    %v3839 = vpack.c.b16 %v2567, %v2559
    %v3840 = vpack.c.b16 %v2568, %v2560
    %v3841 = vpack.c.b16 %v2569, %v2561
    %v3842 = vpack.c.b16 %v2578, %v2570
    %v3843 = vpack.c.b16 %v2579, %v2571
    %v3844 = vpack.c.b16 %v2580, %v2572
    %v3845 = vpack.c.b16 %v2581, %v2573
    %v3846 = vpack.c.b16 %v2582, %v2574
    %v3847 = vpack.c.b16 %v2583, %v2575
    %v3848 = vpack.c.b16 %v2584, %v2576
    %v3849 = vpack.c.b16 %v2585, %v2577
    %v3850 = vpack.c.b16 %v2594, %v2586
    %v3851 = vpack.c.b16 %v2595, %v2587
    %v3852 = vpack.c.b16 %v2596, %v2588
    %v3853 = vpack.c.b16 %v2597, %v2589
    %v3854 = vpack.c.b16 %v2598, %v2590
    %v3855 = vpack.c.b16 %v2599, %v2591
    %v3856 = vpack.c.b16 %v2600, %v2592
    %v3857 = vpack.c.b16 %v2601, %v2593
    %v3858 = vpack.c.b16 %v2610, %v2602
    %v3859 = vpack.c.b16 %v2611, %v2603
    %v3860 = vpack.c.b16 %v2612, %v2604
    %v3861 = vpack.c.b16 %v2613, %v2605
    %v3862 = vpack.c.b16 %v2614, %v2606
    %v3863 = vpack.c.b16 %v2615, %v2607
    %v3864 = vpack.c.b16 %v2616, %v2608
    %v3865 = vpack.c.b16 %v2617, %v2609
    %v3866 = vpack.c.b16 %v2626, %v2618
    %v3867 = vpack.c.b16 %v2627, %v2619
    %v3868 = vpack.c.b16 %v2628, %v2620
    %v3869 = vpack.c.b16 %v2629, %v2621
    %v3870 = vpack.c.b16 %v2630, %v2622
    %v3871 = vpack.c.b16 %v2631, %v2623
    %v3872 = vpack.c.b16 %v2632, %v2624
    %v3873 = vpack.c.b16 %v2633, %v2625
    %v3874 = vpack.c.b16 %v2642, %v2634
    %v3875 = vpack.c.b16 %v2643, %v2635
    %v3876 = vpack.c.b16 %v2644, %v2636
    %v3877 = vpack.c.b16 %v2645, %v2637
    %v3878 = vpack.c.b16 %v2646, %v2638
    %v3879 = vpack.c.b16 %v2647, %v2639
    %v3880 = vpack.c.b16 %v2648, %v2640
    %v3881 = vpack.c.b16 %v2649, %v2641
    %v3882 = vpack.c.b16 %v2658, %v2650
    %v3883 = vpack.c.b16 %v2659, %v2651
    %v3884 = vpack.c.b16 %v2660, %v2652
    %v3885 = vpack.c.b16 %v2661, %v2653
    %v3886 = vpack.c.b16 %v2662, %v2654
    %v3887 = vpack.c.b16 %v2663, %v2655
    %v3888 = vpack.c.b16 %v2664, %v2656
    %v3889 = vpack.c.b16 %v2665, %v2657
    %v3890 = vpack.c.b16 %v2674, %v2666
    %v3891 = vpack.c.b16 %v2675, %v2667
    %v3892 = vpack.c.b16 %v2676, %v2668
    %v3893 = vpack.c.b16 %v2677, %v2669
    %v3894 = vpack.c.b16 %v2678, %v2670
    %v3895 = vpack.c.b16 %v2679, %v2671
    %v3896 = vpack.c.b16 %v2680, %v2672
    %v3897 = vpack.c.b16 %v2681, %v2673
    %v3898 = vpack.c.b16 %v2690, %v2682
    %v3899 = vpack.c.b16 %v2691, %v2683
    %v3900 = vpack.c.b16 %v2692, %v2684
    %v3901 = vpack.c.b16 %v2693, %v2685
    %v3902 = vpack.c.b16 %v2694, %v2686
    %v3903 = vpack.c.b16 %v2695, %v2687
    %v3904 = vpack.c.b16 %v2696, %v2688
    %v3905 = vpack.c.b16 %v2697, %v2689
    %v3906 = vpack.c.b16 %v2706, %v2698
    %v3907 = vpack.c.b16 %v2707, %v2699
    %v3908 = vpack.c.b16 %v2708, %v2700
    %v3909 = vpack.c.b16 %v2709, %v2701
    %v3910 = vpack.c.b16 %v2710, %v2702
    %v3911 = vpack.c.b16 %v2711, %v2703
    %v3912 = vpack.c.b16 %v2712, %v2704
    %v3913 = vpack.c.b16 %v2713, %v2705
    %v3914 = vpack.c.b16 %v2722, %v2714
    %v3915 = vpack.c.b16 %v2723, %v2715
    %v3916 = vpack.c.b16 %v2724, %v2716
    %v3917 = vpack.c.b16 %v2725, %v2717
    %v3918 = vpack.c.b16 %v2726, %v2718
    %v3919 = vpack.c.b16 %v2727, %v2719
    %v3920 = vpack.c.b16 %v2728, %v2720
    %v3921 = vpack.c.b16 %v2729, %v2721
    %v3922 = vpack.c.b16 %v2738, %v2730
    %v3923 = vpack.c.b16 %v2739, %v2731
    %v3924 = vpack.c.b16 %v2740, %v2732
    %v3925 = vpack.c.b16 %v2741, %v2733
    %v3926 = vpack.c.b16 %v2742, %v2734
    %v3927 = vpack.c.b16 %v2743, %v2735
    %v3928 = vpack.c.b16 %v2744, %v2736
    %v3929 = vpack.c.b16 %v2745, %v2737
    %v3930 = vpack.c.b16 %v2754, %v2746
    %v3931 = vpack.c.b16 %v2755, %v2747
    %v3932 = vpack.c.b16 %v2756, %v2748
    %v3933 = vpack.c.b16 %v2757, %v2749
    %v3934 = vpack.c.b16 %v2758, %v2750
    %v3935 = vpack.c.b16 %v2759, %v2751
    %v3936 = vpack.c.b16 %v2760, %v2752
    %v3937 = vpack.c.b16 %v2761, %v2753
    %v3938 = vpack.c.b16 %v2770, %v2762
    %v3939 = vpack.c.b16 %v2771, %v2763
    %v3940 = vpack.c.b16 %v2772, %v2764
    %v3941 = vpack.c.b16 %v2773, %v2765
    %v3942 = vpack.c.b16 %v2774, %v2766
    %v3943 = vpack.c.b16 %v2775, %v2767
    %v3944 = vpack.c.b16 %v2776, %v2768
    %v3945 = vpack.c.b16 %v2777, %v2769
    %v3946 = vpack.c.b16 %v2786, %v2778
    %v3947 = vpack.c.b16 %v2787, %v2779
    %v3948 = vpack.c.b16 %v2788, %v2780
    %v3949 = vpack.c.b16 %v2789, %v2781
    %v3950 = vpack.c.b16 %v2790, %v2782
    %v3951 = vpack.c.b16 %v2791, %v2783
    %v3952 = vpack.c.b16 %v2792, %v2784
    %v3953 = vpack.c.b16 %v2793, %v2785
    %v3954 = vpack.c.b16 %v2802, %v2794
    %v3955 = vpack.c.b16 %v2803, %v2795
    %v3956 = vpack.c.b16 %v2804, %v2796
    %v3957 = vpack.c.b16 %v2805, %v2797
    %v3958 = vpack.c.b16 %v2806, %v2798
    %v3959 = vpack.c.b16 %v2807, %v2799
    %v3960 = vpack.c.b16 %v2808, %v2800
    %v3961 = vpack.c.b16 %v2809, %v2801
    %v3962 = vpack.c.b16 %v2818, %v2810
    %v3963 = vpack.c.b16 %v2819, %v2811
    %v3964 = vpack.c.b16 %v2820, %v2812
    %v3965 = vpack.c.b16 %v2821, %v2813
    %v3966 = vpack.c.b16 %v2822, %v2814
    %v3967 = vpack.c.b16 %v2823, %v2815
    %v3968 = vpack.c.b16 %v2824, %v2816
    %v3969 = vpack.c.b16 %v2825, %v2817
    %v3970 = vpack.c.b16 %v2834, %v2826
    %v3971 = vpack.c.b16 %v2835, %v2827
    %v3972 = vpack.c.b16 %v2836, %v2828
    %v3973 = vpack.c.b16 %v2837, %v2829
    %v3974 = vpack.c.b16 %v2838, %v2830
    %v3975 = vpack.c.b16 %v2839, %v2831
    %v3976 = vpack.c.b16 %v2840, %v2832
    %v3977 = vpack.c.b16 %v2841, %v2833
    %v3978 = vpack.c.b16 %v2850, %v2842
    %v3979 = vpack.c.b16 %v2851, %v2843
    %v3980 = vpack.c.b16 %v2852, %v2844
    %v3981 = vpack.c.b16 %v2853, %v2845
    %v3982 = vpack.c.b16 %v2854, %v2846
    %v3983 = vpack.c.b16 %v2855, %v2847
    %v3984 = vpack.c.b16 %v2856, %v2848
    %v3985 = vpack.c.b16 %v2857, %v2849
    %v3986 = vpack.c.b16 %v2866, %v2858
    %v3987 = vpack.c.b16 %v2867, %v2859
    %v3988 = vpack.c.b16 %v2868, %v2860
    %v3989 = vpack.c.b16 %v2869, %v2861
    %v3990 = vpack.c.b16 %v2870, %v2862
    %v3991 = vpack.c.b16 %v2871, %v2863
    %v3992 = vpack.c.b16 %v2872, %v2864
    %v3993 = vpack.c.b16 %v2873, %v2865
    %v3994 = vpack.c.b16 %v2882, %v2874
    %v3995 = vpack.c.b16 %v2883, %v2875
    %v3996 = vpack.c.b16 %v2884, %v2876
    %v3997 = vpack.c.b16 %v2885, %v2877
    %v3998 = vpack.c.b16 %v2886, %v2878
    %v3999 = vpack.c.b16 %v2887, %v2879
    %v4000 = vpack.c.b16 %v2888, %v2880
    %v4001 = vpack.c.b16 %v2889, %v2881
    %v4002 = vpack.c.b16 %v2898, %v2890
    %v4003 = vpack.c.b16 %v2899, %v2891
    %v4004 = vpack.c.b16 %v2900, %v2892
    %v4005 = vpack.c.b16 %v2901, %v2893
    %v4006 = vpack.c.b16 %v2902, %v2894
    %v4007 = vpack.c.b16 %v2903, %v2895
    %v4008 = vpack.c.b16 %v2904, %v2896
    %v4009 = vpack.c.b16 %v2905, %v2897
    %v4010 = vpack.c.b16 %v2914, %v2906
    %v4011 = vpack.c.b16 %v2915, %v2907
    %v4012 = vpack.c.b16 %v2916, %v2908
    %v4013 = vpack.c.b16 %v2917, %v2909
    %v4014 = vpack.c.b16 %v2918, %v2910
    %v4015 = vpack.c.b16 %v2919, %v2911
    %v4016 = vpack.c.b16 %v2920, %v2912
    %v4017 = vpack.c.b16 %v2921, %v2913
    %v4018 = vpack.c.b16 %v2930, %v2922
    %v4019 = vpack.c.b16 %v2931, %v2923
    %v4020 = vpack.c.b16 %v2932, %v2924
    %v4021 = vpack.c.b16 %v2933, %v2925
    %v4022 = vpack.c.b16 %v2934, %v2926
    %v4023 = vpack.c.b16 %v2935, %v2927
    %v4024 = vpack.c.b16 %v2936, %v2928
    %v4025 = vpack.c.b16 %v2937, %v2929
    %v4026 = vpack.c.b16 %v2946, %v2938
    %v4027 = vpack.c.b16 %v2947, %v2939
    %v4028 = vpack.c.b16 %v2948, %v2940
    %v4029 = vpack.c.b16 %v2949, %v2941
    %v4030 = vpack.c.b16 %v2950, %v2942
    %v4031 = vpack.c.b16 %v2951, %v2943
    %v4032 = vpack.c.b16 %v2952, %v2944
    %v4033 = vpack.c.b16 %v2953, %v2945
    %v4034 = vpack.c.b16 %v2962, %v2954
    %v4035 = vpack.c.b16 %v2963, %v2955
    %v4036 = vpack.c.b16 %v2964, %v2956
    %v4037 = vpack.c.b16 %v2965, %v2957
    %v4038 = vpack.c.b16 %v2966, %v2958
    %v4039 = vpack.c.b16 %v2967, %v2959
    %v4040 = vpack.c.b16 %v2968, %v2960
    %v4041 = vpack.c.b16 %v2969, %v2961
    %v4042 = vpack.c.b16 %v2978, %v2970
    %v4043 = vpack.c.b16 %v2979, %v2971
    %v4044 = vpack.c.b16 %v2980, %v2972
    %v4045 = vpack.c.b16 %v2981, %v2973
    %v4046 = vpack.c.b16 %v2982, %v2974
    %v4047 = vpack.c.b16 %v2983, %v2975
    %v4048 = vpack.c.b16 %v2984, %v2976
    %v4049 = vpack.c.b16 %v2985, %v2977
    %v4050 = vpack.c.b16 %v2994, %v2986
    %v4051 = vpack.c.b16 %v2995, %v2987
    %v4052 = vpack.c.b16 %v2996, %v2988
    %v4053 = vpack.c.b16 %v2997, %v2989
    %v4054 = vpack.c.b16 %v2998, %v2990
    %v4055 = vpack.c.b16 %v2999, %v2991
    %v4056 = vpack.c.b16 %v3000, %v2992
    %v4057 = vpack.c.b16 %v3001, %v2993
    %v4058 = vpack.c.b16 %v3010, %v3002
    %v4059 = vpack.c.b16 %v3011, %v3003
    %v4060 = vpack.c.b16 %v3012, %v3004
    %v4061 = vpack.c.b16 %v3013, %v3005
    %v4062 = vpack.c.b16 %v3014, %v3006
    %v4063 = vpack.c.b16 %v3015, %v3007
    %v4064 = vpack.c.b16 %v3016, %v3008
    %v4065 = vpack.c.b16 %v3017, %v3009
    %v4066 = vpack.c.b16 %v3026, %v3018
    %v4067 = vpack.c.b16 %v3027, %v3019
    %v4068 = vpack.c.b16 %v3028, %v3020
    %v4069 = vpack.c.b16 %v3029, %v3021
    %v4070 = vpack.c.b16 %v3030, %v3022
    %v4071 = vpack.c.b16 %v3031, %v3023
    %v4072 = vpack.c.b16 %v3032, %v3024
    %v4073 = vpack.c.b16 %v3033, %v3025
    %v4074 = vpack.c.b16 %v3042, %v3034
    %v4075 = vpack.c.b16 %v3043, %v3035
    %v4076 = vpack.c.b16 %v3044, %v3036
    %v4077 = vpack.c.b16 %v3045, %v3037
    %v4078 = vpack.c.b16 %v3046, %v3038
    %v4079 = vpack.c.b16 %v3047, %v3039
    %v4080 = vpack.c.b16 %v3048, %v3040
    %v4081 = vpack.c.b16 %v3049, %v3041
    %v4082 = vpack.c.b16 %v3058, %v3050
    %v4083 = vpack.c.b16 %v3059, %v3051
    %v4084 = vpack.c.b16 %v3060, %v3052
    %v4085 = vpack.c.b16 %v3061, %v3053
    %v4086 = vpack.c.b16 %v3062, %v3054
    %v4087 = vpack.c.b16 %v3063, %v3055
    %v4088 = vpack.c.b16 %v3064, %v3056
    %v4089 = vpack.c.b16 %v3065, %v3057
    %v4090 = vpack.c.b16 %v3074, %v3066
    %v4091 = vpack.c.b16 %v3075, %v3067
    %v4092 = vpack.c.b16 %v3076, %v3068
    %v4093 = vpack.c.b16 %v3077, %v3069
    %v4094 = vpack.c.b16 %v3078, %v3070
    %v4095 = vpack.c.b16 %v3079, %v3071
    %v4096 = vpack.c.b16 %v3080, %v3072
    %v4097 = vpack.c.b16 %v3081, %v3073
    %v4098 = vpack.c.b16 %v3090, %v3082
    %v4099 = vpack.c.b16 %v3091, %v3083
    %v4100 = vpack.c.b16 %v3092, %v3084
    %v4101 = vpack.c.b16 %v3093, %v3085
    %v4102 = vpack.c.b16 %v3094, %v3086
    %v4103 = vpack.c.b16 %v3095, %v3087
    %v4104 = vpack.c.b16 %v3096, %v3088
    %v4105 = vpack.c.b16 %v3097, %v3089
    %v4106 = vpack.c.b16 %v3106, %v3098
    %v4107 = vpack.c.b16 %v3107, %v3099
    %v4108 = vpack.c.b16 %v3108, %v3100
    %v4109 = vpack.c.b16 %v3109, %v3101
    %v4110 = vpack.c.b16 %v3110, %v3102
    %v4111 = vpack.c.b16 %v3111, %v3103
    %v4112 = vpack.c.b16 %v3112, %v3104
    %v4113 = vpack.c.b16 %v3113, %v3105
    %v4114 = vpack.c.b16 %v3122, %v3114
    %v4115 = vpack.c.b16 %v3123, %v3115
    %v4116 = vpack.c.b16 %v3124, %v3116
    %v4117 = vpack.c.b16 %v3125, %v3117
    %v4118 = vpack.c.b16 %v3126, %v3118
    %v4119 = vpack.c.b16 %v3127, %v3119
    %v4120 = vpack.c.b16 %v3128, %v3120
    %v4121 = vpack.c.b16 %v3129, %v3121
    %v4122 = vpack.c.b16 %v3138, %v3130
    %v4123 = vpack.c.b16 %v3139, %v3131
    %v4124 = vpack.c.b16 %v3140, %v3132
    %v4125 = vpack.c.b16 %v3141, %v3133
    %v4126 = vpack.c.b16 %v3142, %v3134
    %v4127 = vpack.c.b16 %v3143, %v3135
    %v4128 = vpack.c.b16 %v3144, %v3136
    %v4129 = vpack.c.b16 %v3145, %v3137
    %v4130 = vpack.c.b16 %v3154, %v3146
    %v4131 = vpack.c.b16 %v3155, %v3147
    %v4132 = vpack.c.b16 %v3156, %v3148
    %v4133 = vpack.c.b16 %v3157, %v3149
    %v4134 = vpack.c.b16 %v3158, %v3150
    %v4135 = vpack.c.b16 %v3159, %v3151
    %v4136 = vpack.c.b16 %v3160, %v3152
    %v4137 = vpack.c.b16 %v3161, %v3153
    %v4138 = vpack.c.b16 %v3170, %v3162
    %v4139 = vpack.c.b16 %v3171, %v3163
    %v4140 = vpack.c.b16 %v3172, %v3164
    %v4141 = vpack.c.b16 %v3173, %v3165
    %v4142 = vpack.c.b16 %v3174, %v3166
    %v4143 = vpack.c.b16 %v3175, %v3167
    %v4144 = vpack.c.b16 %v3176, %v3168
    %v4145 = vpack.c.b16 %v3177, %v3169
    %v4146 = vpack.c.b16 %v3186, %v3178
    %v4147 = vpack.c.b16 %v3187, %v3179
    %v4148 = vpack.c.b16 %v3188, %v3180
    %v4149 = vpack.c.b16 %v3189, %v3181
    %v4150 = vpack.c.b16 %v3190, %v3182
    %v4151 = vpack.c.b16 %v3191, %v3183
    %v4152 = vpack.c.b16 %v3192, %v3184
    %v4153 = vpack.c.b16 %v3193, %v3185
    %v4154 = vpack.c.b16 %v3202, %v3194
    %v4155 = vpack.c.b16 %v3203, %v3195
    %v4156 = vpack.c.b16 %v3204, %v3196
    %v4157 = vpack.c.b16 %v3205, %v3197
    %v4158 = vpack.c.b16 %v3206, %v3198
    %v4159 = vpack.c.b16 %v3207, %v3199
    %v4160 = vpack.c.b16 %v3208, %v3200
    %v4161 = vpack.c.b16 %v3209, %v3201
    %v4162 = vpack.c.b16 %v3218, %v3210
    %v4163 = vpack.c.b16 %v3219, %v3211
    %v4164 = vpack.c.b16 %v3220, %v3212
    %v4165 = vpack.c.b16 %v3221, %v3213
    %v4166 = vpack.c.b16 %v3222, %v3214
    %v4167 = vpack.c.b16 %v3223, %v3215
    %v4168 = vpack.c.b16 %v3224, %v3216
    %v4169 = vpack.c.b16 %v3225, %v3217
    %v4170 = vpack.c.b16 %v3234, %v3226
    %v4171 = vpack.c.b16 %v3235, %v3227
    %v4172 = vpack.c.b16 %v3236, %v3228
    %v4173 = vpack.c.b16 %v3237, %v3229
    %v4174 = vpack.c.b16 %v3238, %v3230
    %v4175 = vpack.c.b16 %v3239, %v3231
    %v4176 = vpack.c.b16 %v3240, %v3232
    %v4177 = vpack.c.b16 %v3241, %v3233
    %v4178 = vpack.c.b16 %v3250, %v3242
    %v4179 = vpack.c.b16 %v3251, %v3243
    %v4180 = vpack.c.b16 %v3252, %v3244
    %v4181 = vpack.c.b16 %v3253, %v3245
    %v4182 = vpack.c.b16 %v3254, %v3246
    %v4183 = vpack.c.b16 %v3255, %v3247
    %v4184 = vpack.c.b16 %v3256, %v3248
    %v4185 = vpack.c.b16 %v3257, %v3249
    %v4186 = vpack.c.b16 %v3266, %v3258
    %v4187 = vpack.c.b16 %v3267, %v3259
    %v4188 = vpack.c.b16 %v3268, %v3260
    %v4189 = vpack.c.b16 %v3269, %v3261
    %v4190 = vpack.c.b16 %v3270, %v3262
    %v4191 = vpack.c.b16 %v3271, %v3263
    %v4192 = vpack.c.b16 %v3272, %v3264
    %v4193 = vpack.c.b16 %v3273, %v3265
    %v4194 = vpack.c.b16 %v3282, %v3274
    %v4195 = vpack.c.b16 %v3283, %v3275
    %v4196 = vpack.c.b16 %v3284, %v3276
    %v4197 = vpack.c.b16 %v3285, %v3277
    %v4198 = vpack.c.b16 %v3286, %v3278
    %v4199 = vpack.c.b16 %v3287, %v3279
    %v4200 = vpack.c.b16 %v3288, %v3280
    %v4201 = vpack.c.b16 %v3289, %v3281
    %v4202 = vpack.c.b16 %v3298, %v3290
    %v4203 = vpack.c.b16 %v3299, %v3291
    %v4204 = vpack.c.b16 %v3300, %v3292
    %v4205 = vpack.c.b16 %v3301, %v3293
    %v4206 = vpack.c.b16 %v3302, %v3294
    %v4207 = vpack.c.b16 %v3303, %v3295
    %v4208 = vpack.c.b16 %v3304, %v3296
    %v4209 = vpack.c.b16 %v3305, %v3297
    %v4210 = vpack.c.b16 %v3314, %v3306
    %v4211 = vpack.c.b16 %v3315, %v3307
    %v4212 = vpack.c.b16 %v3316, %v3308
    %v4213 = vpack.c.b16 %v3317, %v3309
    %v4214 = vpack.c.b16 %v3318, %v3310
    %v4215 = vpack.c.b16 %v3319, %v3311
    %v4216 = vpack.c.b16 %v3320, %v3312
    %v4217 = vpack.c.b16 %v3321, %v3313
    %v4218 = vpack.c.b16 %v3330, %v3322
    %v4219 = vpack.c.b16 %v3331, %v3323
    %v4220 = vpack.c.b16 %v3332, %v3324
    %v4221 = vpack.c.b16 %v3333, %v3325
    %v4222 = vpack.c.b16 %v3334, %v3326
    %v4223 = vpack.c.b16 %v3335, %v3327
    %v4224 = vpack.c.b16 %v3336, %v3328
    %v4225 = vpack.c.b16 %v3337, %v3329
    %v4226 = vpack.c.b16 %v3346, %v3338
    %v4227 = vpack.c.b16 %v3347, %v3339
    %v4228 = vpack.c.b16 %v3348, %v3340
    %v4229 = vpack.c.b16 %v3349, %v3341
    %v4230 = vpack.c.b16 %v3350, %v3342
    %v4231 = vpack.c.b16 %v3351, %v3343
    %v4232 = vpack.c.b16 %v3352, %v3344
    %v4233 = vpack.c.b16 %v3353, %v3345
    %v4234 = vpack.c.b16 %v3362, %v3354
    %v4235 = vpack.c.b16 %v3363, %v3355
    %v4236 = vpack.c.b16 %v3364, %v3356
    %v4237 = vpack.c.b16 %v3365, %v3357
    %v4238 = vpack.c.b16 %v3366, %v3358
    %v4239 = vpack.c.b16 %v3367, %v3359
    %v4240 = vpack.c.b16 %v3368, %v3360
    %v4241 = vpack.c.b16 %v3369, %v3361
    %v4242 = vpack.c.b16 %v3378, %v3370
    %v4243 = vpack.c.b16 %v3379, %v3371
    %v4244 = vpack.c.b16 %v3380, %v3372
    %v4245 = vpack.c.b16 %v3381, %v3373
    %v4246 = vpack.c.b16 %v3382, %v3374
    %v4247 = vpack.c.b16 %v3383, %v3375
    %v4248 = vpack.c.b16 %v3384, %v3376
    %v4249 = vpack.c.b16 %v3385, %v3377
    %v4250 = vpack.c.b16 %v3394, %v3386
    %v4251 = vpack.c.b16 %v3395, %v3387
    %v4252 = vpack.c.b16 %v3396, %v3388
    %v4253 = vpack.c.b16 %v3397, %v3389
    %v4254 = vpack.c.b16 %v3398, %v3390
    %v4255 = vpack.c.b16 %v3399, %v3391
    %v4256 = vpack.c.b16 %v3400, %v3392
    %v4257 = vpack.c.b16 %v3401, %v3393
    %v4258 = vpack.c.b16 %v3410, %v3402
    %v4259 = vpack.c.b16 %v3411, %v3403
    %v4260 = vpack.c.b16 %v3412, %v3404
    %v4261 = vpack.c.b16 %v3413, %v3405
    %v4262 = vpack.c.b16 %v3414, %v3406
    %v4263 = vpack.c.b16 %v3415, %v3407
    %v4264 = vpack.c.b16 %v3416, %v3408
    %v4265 = vpack.c.b16 %v3417, %v3409
    %v4266 = vpack.c.b16 %v3426, %v3418
    %v4267 = vpack.c.b16 %v3427, %v3419
    %v4268 = vpack.c.b16 %v3428, %v3420
    %v4269 = vpack.c.b16 %v3429, %v3421
    %v4270 = vpack.c.b16 %v3430, %v3422
    %v4271 = vpack.c.b16 %v3431, %v3423
    %v4272 = vpack.c.b16 %v3432, %v3424
    %v4273 = vpack.c.b16 %v3433, %v3425
    %v4274 = vpack.c.b16 %v3442, %v3434
    %v4275 = vpack.c.b16 %v3443, %v3435
    %v4276 = vpack.c.b16 %v3444, %v3436
    %v4277 = vpack.c.b16 %v3445, %v3437
    %v4278 = vpack.c.b16 %v3446, %v3438
    %v4279 = vpack.c.b16 %v3447, %v3439
    %v4280 = vpack.c.b16 %v3448, %v3440
    %v4281 = vpack.c.b16 %v3449, %v3441
    %v4282 = vpack.c.b16 %v3458, %v3450
    %v4283 = vpack.c.b16 %v3459, %v3451
    %v4284 = vpack.c.b16 %v3460, %v3452
    %v4285 = vpack.c.b16 %v3461, %v3453
    %v4286 = vpack.c.b16 %v3462, %v3454
    %v4287 = vpack.c.b16 %v3463, %v3455
    %v4288 = vpack.c.b16 %v3464, %v3456
    %v4289 = vpack.c.b16 %v3465, %v3457
    %v4290 = vpack.c.b16 %v3474, %v3466
    %v4291 = vpack.c.b16 %v3475, %v3467
    %v4292 = vpack.c.b16 %v3476, %v3468
    %v4293 = vpack.c.b16 %v3477, %v3469
    %v4294 = vpack.c.b16 %v3478, %v3470
    %v4295 = vpack.c.b16 %v3479, %v3471
    %v4296 = vpack.c.b16 %v3480, %v3472
    %v4297 = vpack.c.b16 %v3481, %v3473
    %vm5114 = vcmask 785408
    %v5116 = vsel %vm5114, %v175, 0
    %5118 = vmatprep.subr.bf16.mxu0 %v3539
    %5119 = vmatpush1.bf16.msra.mxu0 %v3538
    %5120 = vmatprep.subr.bf16.mxu0 %v3531
    %5121 = vmatpush1.bf16.msra.mxu0 %v3530
    %5122 = vmatprep.subr.bf16.mxu0 %v3523
    %5123 = vmatpush1.bf16.msra.mxu0 %v3522
    %5124 = vmatprep.subr.bf16.mxu0 %v3515
    %5125 = vmatpush1.bf16.msra.mxu0 %v3514
    %5126 = vmatprep.subr.bf16.mxu0 %v3507
    %5127 = vmatpush1.bf16.msra.mxu0 %v3506
    %5128 = vmatprep.subr.bf16.mxu0 %v3499
    %5129 = vmatpush1.bf16.msra.mxu0 %v3498
    %5130 = vmatprep.subr.bf16.mxu0 %v3491
    %5131 = vmatpush1.bf16.msra.mxu0 %v3490
    %5132 = vmatprep.subr.bf16.mxu0 %v3483
    %5133 = vmatpush1.bf16.msra.mxu0 %v3482
    %5134 = vmatprep.subr.bf16.mxu0 %v3603
    %5135 = vmatpush2.bf16.msra.mxu0 %v3602
    %5136 = vmatprep.subr.bf16.mxu0 %v3595
    %5137 = vmatpush2.bf16.msra.mxu0 %v3594
    %5138 = vmatprep.subr.bf16.mxu0 %v3587
    %5139 = vmatpush2.bf16.msra.mxu0 %v3586
    %5140 = vmatprep.subr.bf16.mxu0 %v3579
    %5141 = vmatpush2.bf16.msra.mxu0 %v3578
    %5142 = vmatprep.subr.bf16.mxu0 %v3571
    %5143 = vmatpush2.bf16.msra.mxu0 %v3570
    %5144 = vmatprep.subr.bf16.mxu0 %v3563
    %5145 = vmatpush2.bf16.msra.mxu0 %v3562
    %5146 = vmatprep.subr.bf16.mxu0 %v3555
    %5147 = vmatpush2.bf16.msra.mxu0 %v3554
    %5148 = vmatprep.subr.bf16.mxu0 %v3547
    %5149 = vmatpush2.bf16.msra.mxu0 %v3546
    %5150 = vmatprep.mubr.bf16.mxu0 %v164
    %5151 = vmatmul.mubr.bf16.gmra.mxu0 %v163
    %v5152 = vpop.f32.mrf.mxu0
    %v5153 = vadd.f32 %v997, %v5152
    %v5154 = vpop.f32.mrf.mxu0
    %v5155 = vadd.f32 %v1001, %v5154
    %v5156 = vpop.f32.mrf.mxu0
    %v5157 = vpop.f32.mrf.mxu0
    %5158 = vdwg.mxu0
    %5159 = vmatprep.subr.bf16.mxu0 %v3667
    %5160 = vmatpush1.bf16.msra.mxu0 %v3666
    %5161 = vmatprep.subr.bf16.mxu0 %v3659
    %5162 = vmatpush1.bf16.msra.mxu0 %v3658
    %5163 = vmatprep.subr.bf16.mxu0 %v3651
    %5164 = vmatpush1.bf16.msra.mxu0 %v3650
    %5165 = vmatprep.subr.bf16.mxu0 %v3643
    %5166 = vmatpush1.bf16.msra.mxu0 %v3642
    %5167 = vmatprep.subr.bf16.mxu0 %v3635
    %5168 = vmatpush1.bf16.msra.mxu0 %v3634
    %5169 = vmatprep.subr.bf16.mxu0 %v3627
    %5170 = vmatpush1.bf16.msra.mxu0 %v3626
    %5171 = vmatprep.subr.bf16.mxu0 %v3619
    %5172 = vmatpush1.bf16.msra.mxu0 %v3618
    %5173 = vmatprep.subr.bf16.mxu0 %v3611
    %5174 = vmatpush1.bf16.msra.mxu0 %v3610
    %5175 = vmatprep.subr.bf16.mxu0 %v3731
    %5176 = vmatpush2.bf16.msra.mxu0 %v3730
    %5177 = vmatprep.subr.bf16.mxu0 %v3723
    %5178 = vmatpush2.bf16.msra.mxu0 %v3722
    %5179 = vmatprep.subr.bf16.mxu0 %v3715
    %5180 = vmatpush2.bf16.msra.mxu0 %v3714
    %5181 = vmatprep.subr.bf16.mxu0 %v3707
    %5182 = vmatpush2.bf16.msra.mxu0 %v3706
    %5183 = vmatprep.subr.bf16.mxu0 %v3699
    %5184 = vmatpush2.bf16.msra.mxu0 %v3698
    %5185 = vmatprep.subr.bf16.mxu0 %v3691
    %5186 = vmatpush2.bf16.msra.mxu0 %v3690
    %5187 = vmatprep.subr.bf16.mxu0 %v3683
    %5188 = vmatpush2.bf16.msra.mxu0 %v3682
    %5189 = vmatprep.subr.bf16.mxu0 %v3675
    %5190 = vmatpush2.bf16.msra.mxu0 %v3674
    %5191 = vmatprep.mubr.bf16.mxu0 %v166
    %5192 = vmatmul.mubr.bf16.gmra.mxu0 %v165
    %v5193 = vpop.f32.mrf.mxu0
    %v5194 = vadd.f32 %v5153, %v5193
    %v5195 = vpop.f32.mrf.mxu0
    %v5196 = vadd.f32 %v5155, %v5195
    %v5197 = vpop.f32.mrf.mxu0
    %v5198 = vpop.f32.mrf.mxu0
    %5199 = vdwg.mxu0
    %5200 = vmatprep.subr.bf16.mxu0 %v3795
    %5201 = vmatpush1.bf16.msra.mxu0 %v3794
    %5202 = vmatprep.subr.bf16.mxu0 %v3787
    %5203 = vmatpush1.bf16.msra.mxu0 %v3786
    %5204 = vmatprep.subr.bf16.mxu0 %v3779
    %5205 = vmatpush1.bf16.msra.mxu0 %v3778
    %5206 = vmatprep.subr.bf16.mxu0 %v3771
    %5207 = vmatpush1.bf16.msra.mxu0 %v3770
    %5208 = vmatprep.subr.bf16.mxu0 %v3763
    %5209 = vmatpush1.bf16.msra.mxu0 %v3762
    %5210 = vmatprep.subr.bf16.mxu0 %v3755
    %5211 = vmatpush1.bf16.msra.mxu0 %v3754
    %5212 = vmatprep.subr.bf16.mxu0 %v3747
    %5213 = vmatpush1.bf16.msra.mxu0 %v3746
    %5214 = vmatprep.subr.bf16.mxu0 %v3739
    %5215 = vmatpush1.bf16.msra.mxu0 %v3738
    %5216 = vmatprep.subr.bf16.mxu0 %v3859
    %5217 = vmatpush2.bf16.msra.mxu0 %v3858
    %5218 = vmatprep.subr.bf16.mxu0 %v3851
    %5219 = vmatpush2.bf16.msra.mxu0 %v3850
    %5220 = vmatprep.subr.bf16.mxu0 %v3843
    %5221 = vmatpush2.bf16.msra.mxu0 %v3842
    %5222 = vmatprep.subr.bf16.mxu0 %v3835
    %5223 = vmatpush2.bf16.msra.mxu0 %v3834
    %5224 = vmatprep.subr.bf16.mxu0 %v3827
    %5225 = vmatpush2.bf16.msra.mxu0 %v3826
    %5226 = vmatprep.subr.bf16.mxu0 %v3819
    %5227 = vmatpush2.bf16.msra.mxu0 %v3818
    %5228 = vmatprep.subr.bf16.mxu0 %v3811
    %5229 = vmatpush2.bf16.msra.mxu0 %v3810
    %5230 = vmatprep.subr.bf16.mxu0 %v3803
    %5231 = vmatpush2.bf16.msra.mxu0 %v3802
    %5232 = vmatprep.mubr.bf16.mxu0 %v168
    %5233 = vmatmul.mubr.bf16.gmra.mxu0 %v167
    %v5234 = vpop.f32.mrf.mxu0
    %v5235 = vadd.f32 %v5194, %v5234
    %v5236 = vpop.f32.mrf.mxu0
    %v5237 = vadd.f32 %v5196, %v5236
    %v5238 = vpop.f32.mrf.mxu0
    %v5239 = vpop.f32.mrf.mxu0
    %5240 = vdwg.mxu0
    %5241 = vmatprep.subr.bf16.mxu0 %v3923
    %5242 = vmatpush1.bf16.msra.mxu0 %v3922
    %5243 = vmatprep.subr.bf16.mxu0 %v3915
    %5244 = vmatpush1.bf16.msra.mxu0 %v3914
    %5245 = vmatprep.subr.bf16.mxu0 %v3907
    %5246 = vmatpush1.bf16.msra.mxu0 %v3906
    %5247 = vmatprep.subr.bf16.mxu0 %v3899
    %5248 = vmatpush1.bf16.msra.mxu0 %v3898
    %5249 = vmatprep.subr.bf16.mxu0 %v3891
    %5250 = vmatpush1.bf16.msra.mxu0 %v3890
    %5251 = vmatprep.subr.bf16.mxu0 %v3883
    %5252 = vmatpush1.bf16.msra.mxu0 %v3882
    %5253 = vmatprep.subr.bf16.mxu0 %v3875
    %5254 = vmatpush1.bf16.msra.mxu0 %v3874
    %5255 = vmatprep.subr.bf16.mxu0 %v3867
    %5256 = vmatpush1.bf16.msra.mxu0 %v3866
    %5257 = vmatprep.subr.bf16.mxu0 %v3987
    %5258 = vmatpush2.bf16.msra.mxu0 %v3986
    %5259 = vmatprep.subr.bf16.mxu0 %v3979
    %5260 = vmatpush2.bf16.msra.mxu0 %v3978
    %5261 = vmatprep.subr.bf16.mxu0 %v3971
    %5262 = vmatpush2.bf16.msra.mxu0 %v3970
    %5263 = vmatprep.subr.bf16.mxu0 %v3963
    %5264 = vmatpush2.bf16.msra.mxu0 %v3962
    %5265 = vmatprep.subr.bf16.mxu0 %v3955
    %5266 = vmatpush2.bf16.msra.mxu0 %v3954
    %5267 = vmatprep.subr.bf16.mxu0 %v3947
    %5268 = vmatpush2.bf16.msra.mxu0 %v3946
    %5269 = vmatprep.subr.bf16.mxu0 %v3939
    %5270 = vmatpush2.bf16.msra.mxu0 %v3938
    %5271 = vmatprep.subr.bf16.mxu0 %v3931
    %5272 = vmatpush2.bf16.msra.mxu0 %v3930
    %5273 = vmatprep.mubr.bf16.mxu0 %v170
    %5274 = vmatmul.mubr.bf16.gmra.mxu0 %v169
    %v5275 = vpop.f32.mrf.mxu0
    %v5276 = vadd.f32 %v5235, %v5275
    %v5277 = vpop.f32.mrf.mxu0
    %v5278 = vadd.f32 %v5237, %v5277
    %v5279 = vpop.f32.mrf.mxu0
    %v5280 = vpop.f32.mrf.mxu0
    %5281 = vdwg.mxu0
    %5282 = vmatprep.subr.bf16.mxu0 %v4051
    %5283 = vmatpush1.bf16.msra.mxu0 %v4050
    %5284 = vmatprep.subr.bf16.mxu0 %v4043
    %5285 = vmatpush1.bf16.msra.mxu0 %v4042
    %5286 = vmatprep.subr.bf16.mxu0 %v4035
    %5287 = vmatpush1.bf16.msra.mxu0 %v4034
    %5288 = vmatprep.subr.bf16.mxu0 %v4027
    %5289 = vmatpush1.bf16.msra.mxu0 %v4026
    %5290 = vmatprep.subr.bf16.mxu0 %v4019
    %5291 = vmatpush1.bf16.msra.mxu0 %v4018
    %5292 = vmatprep.subr.bf16.mxu0 %v4011
    %5293 = vmatpush1.bf16.msra.mxu0 %v4010
    %5294 = vmatprep.subr.bf16.mxu0 %v4003
    %5295 = vmatpush1.bf16.msra.mxu0 %v4002
    %5296 = vmatprep.subr.bf16.mxu0 %v3995
    %5297 = vmatpush1.bf16.msra.mxu0 %v3994
    %5298 = vmatprep.subr.bf16.mxu0 %v4115
    %5299 = vmatpush2.bf16.msra.mxu0 %v4114
    %5300 = vmatprep.subr.bf16.mxu0 %v4107
    %5301 = vmatpush2.bf16.msra.mxu0 %v4106
    %5302 = vmatprep.subr.bf16.mxu0 %v4099
    %5303 = vmatpush2.bf16.msra.mxu0 %v4098
    %5304 = vmatprep.subr.bf16.mxu0 %v4091
    %5305 = vmatpush2.bf16.msra.mxu0 %v4090
    %5306 = vmatprep.subr.bf16.mxu0 %v4083
    %5307 = vmatpush2.bf16.msra.mxu0 %v4082
    %5308 = vmatprep.subr.bf16.mxu0 %v4075
    %5309 = vmatpush2.bf16.msra.mxu0 %v4074
    %5310 = vmatprep.subr.bf16.mxu0 %v4067
    %5311 = vmatpush2.bf16.msra.mxu0 %v4066
    %5312 = vmatprep.subr.bf16.mxu0 %v4059
    %5313 = vmatpush2.bf16.msra.mxu0 %v4058
    %5314 = vmatprep.mubr.bf16.mxu0 %v172
    %5315 = vmatmul.mubr.bf16.gmra.mxu0 %v171
    %v5316 = vpop.f32.mrf.mxu0
    %v5317 = vadd.f32 %v5276, %v5316
    %v5318 = vpop.f32.mrf.mxu0
    %v5319 = vadd.f32 %v5278, %v5318
    %v5320 = vpop.f32.mrf.mxu0
    %v5321 = vpop.f32.mrf.mxu0
    %5322 = vdwg.mxu0
    %5323 = vmatprep.subr.bf16.mxu0 %v4179
    %5324 = vmatpush1.bf16.msra.mxu0 %v4178
    %5325 = vmatprep.subr.bf16.mxu0 %v4171
    %5326 = vmatpush1.bf16.msra.mxu0 %v4170
    %5327 = vmatprep.subr.bf16.mxu0 %v4163
    %5328 = vmatpush1.bf16.msra.mxu0 %v4162
    %5329 = vmatprep.subr.bf16.mxu0 %v4155
    %5330 = vmatpush1.bf16.msra.mxu0 %v4154
    %5331 = vmatprep.subr.bf16.mxu0 %v4147
    %5332 = vmatpush1.bf16.msra.mxu0 %v4146
    %5333 = vmatprep.subr.bf16.mxu0 %v4139
    %5334 = vmatpush1.bf16.msra.mxu0 %v4138
    %5335 = vmatprep.subr.bf16.mxu0 %v4131
    %5336 = vmatpush1.bf16.msra.mxu0 %v4130
    %5337 = vmatprep.subr.bf16.mxu0 %v4123
    %5338 = vmatpush1.bf16.msra.mxu0 %v4122
    %5339 = vmatprep.subr.bf16.mxu0 %v4243
    %5340 = vmatpush2.bf16.msra.mxu0 %v4242
    %5341 = vmatprep.subr.bf16.mxu0 %v4235
    %5342 = vmatpush2.bf16.msra.mxu0 %v4234
    %5343 = vmatprep.subr.bf16.mxu0 %v4227
    %5344 = vmatpush2.bf16.msra.mxu0 %v4226
    %5345 = vmatprep.subr.bf16.mxu0 %v4219
    %5346 = vmatpush2.bf16.msra.mxu0 %v4218
    %5347 = vmatprep.subr.bf16.mxu0 %v4211
    %5348 = vmatpush2.bf16.msra.mxu0 %v4210
    %5349 = vmatprep.subr.bf16.mxu0 %v4203
    %5350 = vmatpush2.bf16.msra.mxu0 %v4202
    %5351 = vmatprep.subr.bf16.mxu0 %v4195
    %5352 = vmatpush2.bf16.msra.mxu0 %v4194
    %5353 = vmatprep.subr.bf16.mxu0 %v4187
    %5354 = vmatpush2.bf16.msra.mxu0 %v4186
    %5355 = vmatprep.mubr.bf16.mxu0 %v174
    %5356 = vmatmul.mubr.bf16.gmra.mxu0 %v173
    %v5357 = vpop.f32.mrf.mxu0
    %v5358 = vadd.f32 %v5317, %v5357
    %v5359 = vpop.f32.mrf.mxu0
    %v5360 = vadd.f32 %v5319, %v5359
    %v5361 = vpop.f32.mrf.mxu0
    %v5362 = vpop.f32.mrf.mxu0
    %5363 = vdwg.mxu0
    %5364 = vmatprep.subr.bf16.mxu0 0
    %5365 = vmatpush1.bf16.msra.mxu0 0
    %5366 = vmatprep.subr.bf16.mxu0 0
    %5367 = vmatpush1.bf16.msra.mxu0 0
    %5368 = vmatprep.subr.bf16.mxu0 %v4291
    %5369 = vmatpush1.bf16.msra.mxu0 %v4290
    %5370 = vmatprep.subr.bf16.mxu0 %v4283
    %5371 = vmatpush1.bf16.msra.mxu0 %v4282
    %5372 = vmatprep.subr.bf16.mxu0 %v4275
    %5373 = vmatpush1.bf16.msra.mxu0 %v4274
    %5374 = vmatprep.subr.bf16.mxu0 %v4267
    %5375 = vmatpush1.bf16.msra.mxu0 %v4266
    %5376 = vmatprep.subr.bf16.mxu0 %v4259
    %5377 = vmatpush1.bf16.msra.mxu0 %v4258
    %5378 = vmatprep.subr.bf16.mxu0 %v4251
    %5379 = vmatpush1.bf16.msra.mxu0 %v4250
    %5380 = vmatprep.subr.bf16.mxu0 0
    %5381 = vmatpush2.bf16.msra.mxu0 0
    %5382 = vmatprep.subr.bf16.mxu0 0
    %5383 = vmatpush2.bf16.msra.mxu0 0
    %5384 = vmatprep.subr.bf16.mxu0 0
    %5385 = vmatpush2.bf16.msra.mxu0 0
    %5386 = vmatprep.subr.bf16.mxu0 0
    %5387 = vmatpush2.bf16.msra.mxu0 0
    %5388 = vmatprep.subr.bf16.mxu0 0
    %5389 = vmatpush2.bf16.msra.mxu0 0
    %5390 = vmatprep.subr.bf16.mxu0 0
    %5391 = vmatpush2.bf16.msra.mxu0 0
    %5392 = vmatprep.subr.bf16.mxu0 0
    %5393 = vmatpush2.bf16.msra.mxu0 0
    %5394 = vmatprep.subr.bf16.mxu0 0
    %5395 = vmatpush2.bf16.msra.mxu0 0
    %5396 = vmatprep.mubr.bf16.mxu0 0
    %5397 = vmatmul.mubr.bf16.gmra.mxu0 %v5116
    %v5398 = vpop.f32.mrf.mxu0
    %v5399 = vadd.f32 %v5358, %v5398
    %v5400 = vpop.f32.mrf.mxu0
    %v5401 = vadd.f32 %v5360, %v5400
    %v5402 = vpop.f32.mrf.mxu0
    %v5403 = vpop.f32.mrf.mxu0
    %5404 = vdwg.mxu0
    %5405 = vmatprep.subr.bf16.mxu0 %v3541
    %5406 = vmatpush1.bf16.msra.mxu0 %v3540
    %5407 = vmatprep.subr.bf16.mxu0 %v3533
    %5408 = vmatpush1.bf16.msra.mxu0 %v3532
    %5409 = vmatprep.subr.bf16.mxu0 %v3525
    %5410 = vmatpush1.bf16.msra.mxu0 %v3524
    %5411 = vmatprep.subr.bf16.mxu0 %v3517
    %5412 = vmatpush1.bf16.msra.mxu0 %v3516
    %5413 = vmatprep.subr.bf16.mxu0 %v3509
    %5414 = vmatpush1.bf16.msra.mxu0 %v3508
    %5415 = vmatprep.subr.bf16.mxu0 %v3501
    %5416 = vmatpush1.bf16.msra.mxu0 %v3500
    %5417 = vmatprep.subr.bf16.mxu0 %v3493
    %5418 = vmatpush1.bf16.msra.mxu0 %v3492
    %5419 = vmatprep.subr.bf16.mxu0 %v3485
    %5420 = vmatpush1.bf16.msra.mxu0 %v3484
    %5421 = vmatprep.subr.bf16.mxu0 %v3605
    %5422 = vmatpush2.bf16.msra.mxu0 %v3604
    %5423 = vmatprep.subr.bf16.mxu0 %v3597
    %5424 = vmatpush2.bf16.msra.mxu0 %v3596
    %5425 = vmatprep.subr.bf16.mxu0 %v3589
    %5426 = vmatpush2.bf16.msra.mxu0 %v3588
    %5427 = vmatprep.subr.bf16.mxu0 %v3581
    %5428 = vmatpush2.bf16.msra.mxu0 %v3580
    %5429 = vmatprep.subr.bf16.mxu0 %v3573
    %5430 = vmatpush2.bf16.msra.mxu0 %v3572
    %5431 = vmatprep.subr.bf16.mxu0 %v3565
    %5432 = vmatpush2.bf16.msra.mxu0 %v3564
    %5433 = vmatprep.subr.bf16.mxu0 %v3557
    %5434 = vmatpush2.bf16.msra.mxu0 %v3556
    %5435 = vmatprep.subr.bf16.mxu0 %v3549
    %5436 = vmatpush2.bf16.msra.mxu0 %v3548
    %5437 = vmatprep.mubr.bf16.mxu0 %v164
    %5438 = vmatmul.mubr.bf16.gmra.mxu0 %v163
    %v5439 = vpop.f32.mrf.mxu0
    %v5440 = vadd.f32 %v1005, %v5439
    %v5441 = vpop.f32.mrf.mxu0
    %v5442 = vadd.f32 %v1009, %v5441
    %v5443 = vpop.f32.mrf.mxu0
    %v5444 = vpop.f32.mrf.mxu0
    %5445 = vdwg.mxu0
    %5446 = vmatprep.subr.bf16.mxu0 %v3669
    %5447 = vmatpush1.bf16.msra.mxu0 %v3668
    %5448 = vmatprep.subr.bf16.mxu0 %v3661
    %5449 = vmatpush1.bf16.msra.mxu0 %v3660
    %5450 = vmatprep.subr.bf16.mxu0 %v3653
    %5451 = vmatpush1.bf16.msra.mxu0 %v3652
    %5452 = vmatprep.subr.bf16.mxu0 %v3645
    %5453 = vmatpush1.bf16.msra.mxu0 %v3644
    %5454 = vmatprep.subr.bf16.mxu0 %v3637
    %5455 = vmatpush1.bf16.msra.mxu0 %v3636
    %5456 = vmatprep.subr.bf16.mxu0 %v3629
    %5457 = vmatpush1.bf16.msra.mxu0 %v3628
    %5458 = vmatprep.subr.bf16.mxu0 %v3621
    %5459 = vmatpush1.bf16.msra.mxu0 %v3620
    %5460 = vmatprep.subr.bf16.mxu0 %v3613
    %5461 = vmatpush1.bf16.msra.mxu0 %v3612
    %5462 = vmatprep.subr.bf16.mxu0 %v3733
    %5463 = vmatpush2.bf16.msra.mxu0 %v3732
    %5464 = vmatprep.subr.bf16.mxu0 %v3725
    %5465 = vmatpush2.bf16.msra.mxu0 %v3724
    %5466 = vmatprep.subr.bf16.mxu0 %v3717
    %5467 = vmatpush2.bf16.msra.mxu0 %v3716
    %5468 = vmatprep.subr.bf16.mxu0 %v3709
    %5469 = vmatpush2.bf16.msra.mxu0 %v3708
    %5470 = vmatprep.subr.bf16.mxu0 %v3701
    %5471 = vmatpush2.bf16.msra.mxu0 %v3700
    %5472 = vmatprep.subr.bf16.mxu0 %v3693
    %5473 = vmatpush2.bf16.msra.mxu0 %v3692
    %5474 = vmatprep.subr.bf16.mxu0 %v3685
    %5475 = vmatpush2.bf16.msra.mxu0 %v3684
    %5476 = vmatprep.subr.bf16.mxu0 %v3677
    %5477 = vmatpush2.bf16.msra.mxu0 %v3676
    %5478 = vmatprep.mubr.bf16.mxu0 %v166
    %5479 = vmatmul.mubr.bf16.gmra.mxu0 %v165
    %v5480 = vpop.f32.mrf.mxu0
    %v5481 = vadd.f32 %v5440, %v5480
    %v5482 = vpop.f32.mrf.mxu0
    %v5483 = vadd.f32 %v5442, %v5482
    %v5484 = vpop.f32.mrf.mxu0
    %v5485 = vpop.f32.mrf.mxu0
    %5486 = vdwg.mxu0
    %5487 = vmatprep.subr.bf16.mxu0 %v3797
    %5488 = vmatpush1.bf16.msra.mxu0 %v3796
    %5489 = vmatprep.subr.bf16.mxu0 %v3789
    %5490 = vmatpush1.bf16.msra.mxu0 %v3788
    %5491 = vmatprep.subr.bf16.mxu0 %v3781
    %5492 = vmatpush1.bf16.msra.mxu0 %v3780
    %5493 = vmatprep.subr.bf16.mxu0 %v3773
    %5494 = vmatpush1.bf16.msra.mxu0 %v3772
    %5495 = vmatprep.subr.bf16.mxu0 %v3765
    %5496 = vmatpush1.bf16.msra.mxu0 %v3764
    %5497 = vmatprep.subr.bf16.mxu0 %v3757
    %5498 = vmatpush1.bf16.msra.mxu0 %v3756
    %5499 = vmatprep.subr.bf16.mxu0 %v3749
    %5500 = vmatpush1.bf16.msra.mxu0 %v3748
    %5501 = vmatprep.subr.bf16.mxu0 %v3741
    %5502 = vmatpush1.bf16.msra.mxu0 %v3740
    %5503 = vmatprep.subr.bf16.mxu0 %v3861
    %5504 = vmatpush2.bf16.msra.mxu0 %v3860
    %5505 = vmatprep.subr.bf16.mxu0 %v3853
    %5506 = vmatpush2.bf16.msra.mxu0 %v3852
    %5507 = vmatprep.subr.bf16.mxu0 %v3845
    %5508 = vmatpush2.bf16.msra.mxu0 %v3844
    %5509 = vmatprep.subr.bf16.mxu0 %v3837
    %5510 = vmatpush2.bf16.msra.mxu0 %v3836
    %5511 = vmatprep.subr.bf16.mxu0 %v3829
    %5512 = vmatpush2.bf16.msra.mxu0 %v3828
    %5513 = vmatprep.subr.bf16.mxu0 %v3821
    %5514 = vmatpush2.bf16.msra.mxu0 %v3820
    %5515 = vmatprep.subr.bf16.mxu0 %v3813
    %5516 = vmatpush2.bf16.msra.mxu0 %v3812
    %5517 = vmatprep.subr.bf16.mxu0 %v3805
    %5518 = vmatpush2.bf16.msra.mxu0 %v3804
    %5519 = vmatprep.mubr.bf16.mxu0 %v168
    %5520 = vmatmul.mubr.bf16.gmra.mxu0 %v167
    %v5521 = vpop.f32.mrf.mxu0
    %v5522 = vadd.f32 %v5481, %v5521
    %v5523 = vpop.f32.mrf.mxu0
    %v5524 = vadd.f32 %v5483, %v5523
    %v5525 = vpop.f32.mrf.mxu0
    %v5526 = vpop.f32.mrf.mxu0
    %5527 = vdwg.mxu0
    %5528 = vmatprep.subr.bf16.mxu0 %v3925
    %5529 = vmatpush1.bf16.msra.mxu0 %v3924
    %5530 = vmatprep.subr.bf16.mxu0 %v3917
    %5531 = vmatpush1.bf16.msra.mxu0 %v3916
    %5532 = vmatprep.subr.bf16.mxu0 %v3909
    %5533 = vmatpush1.bf16.msra.mxu0 %v3908
    %5534 = vmatprep.subr.bf16.mxu0 %v3901
    %5535 = vmatpush1.bf16.msra.mxu0 %v3900
    %5536 = vmatprep.subr.bf16.mxu0 %v3893
    %5537 = vmatpush1.bf16.msra.mxu0 %v3892
    %5538 = vmatprep.subr.bf16.mxu0 %v3885
    %5539 = vmatpush1.bf16.msra.mxu0 %v3884
    %5540 = vmatprep.subr.bf16.mxu0 %v3877
    %5541 = vmatpush1.bf16.msra.mxu0 %v3876
    %5542 = vmatprep.subr.bf16.mxu0 %v3869
    %5543 = vmatpush1.bf16.msra.mxu0 %v3868
    %5544 = vmatprep.subr.bf16.mxu0 %v3989
    %5545 = vmatpush2.bf16.msra.mxu0 %v3988
    %5546 = vmatprep.subr.bf16.mxu0 %v3981
    %5547 = vmatpush2.bf16.msra.mxu0 %v3980
    %5548 = vmatprep.subr.bf16.mxu0 %v3973
    %5549 = vmatpush2.bf16.msra.mxu0 %v3972
    %5550 = vmatprep.subr.bf16.mxu0 %v3965
    %5551 = vmatpush2.bf16.msra.mxu0 %v3964
    %5552 = vmatprep.subr.bf16.mxu0 %v3957
    %5553 = vmatpush2.bf16.msra.mxu0 %v3956
    %5554 = vmatprep.subr.bf16.mxu0 %v3949
    %5555 = vmatpush2.bf16.msra.mxu0 %v3948
    %5556 = vmatprep.subr.bf16.mxu0 %v3941
    %5557 = vmatpush2.bf16.msra.mxu0 %v3940
    %5558 = vmatprep.subr.bf16.mxu0 %v3933
    %5559 = vmatpush2.bf16.msra.mxu0 %v3932
    %5560 = vmatprep.mubr.bf16.mxu0 %v170
    %5561 = vmatmul.mubr.bf16.gmra.mxu0 %v169
    %v5562 = vpop.f32.mrf.mxu0
    %v5563 = vadd.f32 %v5522, %v5562
    %v5564 = vpop.f32.mrf.mxu0
    %v5565 = vadd.f32 %v5524, %v5564
    %v5566 = vpop.f32.mrf.mxu0
    %v5567 = vpop.f32.mrf.mxu0
    %5568 = vdwg.mxu0
    %5569 = vmatprep.subr.bf16.mxu0 %v4053
    %5570 = vmatpush1.bf16.msra.mxu0 %v4052
    %5571 = vmatprep.subr.bf16.mxu0 %v4045
    %5572 = vmatpush1.bf16.msra.mxu0 %v4044
    %5573 = vmatprep.subr.bf16.mxu0 %v4037
    %5574 = vmatpush1.bf16.msra.mxu0 %v4036
    %5575 = vmatprep.subr.bf16.mxu0 %v4029
    %5576 = vmatpush1.bf16.msra.mxu0 %v4028
    %5577 = vmatprep.subr.bf16.mxu0 %v4021
    %5578 = vmatpush1.bf16.msra.mxu0 %v4020
    %5579 = vmatprep.subr.bf16.mxu0 %v4013
    %5580 = vmatpush1.bf16.msra.mxu0 %v4012
    %5581 = vmatprep.subr.bf16.mxu0 %v4005
    %5582 = vmatpush1.bf16.msra.mxu0 %v4004
    %5583 = vmatprep.subr.bf16.mxu0 %v3997
    %5584 = vmatpush1.bf16.msra.mxu0 %v3996
    %5585 = vmatprep.subr.bf16.mxu0 %v4117
    %5586 = vmatpush2.bf16.msra.mxu0 %v4116
    %5587 = vmatprep.subr.bf16.mxu0 %v4109
    %5588 = vmatpush2.bf16.msra.mxu0 %v4108
    %5589 = vmatprep.subr.bf16.mxu0 %v4101
    %5590 = vmatpush2.bf16.msra.mxu0 %v4100
    %5591 = vmatprep.subr.bf16.mxu0 %v4093
    %5592 = vmatpush2.bf16.msra.mxu0 %v4092
    %5593 = vmatprep.subr.bf16.mxu0 %v4085
    %5594 = vmatpush2.bf16.msra.mxu0 %v4084
    %5595 = vmatprep.subr.bf16.mxu0 %v4077
    %5596 = vmatpush2.bf16.msra.mxu0 %v4076
    %5597 = vmatprep.subr.bf16.mxu0 %v4069
    %5598 = vmatpush2.bf16.msra.mxu0 %v4068
    %5599 = vmatprep.subr.bf16.mxu0 %v4061
    %5600 = vmatpush2.bf16.msra.mxu0 %v4060
    %5601 = vmatprep.mubr.bf16.mxu0 %v172
    %5602 = vmatmul.mubr.bf16.gmra.mxu0 %v171
    %v5603 = vpop.f32.mrf.mxu0
    %v5604 = vadd.f32 %v5563, %v5603
    %v5605 = vpop.f32.mrf.mxu0
    %v5606 = vadd.f32 %v5565, %v5605
    %v5607 = vpop.f32.mrf.mxu0
    %v5608 = vpop.f32.mrf.mxu0
    %5609 = vdwg.mxu0
    %5610 = vmatprep.subr.bf16.mxu0 %v4181
    %5611 = vmatpush1.bf16.msra.mxu0 %v4180
    %5612 = vmatprep.subr.bf16.mxu0 %v4173
    %5613 = vmatpush1.bf16.msra.mxu0 %v4172
    %5614 = vmatprep.subr.bf16.mxu0 %v4165
    %5615 = vmatpush1.bf16.msra.mxu0 %v4164
    %5616 = vmatprep.subr.bf16.mxu0 %v4157
    %5617 = vmatpush1.bf16.msra.mxu0 %v4156
    %5618 = vmatprep.subr.bf16.mxu0 %v4149
    %5619 = vmatpush1.bf16.msra.mxu0 %v4148
    %5620 = vmatprep.subr.bf16.mxu0 %v4141
    %5621 = vmatpush1.bf16.msra.mxu0 %v4140
    %5622 = vmatprep.subr.bf16.mxu0 %v4133
    %5623 = vmatpush1.bf16.msra.mxu0 %v4132
    %5624 = vmatprep.subr.bf16.mxu0 %v4125
    %5625 = vmatpush1.bf16.msra.mxu0 %v4124
    %5626 = vmatprep.subr.bf16.mxu0 %v4245
    %5627 = vmatpush2.bf16.msra.mxu0 %v4244
    %5628 = vmatprep.subr.bf16.mxu0 %v4237
    %5629 = vmatpush2.bf16.msra.mxu0 %v4236
    %5630 = vmatprep.subr.bf16.mxu0 %v4229
    %5631 = vmatpush2.bf16.msra.mxu0 %v4228
    %5632 = vmatprep.subr.bf16.mxu0 %v4221
    %5633 = vmatpush2.bf16.msra.mxu0 %v4220
    %5634 = vmatprep.subr.bf16.mxu0 %v4213
    %5635 = vmatpush2.bf16.msra.mxu0 %v4212
    %5636 = vmatprep.subr.bf16.mxu0 %v4205
    %5637 = vmatpush2.bf16.msra.mxu0 %v4204
    %5638 = vmatprep.subr.bf16.mxu0 %v4197
    %5639 = vmatpush2.bf16.msra.mxu0 %v4196
    %5640 = vmatprep.subr.bf16.mxu0 %v4189
    %5641 = vmatpush2.bf16.msra.mxu0 %v4188
    %5642 = vmatprep.mubr.bf16.mxu0 %v174
    %5643 = vmatmul.mubr.bf16.gmra.mxu0 %v173
    %v5644 = vpop.f32.mrf.mxu0
    %v5645 = vadd.f32 %v5604, %v5644
    %v5646 = vpop.f32.mrf.mxu0
    %v5647 = vadd.f32 %v5606, %v5646
    %v5648 = vpop.f32.mrf.mxu0
    %v5649 = vpop.f32.mrf.mxu0
    %5650 = vdwg.mxu0
    %5651 = vmatprep.subr.bf16.mxu0 0
    %5652 = vmatpush1.bf16.msra.mxu0 0
    %5653 = vmatprep.subr.bf16.mxu0 0
    %5654 = vmatpush1.bf16.msra.mxu0 0
    %5655 = vmatprep.subr.bf16.mxu0 %v4293
    %5656 = vmatpush1.bf16.msra.mxu0 %v4292
    %5657 = vmatprep.subr.bf16.mxu0 %v4285
    %5658 = vmatpush1.bf16.msra.mxu0 %v4284
    %5659 = vmatprep.subr.bf16.mxu0 %v4277
    %5660 = vmatpush1.bf16.msra.mxu0 %v4276
    %5661 = vmatprep.subr.bf16.mxu0 %v4269
    %5662 = vmatpush1.bf16.msra.mxu0 %v4268
    %5663 = vmatprep.subr.bf16.mxu0 %v4261
    %5664 = vmatpush1.bf16.msra.mxu0 %v4260
    %5665 = vmatprep.subr.bf16.mxu0 %v4253
    %5666 = vmatpush1.bf16.msra.mxu0 %v4252
    %5667 = vmatprep.subr.bf16.mxu0 0
    %5668 = vmatpush2.bf16.msra.mxu0 0
    %5669 = vmatprep.subr.bf16.mxu0 0
    %5670 = vmatpush2.bf16.msra.mxu0 0
    %5671 = vmatprep.subr.bf16.mxu0 0
    %5672 = vmatpush2.bf16.msra.mxu0 0
    %5673 = vmatprep.subr.bf16.mxu0 0
    %5674 = vmatpush2.bf16.msra.mxu0 0
    %5675 = vmatprep.subr.bf16.mxu0 0
    %5676 = vmatpush2.bf16.msra.mxu0 0
    %5677 = vmatprep.subr.bf16.mxu0 0
    %5678 = vmatpush2.bf16.msra.mxu0 0
    %5679 = vmatprep.subr.bf16.mxu0 0
    %5680 = vmatpush2.bf16.msra.mxu0 0
    %5681 = vmatprep.subr.bf16.mxu0 0
    %5682 = vmatpush2.bf16.msra.mxu0 0
    %5683 = vmatprep.mubr.bf16.mxu0 0
    %5684 = vmatmul.mubr.bf16.gmra.mxu0 %v5116
    %v5685 = vpop.f32.mrf.mxu0
    %v5686 = vadd.f32 %v5645, %v5685
    %v5687 = vpop.f32.mrf.mxu0
    %v5688 = vadd.f32 %v5647, %v5687
    %v5689 = vpop.f32.mrf.mxu0
    %v5690 = vpop.f32.mrf.mxu0
    %5691 = vdwg.mxu0
    %5692 = vmatprep.subr.bf16.mxu0 %v3543
    %5693 = vmatpush1.bf16.msra.mxu0 %v3542
    %5694 = vmatprep.subr.bf16.mxu0 %v3535
    %5695 = vmatpush1.bf16.msra.mxu0 %v3534
    %5696 = vmatprep.subr.bf16.mxu0 %v3527
    %5697 = vmatpush1.bf16.msra.mxu0 %v3526
    %5698 = vmatprep.subr.bf16.mxu0 %v3519
    %5699 = vmatpush1.bf16.msra.mxu0 %v3518
    %5700 = vmatprep.subr.bf16.mxu0 %v3511
    %5701 = vmatpush1.bf16.msra.mxu0 %v3510
    %5702 = vmatprep.subr.bf16.mxu0 %v3503
    %5703 = vmatpush1.bf16.msra.mxu0 %v3502
    %5704 = vmatprep.subr.bf16.mxu0 %v3495
    %5705 = vmatpush1.bf16.msra.mxu0 %v3494
    %5706 = vmatprep.subr.bf16.mxu0 %v3487
    %5707 = vmatpush1.bf16.msra.mxu0 %v3486
    %5708 = vmatprep.subr.bf16.mxu0 %v3607
    %5709 = vmatpush2.bf16.msra.mxu0 %v3606
    %5710 = vmatprep.subr.bf16.mxu0 %v3599
    %5711 = vmatpush2.bf16.msra.mxu0 %v3598
    %5712 = vmatprep.subr.bf16.mxu0 %v3591
    %5713 = vmatpush2.bf16.msra.mxu0 %v3590
    %5714 = vmatprep.subr.bf16.mxu0 %v3583
    %5715 = vmatpush2.bf16.msra.mxu0 %v3582
    %5716 = vmatprep.subr.bf16.mxu0 %v3575
    %5717 = vmatpush2.bf16.msra.mxu0 %v3574
    %5718 = vmatprep.subr.bf16.mxu0 %v3567
    %5719 = vmatpush2.bf16.msra.mxu0 %v3566
    %5720 = vmatprep.subr.bf16.mxu0 %v3559
    %5721 = vmatpush2.bf16.msra.mxu0 %v3558
    %5722 = vmatprep.subr.bf16.mxu0 %v3551
    %5723 = vmatpush2.bf16.msra.mxu0 %v3550
    %5724 = vmatprep.mubr.bf16.mxu0 %v164
    %5725 = vmatmul.mubr.bf16.gmra.mxu0 %v163
    %v5726 = vpop.f32.mrf.mxu0
    %v5727 = vadd.f32 %v1013, %v5726
    %v5728 = vpop.f32.mrf.mxu0
    %v5729 = vadd.f32 %v1017, %v5728
    %v5730 = vpop.f32.mrf.mxu0
    %v5731 = vpop.f32.mrf.mxu0
    %5732 = vdwg.mxu0
    %5733 = vmatprep.subr.bf16.mxu0 %v3671
    %5734 = vmatpush1.bf16.msra.mxu0 %v3670
    %5735 = vmatprep.subr.bf16.mxu0 %v3663
    %5736 = vmatpush1.bf16.msra.mxu0 %v3662
    %5737 = vmatprep.subr.bf16.mxu0 %v3655
    %5738 = vmatpush1.bf16.msra.mxu0 %v3654
    %5739 = vmatprep.subr.bf16.mxu0 %v3647
    %5740 = vmatpush1.bf16.msra.mxu0 %v3646
    %5741 = vmatprep.subr.bf16.mxu0 %v3639
    %5742 = vmatpush1.bf16.msra.mxu0 %v3638
    %5743 = vmatprep.subr.bf16.mxu0 %v3631
    %5744 = vmatpush1.bf16.msra.mxu0 %v3630
    %5745 = vmatprep.subr.bf16.mxu0 %v3623
    %5746 = vmatpush1.bf16.msra.mxu0 %v3622
    %5747 = vmatprep.subr.bf16.mxu0 %v3615
    %5748 = vmatpush1.bf16.msra.mxu0 %v3614
    %5749 = vmatprep.subr.bf16.mxu0 %v3735
    %5750 = vmatpush2.bf16.msra.mxu0 %v3734
    %5751 = vmatprep.subr.bf16.mxu0 %v3727
    %5752 = vmatpush2.bf16.msra.mxu0 %v3726
    %5753 = vmatprep.subr.bf16.mxu0 %v3719
    %5754 = vmatpush2.bf16.msra.mxu0 %v3718
    %5755 = vmatprep.subr.bf16.mxu0 %v3711
    %5756 = vmatpush2.bf16.msra.mxu0 %v3710
    %5757 = vmatprep.subr.bf16.mxu0 %v3703
    %5758 = vmatpush2.bf16.msra.mxu0 %v3702
    %5759 = vmatprep.subr.bf16.mxu0 %v3695
    %5760 = vmatpush2.bf16.msra.mxu0 %v3694
    %5761 = vmatprep.subr.bf16.mxu0 %v3687
    %5762 = vmatpush2.bf16.msra.mxu0 %v3686
    %5763 = vmatprep.subr.bf16.mxu0 %v3679
    %5764 = vmatpush2.bf16.msra.mxu0 %v3678
    %5765 = vmatprep.mubr.bf16.mxu0 %v166
    %5766 = vmatmul.mubr.bf16.gmra.mxu0 %v165
    %v5767 = vpop.f32.mrf.mxu0
    %v5768 = vadd.f32 %v5727, %v5767
    %v5769 = vpop.f32.mrf.mxu0
    %v5770 = vadd.f32 %v5729, %v5769
    %v5771 = vpop.f32.mrf.mxu0
    %v5772 = vpop.f32.mrf.mxu0
    %5773 = vdwg.mxu0
    %5774 = vmatprep.subr.bf16.mxu0 %v3799
    %5775 = vmatpush1.bf16.msra.mxu0 %v3798
    %5776 = vmatprep.subr.bf16.mxu0 %v3791
    %5777 = vmatpush1.bf16.msra.mxu0 %v3790
    %5778 = vmatprep.subr.bf16.mxu0 %v3783
    %5779 = vmatpush1.bf16.msra.mxu0 %v3782
    %5780 = vmatprep.subr.bf16.mxu0 %v3775
    %5781 = vmatpush1.bf16.msra.mxu0 %v3774
    %5782 = vmatprep.subr.bf16.mxu0 %v3767
    %5783 = vmatpush1.bf16.msra.mxu0 %v3766
    %5784 = vmatprep.subr.bf16.mxu0 %v3759
    %5785 = vmatpush1.bf16.msra.mxu0 %v3758
    %5786 = vmatprep.subr.bf16.mxu0 %v3751
    %5787 = vmatpush1.bf16.msra.mxu0 %v3750
    %5788 = vmatprep.subr.bf16.mxu0 %v3743
    %5789 = vmatpush1.bf16.msra.mxu0 %v3742
    %5790 = vmatprep.subr.bf16.mxu0 %v3863
    %5791 = vmatpush2.bf16.msra.mxu0 %v3862
    %5792 = vmatprep.subr.bf16.mxu0 %v3855
    %5793 = vmatpush2.bf16.msra.mxu0 %v3854
    %5794 = vmatprep.subr.bf16.mxu0 %v3847
    %5795 = vmatpush2.bf16.msra.mxu0 %v3846
    %5796 = vmatprep.subr.bf16.mxu0 %v3839
    %5797 = vmatpush2.bf16.msra.mxu0 %v3838
    %5798 = vmatprep.subr.bf16.mxu0 %v3831
    %5799 = vmatpush2.bf16.msra.mxu0 %v3830
    %5800 = vmatprep.subr.bf16.mxu0 %v3823
    %5801 = vmatpush2.bf16.msra.mxu0 %v3822
    %5802 = vmatprep.subr.bf16.mxu0 %v3815
    %5803 = vmatpush2.bf16.msra.mxu0 %v3814
    %5804 = vmatprep.subr.bf16.mxu0 %v3807
    %5805 = vmatpush2.bf16.msra.mxu0 %v3806
    %5806 = vmatprep.mubr.bf16.mxu0 %v168
    %5807 = vmatmul.mubr.bf16.gmra.mxu0 %v167
    %v5808 = vpop.f32.mrf.mxu0
    %v5809 = vadd.f32 %v5768, %v5808
    %v5810 = vpop.f32.mrf.mxu0
    %v5811 = vadd.f32 %v5770, %v5810
    %v5812 = vpop.f32.mrf.mxu0
    %v5813 = vpop.f32.mrf.mxu0
    %5814 = vdwg.mxu0
    %5815 = vmatprep.subr.bf16.mxu0 %v3927
    %5816 = vmatpush1.bf16.msra.mxu0 %v3926
    %5817 = vmatprep.subr.bf16.mxu0 %v3919
    %5818 = vmatpush1.bf16.msra.mxu0 %v3918
    %5819 = vmatprep.subr.bf16.mxu0 %v3911
    %5820 = vmatpush1.bf16.msra.mxu0 %v3910
    %5821 = vmatprep.subr.bf16.mxu0 %v3903
    %5822 = vmatpush1.bf16.msra.mxu0 %v3902
    %5823 = vmatprep.subr.bf16.mxu0 %v3895
    %5824 = vmatpush1.bf16.msra.mxu0 %v3894
    %5825 = vmatprep.subr.bf16.mxu0 %v3887
    %5826 = vmatpush1.bf16.msra.mxu0 %v3886
    %5827 = vmatprep.subr.bf16.mxu0 %v3879
    %5828 = vmatpush1.bf16.msra.mxu0 %v3878
    %5829 = vmatprep.subr.bf16.mxu0 %v3871
    %5830 = vmatpush1.bf16.msra.mxu0 %v3870
    %5831 = vmatprep.subr.bf16.mxu0 %v3991
    %5832 = vmatpush2.bf16.msra.mxu0 %v3990
    %5833 = vmatprep.subr.bf16.mxu0 %v3983
    %5834 = vmatpush2.bf16.msra.mxu0 %v3982
    %5835 = vmatprep.subr.bf16.mxu0 %v3975
    %5836 = vmatpush2.bf16.msra.mxu0 %v3974
    %5837 = vmatprep.subr.bf16.mxu0 %v3967
    %5838 = vmatpush2.bf16.msra.mxu0 %v3966
    %5839 = vmatprep.subr.bf16.mxu0 %v3959
    %5840 = vmatpush2.bf16.msra.mxu0 %v3958
    %5841 = vmatprep.subr.bf16.mxu0 %v3951
    %5842 = vmatpush2.bf16.msra.mxu0 %v3950
    %5843 = vmatprep.subr.bf16.mxu0 %v3943
    %5844 = vmatpush2.bf16.msra.mxu0 %v3942
    %5845 = vmatprep.subr.bf16.mxu0 %v3935
    %5846 = vmatpush2.bf16.msra.mxu0 %v3934
    %5847 = vmatprep.mubr.bf16.mxu0 %v170
    %5848 = vmatmul.mubr.bf16.gmra.mxu0 %v169
    %v5849 = vpop.f32.mrf.mxu0
    %v5850 = vadd.f32 %v5809, %v5849
    %v5851 = vpop.f32.mrf.mxu0
    %v5852 = vadd.f32 %v5811, %v5851
    %v5853 = vpop.f32.mrf.mxu0
    %v5854 = vpop.f32.mrf.mxu0
    %5855 = vdwg.mxu0
    %5856 = vmatprep.subr.bf16.mxu0 %v4055
    %5857 = vmatpush1.bf16.msra.mxu0 %v4054
    %5858 = vmatprep.subr.bf16.mxu0 %v4047
    %5859 = vmatpush1.bf16.msra.mxu0 %v4046
    %5860 = vmatprep.subr.bf16.mxu0 %v4039
    %5861 = vmatpush1.bf16.msra.mxu0 %v4038
    %5862 = vmatprep.subr.bf16.mxu0 %v4031
    %5863 = vmatpush1.bf16.msra.mxu0 %v4030
    %5864 = vmatprep.subr.bf16.mxu0 %v4023
    %5865 = vmatpush1.bf16.msra.mxu0 %v4022
    %5866 = vmatprep.subr.bf16.mxu0 %v4015
    %5867 = vmatpush1.bf16.msra.mxu0 %v4014
    %5868 = vmatprep.subr.bf16.mxu0 %v4007
    %5869 = vmatpush1.bf16.msra.mxu0 %v4006
    %5870 = vmatprep.subr.bf16.mxu0 %v3999
    %5871 = vmatpush1.bf16.msra.mxu0 %v3998
    %5872 = vmatprep.subr.bf16.mxu0 %v4119
    %5873 = vmatpush2.bf16.msra.mxu0 %v4118
    %5874 = vmatprep.subr.bf16.mxu0 %v4111
    %5875 = vmatpush2.bf16.msra.mxu0 %v4110
    %5876 = vmatprep.subr.bf16.mxu0 %v4103
    %5877 = vmatpush2.bf16.msra.mxu0 %v4102
    %5878 = vmatprep.subr.bf16.mxu0 %v4095
    %5879 = vmatpush2.bf16.msra.mxu0 %v4094
    %5880 = vmatprep.subr.bf16.mxu0 %v4087
    %5881 = vmatpush2.bf16.msra.mxu0 %v4086
    %5882 = vmatprep.subr.bf16.mxu0 %v4079
    %5883 = vmatpush2.bf16.msra.mxu0 %v4078
    %5884 = vmatprep.subr.bf16.mxu0 %v4071
    %5885 = vmatpush2.bf16.msra.mxu0 %v4070
    %5886 = vmatprep.subr.bf16.mxu0 %v4063
    %5887 = vmatpush2.bf16.msra.mxu0 %v4062
    %5888 = vmatprep.mubr.bf16.mxu0 %v172
    %5889 = vmatmul.mubr.bf16.gmra.mxu0 %v171
    %v5890 = vpop.f32.mrf.mxu0
    %v5891 = vadd.f32 %v5850, %v5890
    %v5892 = vpop.f32.mrf.mxu0
    %v5893 = vadd.f32 %v5852, %v5892
    %v5894 = vpop.f32.mrf.mxu0
    %v5895 = vpop.f32.mrf.mxu0
    %5896 = vdwg.mxu0
    %5897 = vmatprep.subr.bf16.mxu0 %v4183
    %5898 = vmatpush1.bf16.msra.mxu0 %v4182
    %5899 = vmatprep.subr.bf16.mxu0 %v4175
    %5900 = vmatpush1.bf16.msra.mxu0 %v4174
    %5901 = vmatprep.subr.bf16.mxu0 %v4167
    %5902 = vmatpush1.bf16.msra.mxu0 %v4166
    %5903 = vmatprep.subr.bf16.mxu0 %v4159
    %5904 = vmatpush1.bf16.msra.mxu0 %v4158
    %5905 = vmatprep.subr.bf16.mxu0 %v4151
    %5906 = vmatpush1.bf16.msra.mxu0 %v4150
    %5907 = vmatprep.subr.bf16.mxu0 %v4143
    %5908 = vmatpush1.bf16.msra.mxu0 %v4142
    %5909 = vmatprep.subr.bf16.mxu0 %v4135
    %5910 = vmatpush1.bf16.msra.mxu0 %v4134
    %5911 = vmatprep.subr.bf16.mxu0 %v4127
    %5912 = vmatpush1.bf16.msra.mxu0 %v4126
    %5913 = vmatprep.subr.bf16.mxu0 %v4247
    %5914 = vmatpush2.bf16.msra.mxu0 %v4246
    %5915 = vmatprep.subr.bf16.mxu0 %v4239
    %5916 = vmatpush2.bf16.msra.mxu0 %v4238
    %5917 = vmatprep.subr.bf16.mxu0 %v4231
    %5918 = vmatpush2.bf16.msra.mxu0 %v4230
    %5919 = vmatprep.subr.bf16.mxu0 %v4223
    %5920 = vmatpush2.bf16.msra.mxu0 %v4222
    %5921 = vmatprep.subr.bf16.mxu0 %v4215
    %5922 = vmatpush2.bf16.msra.mxu0 %v4214
    %5923 = vmatprep.subr.bf16.mxu0 %v4207
    %5924 = vmatpush2.bf16.msra.mxu0 %v4206
    %5925 = vmatprep.subr.bf16.mxu0 %v4199
    %5926 = vmatpush2.bf16.msra.mxu0 %v4198
    %5927 = vmatprep.subr.bf16.mxu0 %v4191
    %5928 = vmatpush2.bf16.msra.mxu0 %v4190
    %5929 = vmatprep.mubr.bf16.mxu0 %v174
    %5930 = vmatmul.mubr.bf16.gmra.mxu0 %v173
    %v5931 = vpop.f32.mrf.mxu0
    %v5932 = vadd.f32 %v5891, %v5931
    %v5933 = vpop.f32.mrf.mxu0
    %v5934 = vadd.f32 %v5893, %v5933
    %v5935 = vpop.f32.mrf.mxu0
    %v5936 = vpop.f32.mrf.mxu0
    %5937 = vdwg.mxu0
    %5938 = vmatprep.subr.bf16.mxu0 0
    %5939 = vmatpush1.bf16.msra.mxu0 0
    %5940 = vmatprep.subr.bf16.mxu0 0
    %5941 = vmatpush1.bf16.msra.mxu0 0
    %5942 = vmatprep.subr.bf16.mxu0 %v4295
    %5943 = vmatpush1.bf16.msra.mxu0 %v4294
    %5944 = vmatprep.subr.bf16.mxu0 %v4287
    %5945 = vmatpush1.bf16.msra.mxu0 %v4286
    %5946 = vmatprep.subr.bf16.mxu0 %v4279
    %5947 = vmatpush1.bf16.msra.mxu0 %v4278
    %5948 = vmatprep.subr.bf16.mxu0 %v4271
    %5949 = vmatpush1.bf16.msra.mxu0 %v4270
    %5950 = vmatprep.subr.bf16.mxu0 %v4263
    %5951 = vmatpush1.bf16.msra.mxu0 %v4262
    %5952 = vmatprep.subr.bf16.mxu0 %v4255
    %5953 = vmatpush1.bf16.msra.mxu0 %v4254
    %5954 = vmatprep.subr.bf16.mxu0 0
    %5955 = vmatpush2.bf16.msra.mxu0 0
    %5956 = vmatprep.subr.bf16.mxu0 0
    %5957 = vmatpush2.bf16.msra.mxu0 0
    %5958 = vmatprep.subr.bf16.mxu0 0
    %5959 = vmatpush2.bf16.msra.mxu0 0
    %5960 = vmatprep.subr.bf16.mxu0 0
    %5961 = vmatpush2.bf16.msra.mxu0 0
    %5962 = vmatprep.subr.bf16.mxu0 0
    %5963 = vmatpush2.bf16.msra.mxu0 0
    %5964 = vmatprep.subr.bf16.mxu0 0
    %5965 = vmatpush2.bf16.msra.mxu0 0
    %5966 = vmatprep.subr.bf16.mxu0 0
    %5967 = vmatpush2.bf16.msra.mxu0 0
    %5968 = vmatprep.subr.bf16.mxu0 0
    %5969 = vmatpush2.bf16.msra.mxu0 0
    %5970 = vmatprep.mubr.bf16.mxu0 0
    %5971 = vmatmul.mubr.bf16.gmra.mxu0 %v5116
    %v5972 = vpop.f32.mrf.mxu0
    %v5973 = vadd.f32 %v5932, %v5972
    %v5974 = vpop.f32.mrf.mxu0
    %v5975 = vadd.f32 %v5934, %v5974
    %v5976 = vpop.f32.mrf.mxu0
    %v5977 = vpop.f32.mrf.mxu0
    %5978 = vdwg.mxu0
    %5979 = vmatprep.subr.bf16.mxu0 %v3545
    %5980 = vmatpush1.bf16.msra.mxu0 %v3544
    %5981 = vmatprep.subr.bf16.mxu0 %v3537
    %5982 = vmatpush1.bf16.msra.mxu0 %v3536
    %5983 = vmatprep.subr.bf16.mxu0 %v3529
    %5984 = vmatpush1.bf16.msra.mxu0 %v3528
    %5985 = vmatprep.subr.bf16.mxu0 %v3521
    %5986 = vmatpush1.bf16.msra.mxu0 %v3520
    %5987 = vmatprep.subr.bf16.mxu0 %v3513
    %5988 = vmatpush1.bf16.msra.mxu0 %v3512
    %5989 = vmatprep.subr.bf16.mxu0 %v3505
    %5990 = vmatpush1.bf16.msra.mxu0 %v3504
    %5991 = vmatprep.subr.bf16.mxu0 %v3497
    %5992 = vmatpush1.bf16.msra.mxu0 %v3496
    %5993 = vmatprep.subr.bf16.mxu0 %v3489
    %5994 = vmatpush1.bf16.msra.mxu0 %v3488
    %5995 = vmatprep.subr.bf16.mxu0 %v3609
    %5996 = vmatpush2.bf16.msra.mxu0 %v3608
    %5997 = vmatprep.subr.bf16.mxu0 %v3601
    %5998 = vmatpush2.bf16.msra.mxu0 %v3600
    %5999 = vmatprep.subr.bf16.mxu0 %v3593
    %6000 = vmatpush2.bf16.msra.mxu0 %v3592
    %6001 = vmatprep.subr.bf16.mxu0 %v3585
    %6002 = vmatpush2.bf16.msra.mxu0 %v3584
    %6003 = vmatprep.subr.bf16.mxu0 %v3577
    %6004 = vmatpush2.bf16.msra.mxu0 %v3576
    %6005 = vmatprep.subr.bf16.mxu0 %v3569
    %6006 = vmatpush2.bf16.msra.mxu0 %v3568
    %6007 = vmatprep.subr.bf16.mxu0 %v3561
    %6008 = vmatpush2.bf16.msra.mxu0 %v3560
    %6009 = vmatprep.subr.bf16.mxu0 %v3553
    %6010 = vmatpush2.bf16.msra.mxu0 %v3552
    %6011 = vmatprep.mubr.bf16.mxu0 %v164
    %6012 = vmatmul.mubr.bf16.gmra.mxu0 %v163
    %v6013 = vpop.f32.mrf.mxu0
    %v6014 = vadd.f32 %v1021, %v6013
    %v6015 = vpop.f32.mrf.mxu0
    %v6016 = vadd.f32 %v1025, %v6015
    %v6017 = vpop.f32.mrf.mxu0
    %v6018 = vpop.f32.mrf.mxu0
    %6019 = vdwg.mxu0
    %6020 = vmatprep.subr.bf16.mxu0 %v3673
    %6021 = vmatpush1.bf16.msra.mxu0 %v3672
    %6022 = vmatprep.subr.bf16.mxu0 %v3665
    %6023 = vmatpush1.bf16.msra.mxu0 %v3664
    %6024 = vmatprep.subr.bf16.mxu0 %v3657
    %6025 = vmatpush1.bf16.msra.mxu0 %v3656
    %6026 = vmatprep.subr.bf16.mxu0 %v3649
    %6027 = vmatpush1.bf16.msra.mxu0 %v3648
    %6028 = vmatprep.subr.bf16.mxu0 %v3641
    %6029 = vmatpush1.bf16.msra.mxu0 %v3640
    %6030 = vmatprep.subr.bf16.mxu0 %v3633
    %6031 = vmatpush1.bf16.msra.mxu0 %v3632
    %6032 = vmatprep.subr.bf16.mxu0 %v3625
    %6033 = vmatpush1.bf16.msra.mxu0 %v3624
    %6034 = vmatprep.subr.bf16.mxu0 %v3617
    %6035 = vmatpush1.bf16.msra.mxu0 %v3616
    %6036 = vmatprep.subr.bf16.mxu0 %v3737
    %6037 = vmatpush2.bf16.msra.mxu0 %v3736
    %6038 = vmatprep.subr.bf16.mxu0 %v3729
    %6039 = vmatpush2.bf16.msra.mxu0 %v3728
    %6040 = vmatprep.subr.bf16.mxu0 %v3721
    %6041 = vmatpush2.bf16.msra.mxu0 %v3720
    %6042 = vmatprep.subr.bf16.mxu0 %v3713
    %6043 = vmatpush2.bf16.msra.mxu0 %v3712
    %6044 = vmatprep.subr.bf16.mxu0 %v3705
    %6045 = vmatpush2.bf16.msra.mxu0 %v3704
    %6046 = vmatprep.subr.bf16.mxu0 %v3697
    %6047 = vmatpush2.bf16.msra.mxu0 %v3696
    %6048 = vmatprep.subr.bf16.mxu0 %v3689
    %6049 = vmatpush2.bf16.msra.mxu0 %v3688
    %6050 = vmatprep.subr.bf16.mxu0 %v3681
    %6051 = vmatpush2.bf16.msra.mxu0 %v3680
    %6052 = vmatprep.mubr.bf16.mxu0 %v166
    %6053 = vmatmul.mubr.bf16.gmra.mxu0 %v165
    %v6054 = vpop.f32.mrf.mxu0
    %v6055 = vadd.f32 %v6014, %v6054
    %v6056 = vpop.f32.mrf.mxu0
    %v6057 = vadd.f32 %v6016, %v6056
    %v6058 = vpop.f32.mrf.mxu0
    %v6059 = vpop.f32.mrf.mxu0
    %6060 = vdwg.mxu0
    %6061 = vmatprep.subr.bf16.mxu0 %v3801
    %6062 = vmatpush1.bf16.msra.mxu0 %v3800
    %6063 = vmatprep.subr.bf16.mxu0 %v3793
    %6064 = vmatpush1.bf16.msra.mxu0 %v3792
    %6065 = vmatprep.subr.bf16.mxu0 %v3785
    %6066 = vmatpush1.bf16.msra.mxu0 %v3784
    %6067 = vmatprep.subr.bf16.mxu0 %v3777
    %6068 = vmatpush1.bf16.msra.mxu0 %v3776
    %6069 = vmatprep.subr.bf16.mxu0 %v3769
    %6070 = vmatpush1.bf16.msra.mxu0 %v3768
    %6071 = vmatprep.subr.bf16.mxu0 %v3761
    %6072 = vmatpush1.bf16.msra.mxu0 %v3760
    %6073 = vmatprep.subr.bf16.mxu0 %v3753
    %6074 = vmatpush1.bf16.msra.mxu0 %v3752
    %6075 = vmatprep.subr.bf16.mxu0 %v3745
    %6076 = vmatpush1.bf16.msra.mxu0 %v3744
    %6077 = vmatprep.subr.bf16.mxu0 %v3865
    %6078 = vmatpush2.bf16.msra.mxu0 %v3864
    %6079 = vmatprep.subr.bf16.mxu0 %v3857
    %6080 = vmatpush2.bf16.msra.mxu0 %v3856
    %6081 = vmatprep.subr.bf16.mxu0 %v3849
    %6082 = vmatpush2.bf16.msra.mxu0 %v3848
    %6083 = vmatprep.subr.bf16.mxu0 %v3841
    %6084 = vmatpush2.bf16.msra.mxu0 %v3840
    %6085 = vmatprep.subr.bf16.mxu0 %v3833
    %6086 = vmatpush2.bf16.msra.mxu0 %v3832
    %6087 = vmatprep.subr.bf16.mxu0 %v3825
    %6088 = vmatpush2.bf16.msra.mxu0 %v3824
    %6089 = vmatprep.subr.bf16.mxu0 %v3817
    %6090 = vmatpush2.bf16.msra.mxu0 %v3816
    %6091 = vmatprep.subr.bf16.mxu0 %v3809
    %6092 = vmatpush2.bf16.msra.mxu0 %v3808
    %6093 = vmatprep.mubr.bf16.mxu0 %v168
    %6094 = vmatmul.mubr.bf16.gmra.mxu0 %v167
    %v6095 = vpop.f32.mrf.mxu0
    %v6096 = vadd.f32 %v6055, %v6095
    %v6097 = vpop.f32.mrf.mxu0
    %v6098 = vadd.f32 %v6057, %v6097
    %v6099 = vpop.f32.mrf.mxu0
    %v6100 = vpop.f32.mrf.mxu0
    %6101 = vdwg.mxu0
    %6102 = vmatprep.subr.bf16.mxu0 %v3929
    %6103 = vmatpush1.bf16.msra.mxu0 %v3928
    %6104 = vmatprep.subr.bf16.mxu0 %v3921
    %6105 = vmatpush1.bf16.msra.mxu0 %v3920
    %6106 = vmatprep.subr.bf16.mxu0 %v3913
    %6107 = vmatpush1.bf16.msra.mxu0 %v3912
    %6108 = vmatprep.subr.bf16.mxu0 %v3905
    %6109 = vmatpush1.bf16.msra.mxu0 %v3904
    %6110 = vmatprep.subr.bf16.mxu0 %v3897
    %6111 = vmatpush1.bf16.msra.mxu0 %v3896
    %6112 = vmatprep.subr.bf16.mxu0 %v3889
    %6113 = vmatpush1.bf16.msra.mxu0 %v3888
    %6114 = vmatprep.subr.bf16.mxu0 %v3881
    %6115 = vmatpush1.bf16.msra.mxu0 %v3880
    %6116 = vmatprep.subr.bf16.mxu0 %v3873
    %6117 = vmatpush1.bf16.msra.mxu0 %v3872
    %6118 = vmatprep.subr.bf16.mxu0 %v3993
    %6119 = vmatpush2.bf16.msra.mxu0 %v3992
    %6120 = vmatprep.subr.bf16.mxu0 %v3985
    %6121 = vmatpush2.bf16.msra.mxu0 %v3984
    %6122 = vmatprep.subr.bf16.mxu0 %v3977
    %6123 = vmatpush2.bf16.msra.mxu0 %v3976
    %6124 = vmatprep.subr.bf16.mxu0 %v3969
    %6125 = vmatpush2.bf16.msra.mxu0 %v3968
    %6126 = vmatprep.subr.bf16.mxu0 %v3961
    %6127 = vmatpush2.bf16.msra.mxu0 %v3960
    %6128 = vmatprep.subr.bf16.mxu0 %v3953
    %6129 = vmatpush2.bf16.msra.mxu0 %v3952
    %6130 = vmatprep.subr.bf16.mxu0 %v3945
    %6131 = vmatpush2.bf16.msra.mxu0 %v3944
    %6132 = vmatprep.subr.bf16.mxu0 %v3937
    %6133 = vmatpush2.bf16.msra.mxu0 %v3936
    %6134 = vmatprep.mubr.bf16.mxu0 %v170
    %6135 = vmatmul.mubr.bf16.gmra.mxu0 %v169
    %v6136 = vpop.f32.mrf.mxu0
    %v6137 = vadd.f32 %v6096, %v6136
    %v6138 = vpop.f32.mrf.mxu0
    %v6139 = vadd.f32 %v6098, %v6138
    %v6140 = vpop.f32.mrf.mxu0
    %v6141 = vpop.f32.mrf.mxu0
    %6142 = vdwg.mxu0
    %6143 = vmatprep.subr.bf16.mxu0 %v4057
    %6144 = vmatpush1.bf16.msra.mxu0 %v4056
    %6145 = vmatprep.subr.bf16.mxu0 %v4049
    %6146 = vmatpush1.bf16.msra.mxu0 %v4048
    %6147 = vmatprep.subr.bf16.mxu0 %v4041
    %6148 = vmatpush1.bf16.msra.mxu0 %v4040
    %6149 = vmatprep.subr.bf16.mxu0 %v4033
    %6150 = vmatpush1.bf16.msra.mxu0 %v4032
    %6151 = vmatprep.subr.bf16.mxu0 %v4025
    %6152 = vmatpush1.bf16.msra.mxu0 %v4024
    %6153 = vmatprep.subr.bf16.mxu0 %v4017
    %6154 = vmatpush1.bf16.msra.mxu0 %v4016
    %6155 = vmatprep.subr.bf16.mxu0 %v4009
    %6156 = vmatpush1.bf16.msra.mxu0 %v4008
    %6157 = vmatprep.subr.bf16.mxu0 %v4001
    %6158 = vmatpush1.bf16.msra.mxu0 %v4000
    %6159 = vmatprep.subr.bf16.mxu0 %v4121
    %6160 = vmatpush2.bf16.msra.mxu0 %v4120
    %6161 = vmatprep.subr.bf16.mxu0 %v4113
    %6162 = vmatpush2.bf16.msra.mxu0 %v4112
    %6163 = vmatprep.subr.bf16.mxu0 %v4105
    %6164 = vmatpush2.bf16.msra.mxu0 %v4104
    %6165 = vmatprep.subr.bf16.mxu0 %v4097
    %6166 = vmatpush2.bf16.msra.mxu0 %v4096
    %6167 = vmatprep.subr.bf16.mxu0 %v4089
    %6168 = vmatpush2.bf16.msra.mxu0 %v4088
    %6169 = vmatprep.subr.bf16.mxu0 %v4081
    %6170 = vmatpush2.bf16.msra.mxu0 %v4080
    %6171 = vmatprep.subr.bf16.mxu0 %v4073
    %6172 = vmatpush2.bf16.msra.mxu0 %v4072
    %6173 = vmatprep.subr.bf16.mxu0 %v4065
    %6174 = vmatpush2.bf16.msra.mxu0 %v4064
    %6175 = vmatprep.mubr.bf16.mxu0 %v172
    %6176 = vmatmul.mubr.bf16.gmra.mxu0 %v171
    %v6177 = vpop.f32.mrf.mxu0
    %v6178 = vadd.f32 %v6137, %v6177
    %v6179 = vpop.f32.mrf.mxu0
    %v6180 = vadd.f32 %v6139, %v6179
    %v6181 = vpop.f32.mrf.mxu0
    %v6182 = vpop.f32.mrf.mxu0
    %6183 = vdwg.mxu0
    %6184 = vmatprep.subr.bf16.mxu0 %v4185
    %6185 = vmatpush1.bf16.msra.mxu0 %v4184
    %6186 = vmatprep.subr.bf16.mxu0 %v4177
    %6187 = vmatpush1.bf16.msra.mxu0 %v4176
    %6188 = vmatprep.subr.bf16.mxu0 %v4169
    %6189 = vmatpush1.bf16.msra.mxu0 %v4168
    %6190 = vmatprep.subr.bf16.mxu0 %v4161
    %6191 = vmatpush1.bf16.msra.mxu0 %v4160
    %6192 = vmatprep.subr.bf16.mxu0 %v4153
    %6193 = vmatpush1.bf16.msra.mxu0 %v4152
    %6194 = vmatprep.subr.bf16.mxu0 %v4145
    %6195 = vmatpush1.bf16.msra.mxu0 %v4144
    %6196 = vmatprep.subr.bf16.mxu0 %v4137
    %6197 = vmatpush1.bf16.msra.mxu0 %v4136
    %6198 = vmatprep.subr.bf16.mxu0 %v4129
    %6199 = vmatpush1.bf16.msra.mxu0 %v4128
    %6200 = vmatprep.subr.bf16.mxu0 %v4249
    %6201 = vmatpush2.bf16.msra.mxu0 %v4248
    %6202 = vmatprep.subr.bf16.mxu0 %v4241
    %6203 = vmatpush2.bf16.msra.mxu0 %v4240
    %6204 = vmatprep.subr.bf16.mxu0 %v4233
    %6205 = vmatpush2.bf16.msra.mxu0 %v4232
    %6206 = vmatprep.subr.bf16.mxu0 %v4225
    %6207 = vmatpush2.bf16.msra.mxu0 %v4224
    %6208 = vmatprep.subr.bf16.mxu0 %v4217
    %6209 = vmatpush2.bf16.msra.mxu0 %v4216
    %6210 = vmatprep.subr.bf16.mxu0 %v4209
    %6211 = vmatpush2.bf16.msra.mxu0 %v4208
    %6212 = vmatprep.subr.bf16.mxu0 %v4201
    %6213 = vmatpush2.bf16.msra.mxu0 %v4200
    %6214 = vmatprep.subr.bf16.mxu0 %v4193
    %6215 = vmatpush2.bf16.msra.mxu0 %v4192
    %6216 = vmatprep.mubr.bf16.mxu0 %v174
    %6217 = vmatmul.mubr.bf16.gmra.mxu0 %v173
    %v6218 = vpop.f32.mrf.mxu0
    %v6219 = vadd.f32 %v6178, %v6218
    %v6220 = vpop.f32.mrf.mxu0
    %v6221 = vadd.f32 %v6180, %v6220
    %v6222 = vpop.f32.mrf.mxu0
    %v6223 = vpop.f32.mrf.mxu0
    %6224 = vdwg.mxu0
    %6225 = vmatprep.subr.bf16.mxu0 0
    %6226 = vmatpush1.bf16.msra.mxu0 0
    %6227 = vmatprep.subr.bf16.mxu0 0
    %6228 = vmatpush1.bf16.msra.mxu0 0
    %6229 = vmatprep.subr.bf16.mxu0 %v4297
    %6230 = vmatpush1.bf16.msra.mxu0 %v4296
    %6231 = vmatprep.subr.bf16.mxu0 %v4289
    %6232 = vmatpush1.bf16.msra.mxu0 %v4288
    %6233 = vmatprep.subr.bf16.mxu0 %v4281
    %6234 = vmatpush1.bf16.msra.mxu0 %v4280
    %6235 = vmatprep.subr.bf16.mxu0 %v4273
    %6236 = vmatpush1.bf16.msra.mxu0 %v4272
    %6237 = vmatprep.subr.bf16.mxu0 %v4265
    %6238 = vmatpush1.bf16.msra.mxu0 %v4264
    %6239 = vmatprep.subr.bf16.mxu0 %v4257
    %6240 = vmatpush1.bf16.msra.mxu0 %v4256
    %6241 = vmatprep.subr.bf16.mxu0 0
    %6242 = vmatpush2.bf16.msra.mxu0 0
    %6243 = vmatprep.subr.bf16.mxu0 0
    %6244 = vmatpush2.bf16.msra.mxu0 0
    %6245 = vmatprep.subr.bf16.mxu0 0
    %6246 = vmatpush2.bf16.msra.mxu0 0
    %6247 = vmatprep.subr.bf16.mxu0 0
    %6248 = vmatpush2.bf16.msra.mxu0 0
    %6249 = vmatprep.subr.bf16.mxu0 0
    %6250 = vmatpush2.bf16.msra.mxu0 0
    %6251 = vmatprep.subr.bf16.mxu0 0
    %6252 = vmatpush2.bf16.msra.mxu0 0
    %6253 = vmatprep.subr.bf16.mxu0 0
    %6254 = vmatpush2.bf16.msra.mxu0 0
    %6255 = vmatprep.subr.bf16.mxu0 0
    %6256 = vmatpush2.bf16.msra.mxu0 0
    %6257 = vmatprep.mubr.bf16.mxu0 0
    %6258 = vmatmul.mubr.bf16.gmra.mxu0 %v5116
    %v6259 = vpop.f32.mrf.mxu0
    %v6260 = vadd.f32 %v6219, %v6259
    %v6261 = vpop.f32.mrf.mxu0
    %v6262 = vadd.f32 %v6221, %v6261
    %v6263 = vpop.f32.mrf.mxu0
    %v6264 = vpop.f32.mrf.mxu0
    %6265 = vdwg.mxu0
    %vm6266 = vcmp.gt.f32.partialorder %v5399, 0.0
    %vm6267 = vcmp.gt.f32.partialorder %v5401, 0.0
    %vm6268 = vcmp.gt.f32.partialorder %v5686, 0.0
    %vm6269 = vcmp.gt.f32.partialorder %v5688, 0.0
    %vm6270 = vcmp.gt.f32.partialorder %v5973, 0.0
    %vm6271 = vcmp.gt.f32.partialorder %v5975, 0.0
    %vm6272 = vcmp.gt.f32.partialorder %v6260, 0.0
    %vm6273 = vcmp.gt.f32.partialorder %v6262, 0.0
    %v6274 = vmul.f32 %v5399, 0.01
    %v6275 = vmul.f32 %v5401, 0.01
    %v6276 = vmul.f32 %v5686, 0.01
    %v6277 = vmul.f32 %v5688, 0.01
    %v6278 = vmul.f32 %v5973, 0.01
    %v6279 = vmul.f32 %v5975, 0.01
    %v6280 = vmul.f32 %v6260, 0.01
    %v6281 = vmul.f32 %v6262, 0.01
    %v6282 = vsel %vm6266, %v5399, %v6274
    %v6283 = vsel %vm6267, %v5401, %v6275
    %v6284 = vsel %vm6268, %v5686, %v6276
    %v6285 = vsel %vm6269, %v5688, %v6277
    %v6286 = vsel %vm6270, %v5973, %v6278
    %v6287 = vsel %vm6271, %v5975, %v6279
    %v6288 = vsel %vm6272, %v6260, %v6280
    %v6289 = vsel %vm6273, %v6262, %v6281
    %v6290 = vpack.c.bf16 %v6282, %v6282
    %v6291 = vpack.c.bf16 %v6283, %v6283
    %v6292 = vpack.c.bf16 %v6284, %v6284
    %v6293 = vpack.c.bf16 %v6285, %v6285
    %v6294 = vpack.c.bf16 %v6286, %v6286
    %v6295 = vpack.c.bf16 %v6287, %v6287
    %v6296 = vpack.c.bf16 %v6288, %v6288
    %v6297 = vpack.c.bf16 %v6289, %v6289
    %v6298 = vld [vmem:[#allocation8] sm:$0xf]
    %v6299 = vld [vmem:[#allocation8 + $0x4] sm:$0xf]
    %v6300 = vld [vmem:[#allocation8 + $0x8] sm:$0xf]
    %v6301 = vld [vmem:[#allocation8 + $0xc] sm:$0xf]
    %v6302 = vld [vmem:[#allocation8 + $0x10] sm:$0xf]
    %v6303 = vld [vmem:[#allocation8 + $0x14] sm:$0xf]
    %v6304 = vld [vmem:[#allocation8 + $0x18] sm:$0xf]
    %v6305 = vld [vmem:[#allocation8 + $0x1c] sm:$0xf]
    %v6306 = vld [vmem:[#allocation8 + $0x20] sm:$0xf]
    %v6307 = vld [vmem:[#allocation8 + $0x24] sm:$0xf]
    %v6308 = vld [vmem:[#allocation8 + $0x28] sm:$0xf]
    %v6309 = vld [vmem:[#allocation8 + $0x2c] sm:$0xf]
    %v6310 = vld [vmem:[#allocation8 + $0x30] sm:$0xf]
    %v6311 = vld [vmem:[#allocation8 + $0x34] sm:$0xf]
    %v6312 = vld [vmem:[#allocation8 + $0x38] sm:$0xf]
    %v6313 = vld [vmem:[#allocation8 + $0x3c] sm:$0xf]
    %v6314 = vld [vmem:[#allocation8 + $0x40] sm:$0xf]
    %v6315 = vld [vmem:[#allocation8 + $0x44] sm:$0xf]
    %v6316 = vld [vmem:[#allocation8 + $0x48] sm:$0xf]
    %v6317 = vld [vmem:[#allocation8 + $0x4c] sm:$0xf]
    %v6318 = vld [vmem:[#allocation8 + $0x50] sm:$0xf]
    %v6319 = vld [vmem:[#allocation8 + $0x54] sm:$0xf]
    %v6320 = vld [vmem:[#allocation8 + $0x58] sm:$0xf]
    %v6321 = vld [vmem:[#allocation8 + $0x5c] sm:$0xf]
    %v6322 = vld [vmem:[#allocation8 + $0x60] sm:$0xf]
    %v6323 = vld [vmem:[#allocation8 + $0x64] sm:$0xf]
    %v6324 = vld [vmem:[#allocation8 + $0x68] sm:$0xf]
    %v6325 = vld [vmem:[#allocation8 + $0x6c] sm:$0xf]
    %v6326 = vld [vmem:[#allocation8 + $0x70] sm:$0xf]
    %v6327 = vld [vmem:[#allocation8 + $0x74] sm:$0xf]
    %v6328 = vld [vmem:[#allocation8 + $0x78] sm:$0xf]
    %v6329 = vld [vmem:[#allocation8 + $0x7c] sm:$0xf]
    %v6330 = vld [vmem:[#allocation8 + $0x80] sm:$0xf]
    %v6331 = vld [vmem:[#allocation8 + $0x84] sm:$0xf]
    %v6332 = vld [vmem:[#allocation8 + $0x88] sm:$0xf]
    %v6333 = vld [vmem:[#allocation8 + $0x8c] sm:$0xf]
    %v6334 = vld [vmem:[#allocation8 + $0x90] sm:$0xf]
    %v6335 = vld [vmem:[#allocation8 + $0x94] sm:$0xf]
    %v6336 = vld [vmem:[#allocation8 + $0x98] sm:$0xf]
    %v6337 = vld [vmem:[#allocation8 + $0x9c] sm:$0xf]
    %v6338 = vld [vmem:[#allocation8 + $0xa0] sm:$0xf]
    %v6339 = vld [vmem:[#allocation8 + $0xa4] sm:$0xf]
    %v6340 = vld [vmem:[#allocation8 + $0xa8] sm:$0xf]
    %v6341 = vld [vmem:[#allocation8 + $0xac] sm:$0xf]
    %v6342 = vld [vmem:[#allocation8 + $0xb0] sm:$0xf]
    %v6343 = vld [vmem:[#allocation8 + $0xb4] sm:$0xf]
    %v6344 = vld [vmem:[#allocation8 + $0xb8] sm:$0xf]
    %v6345 = vld [vmem:[#allocation8 + $0xbc] sm:$0xf]
    %v6346 = vld [vmem:[#allocation8 + $0xc0] sm:$0xf]
    %v6347 = vld [vmem:[#allocation8 + $0xc4] sm:$0xf]
    %v6348 = vld [vmem:[#allocation8 + $0xc8] sm:$0xf]
    %v6349 = vld [vmem:[#allocation8 + $0xcc] sm:$0xf]
    %v6350 = vld [vmem:[#allocation8 + $0xd0] sm:$0xf]
    %v6351 = vld [vmem:[#allocation8 + $0xd4] sm:$0xf]
    %v6352 = vld [vmem:[#allocation8 + $0xd8] sm:$0xf]
    %v6353 = vld [vmem:[#allocation8 + $0xdc] sm:$0xf]
    %v6354 = vld [vmem:[#allocation8 + $0xe0] sm:$0xf]
    %v6355 = vld [vmem:[#allocation8 + $0xe4] sm:$0xf]
    %v6356 = vld [vmem:[#allocation8 + $0xe8] sm:$0xf]
    %v6357 = vld [vmem:[#allocation8 + $0xec] sm:$0xf]
    %v6358 = vld [vmem:[#allocation8 + $0xf0] sm:$0xf]
    %v6359 = vld [vmem:[#allocation8 + $0xf4] sm:$0xf]
    %v6360 = vld [vmem:[#allocation8 + $0xf8] sm:$0xf]
    %v6361 = vld [vmem:[#allocation8 + $0xfc] sm:$0xf]
    %v6362 = vld [vmem:[#allocation8 + $0x100] sm:$0xf]
    %v6363 = vld [vmem:[#allocation8 + $0x104] sm:$0xf]
    %v6364 = vld [vmem:[#allocation8 + $0x108] sm:$0xf]
    %v6365 = vld [vmem:[#allocation8 + $0x10c] sm:$0xf]
    %v6366 = vld [vmem:[#allocation8 + $0x110] sm:$0xf]
    %v6367 = vld [vmem:[#allocation8 + $0x114] sm:$0xf]
    %v6368 = vld [vmem:[#allocation8 + $0x118] sm:$0xf]
    %v6369 = vld [vmem:[#allocation8 + $0x11c] sm:$0xf]
    %v6370 = vld [vmem:[#allocation8 + $0x120] sm:$0xf]
    %v6371 = vld [vmem:[#allocation8 + $0x124] sm:$0xf]
    %v6372 = vld [vmem:[#allocation8 + $0x128] sm:$0xf]
    %v6373 = vld [vmem:[#allocation8 + $0x12c] sm:$0xf]
    %v6374 = vld [vmem:[#allocation8 + $0x130] sm:$0xf]
    %v6375 = vld [vmem:[#allocation8 + $0x134] sm:$0xf]
    %v6376 = vld [vmem:[#allocation8 + $0x138] sm:$0xf]
    %v6377 = vld [vmem:[#allocation8 + $0x13c] sm:$0xf]
    %v6378 = vld [vmem:[#allocation8 + $0x140] sm:$0xf]
    %v6379 = vld [vmem:[#allocation8 + $0x144] sm:$0xf]
    %v6380 = vld [vmem:[#allocation8 + $0x148] sm:$0xf]
    %v6381 = vld [vmem:[#allocation8 + $0x14c] sm:$0xf]
    %v6382 = vld [vmem:[#allocation8 + $0x150] sm:$0xf]
    %v6383 = vld [vmem:[#allocation8 + $0x154] sm:$0xf]
    %v6384 = vld [vmem:[#allocation8 + $0x158] sm:$0xf]
    %v6385 = vld [vmem:[#allocation8 + $0x15c] sm:$0xf]
    %v6386 = vld [vmem:[#allocation8 + $0x160] sm:$0xf]
    %v6387 = vld [vmem:[#allocation8 + $0x164] sm:$0xf]
    %v6388 = vld [vmem:[#allocation8 + $0x168] sm:$0xf]
    %v6389 = vld [vmem:[#allocation8 + $0x16c] sm:$0xf]
    %v6390 = vld [vmem:[#allocation8 + $0x170] sm:$0xf]
    %v6391 = vld [vmem:[#allocation8 + $0x174] sm:$0xf]
    %v6392 = vld [vmem:[#allocation8 + $0x178] sm:$0xf]
    %v6393 = vld [vmem:[#allocation8 + $0x17c] sm:$0xf]
    %v6394 = vld [vmem:[#allocation8 + $0x180] sm:$0xf]
    %v6395 = vld [vmem:[#allocation8 + $0x184] sm:$0xf]
    %v6396 = vld [vmem:[#allocation8 + $0x188] sm:$0xf]
    %v6397 = vld [vmem:[#allocation8 + $0x18c] sm:$0xf]
    %v6398 = vld [vmem:[#allocation8 + $0x190] sm:$0xf]
    %v6399 = vld [vmem:[#allocation8 + $0x194] sm:$0xf]
    %v6400 = vld [vmem:[#allocation8 + $0x198] sm:$0xf]
    %v6401 = vld [vmem:[#allocation8 + $0x19c] sm:$0xf]
    %v6402 = vld [vmem:[#allocation8 + $0x1a0] sm:$0xf]
    %v6403 = vld [vmem:[#allocation8 + $0x1a4] sm:$0xf]
    %v6404 = vld [vmem:[#allocation8 + $0x1a8] sm:$0xf]
    %v6405 = vld [vmem:[#allocation8 + $0x1ac] sm:$0xf]
    %v6406 = vld [vmem:[#allocation8 + $0x1b0] sm:$0xf]
    %v6407 = vld [vmem:[#allocation8 + $0x1b4] sm:$0xf]
    %v6408 = vld [vmem:[#allocation8 + $0x1b8] sm:$0xf]
    %v6409 = vld [vmem:[#allocation8 + $0x1bc] sm:$0xf]
    %v6410 = vld [vmem:[#allocation8 + $0x1c0] sm:$0xf]
    %v6411 = vld [vmem:[#allocation8 + $0x1c4] sm:$0xf]
    %v6412 = vld [vmem:[#allocation8 + $0x1c8] sm:$0xf]
    %v6413 = vld [vmem:[#allocation8 + $0x1cc] sm:$0xf]
    %v6414 = vld [vmem:[#allocation8 + $0x1d0] sm:$0xf]
    %v6415 = vld [vmem:[#allocation8 + $0x1d4] sm:$0xf]
    %v6416 = vld [vmem:[#allocation8 + $0x1d8] sm:$0xf]
    %v6417 = vld [vmem:[#allocation8 + $0x1dc] sm:$0xf]
    %v6418 = vld [vmem:[#allocation8 + $0x1e0] sm:$0xf]
    %v6419 = vld [vmem:[#allocation8 + $0x1e4] sm:$0xf]
    %v6420 = vld [vmem:[#allocation8 + $0x1e8] sm:$0xf]
    %v6421 = vld [vmem:[#allocation8 + $0x1ec] sm:$0xf]
    %v6422 = vld [vmem:[#allocation8 + $0x1f0] sm:$0xf]
    %v6423 = vld [vmem:[#allocation8 + $0x1f4] sm:$0xf]
    %v6424 = vld [vmem:[#allocation8 + $0x1f8] sm:$0xf]
    %v6425 = vld [vmem:[#allocation8 + $0x1fc] sm:$0xf]
    %v6426 = vld [vmem:[#allocation10] sm:$0x1]
    %v6428 = vlaneseq
    %v6429 = vshrl.u32 %v6428, 7
    %v6430 = vsub.s32 0, %v6429
    %v6431 = vrot.slane %v6426, %v6430
    %v6561 = vunpack.c.l.b16 %v6298
    %v6562 = vunpack.c.l.b16 %v6299
    %v6563 = vunpack.c.l.b16 %v6300
    %v6564 = vunpack.c.l.b16 %v6301
    %v6565 = vunpack.c.l.b16 %v6302
    %v6566 = vunpack.c.l.b16 %v6303
    %v6567 = vunpack.c.l.b16 %v6304
    %v6568 = vunpack.c.l.b16 %v6305
    %v6569 = vunpack.c.l.b16 %v6306
    %v6570 = vunpack.c.l.b16 %v6307
    %v6571 = vunpack.c.l.b16 %v6308
    %v6572 = vunpack.c.l.b16 %v6309
    %v6573 = vunpack.c.l.b16 %v6310
    %v6574 = vunpack.c.l.b16 %v6311
    %v6575 = vunpack.c.l.b16 %v6312
    %v6576 = vunpack.c.l.b16 %v6313
    %v6577 = vunpack.c.l.b16 %v6314
    %v6578 = vunpack.c.l.b16 %v6315
    %v6579 = vunpack.c.l.b16 %v6316
    %v6580 = vunpack.c.l.b16 %v6317
    %v6581 = vunpack.c.l.b16 %v6318
    %v6582 = vunpack.c.l.b16 %v6319
    %v6583 = vunpack.c.l.b16 %v6320
    %v6584 = vunpack.c.l.b16 %v6321
    %v6585 = vunpack.c.l.b16 %v6322
    %v6586 = vunpack.c.l.b16 %v6323
    %v6587 = vunpack.c.l.b16 %v6324
    %v6588 = vunpack.c.l.b16 %v6325
    %v6589 = vunpack.c.l.b16 %v6326
    %v6590 = vunpack.c.l.b16 %v6327
    %v6591 = vunpack.c.l.b16 %v6328
    %v6592 = vunpack.c.l.b16 %v6329
    %v6593 = vunpack.c.l.b16 %v6330
    %v6594 = vunpack.c.l.b16 %v6331
    %v6595 = vunpack.c.l.b16 %v6332
    %v6596 = vunpack.c.l.b16 %v6333
    %v6597 = vunpack.c.l.b16 %v6334
    %v6598 = vunpack.c.l.b16 %v6335
    %v6599 = vunpack.c.l.b16 %v6336
    %v6600 = vunpack.c.l.b16 %v6337
    %v6601 = vunpack.c.l.b16 %v6338
    %v6602 = vunpack.c.l.b16 %v6339
    %v6603 = vunpack.c.l.b16 %v6340
    %v6604 = vunpack.c.l.b16 %v6341
    %v6605 = vunpack.c.l.b16 %v6342
    %v6606 = vunpack.c.l.b16 %v6343
    %v6607 = vunpack.c.l.b16 %v6344
    %v6608 = vunpack.c.l.b16 %v6345
    %v6609 = vunpack.c.l.b16 %v6346
    %v6610 = vunpack.c.l.b16 %v6347
    %v6611 = vunpack.c.l.b16 %v6348
    %v6612 = vunpack.c.l.b16 %v6349
    %v6613 = vunpack.c.l.b16 %v6350
    %v6614 = vunpack.c.l.b16 %v6351
    %v6615 = vunpack.c.l.b16 %v6352
    %v6616 = vunpack.c.l.b16 %v6353
    %v6617 = vunpack.c.l.b16 %v6354
    %v6618 = vunpack.c.l.b16 %v6355
    %v6619 = vunpack.c.l.b16 %v6356
    %v6620 = vunpack.c.l.b16 %v6357
    %v6621 = vunpack.c.l.b16 %v6358
    %v6622 = vunpack.c.l.b16 %v6359
    %v6623 = vunpack.c.l.b16 %v6360
    %v6624 = vunpack.c.l.b16 %v6361
    %v6625 = vunpack.c.l.b16 %v6362
    %v6626 = vunpack.c.l.b16 %v6363
    %v6627 = vunpack.c.l.b16 %v6364
    %v6628 = vunpack.c.l.b16 %v6365
    %v6629 = vunpack.c.l.b16 %v6366
    %v6630 = vunpack.c.l.b16 %v6367
    %v6631 = vunpack.c.l.b16 %v6368
    %v6632 = vunpack.c.l.b16 %v6369
    %v6633 = vunpack.c.l.b16 %v6370
    %v6634 = vunpack.c.l.b16 %v6371
    %v6635 = vunpack.c.l.b16 %v6372
    %v6636 = vunpack.c.l.b16 %v6373
    %v6637 = vunpack.c.l.b16 %v6374
    %v6638 = vunpack.c.l.b16 %v6375
    %v6639 = vunpack.c.l.b16 %v6376
    %v6640 = vunpack.c.l.b16 %v6377
    %v6641 = vunpack.c.l.b16 %v6378
    %v6642 = vunpack.c.l.b16 %v6379
    %v6643 = vunpack.c.l.b16 %v6380
    %v6644 = vunpack.c.l.b16 %v6381
    %v6645 = vunpack.c.l.b16 %v6382
    %v6646 = vunpack.c.l.b16 %v6383
    %v6647 = vunpack.c.l.b16 %v6384
    %v6648 = vunpack.c.l.b16 %v6385
    %v6649 = vunpack.c.l.b16 %v6386
    %v6650 = vunpack.c.l.b16 %v6387
    %v6651 = vunpack.c.l.b16 %v6388
    %v6652 = vunpack.c.l.b16 %v6389
    %v6653 = vunpack.c.l.b16 %v6390
    %v6654 = vunpack.c.l.b16 %v6391
    %v6655 = vunpack.c.l.b16 %v6392
    %v6656 = vunpack.c.l.b16 %v6393
    %v6657 = vunpack.c.l.b16 %v6394
    %v6658 = vunpack.c.l.b16 %v6395
    %v6659 = vunpack.c.l.b16 %v6396
    %v6660 = vunpack.c.l.b16 %v6397
    %v6661 = vunpack.c.l.b16 %v6398
    %v6662 = vunpack.c.l.b16 %v6399
    %v6663 = vunpack.c.l.b16 %v6400
    %v6664 = vunpack.c.l.b16 %v6401
    %v6665 = vunpack.c.l.b16 %v6402
    %v6666 = vunpack.c.l.b16 %v6403
    %v6667 = vunpack.c.l.b16 %v6404
    %v6668 = vunpack.c.l.b16 %v6405
    %v6669 = vunpack.c.l.b16 %v6406
    %v6670 = vunpack.c.l.b16 %v6407
    %v6671 = vunpack.c.l.b16 %v6408
    %v6672 = vunpack.c.l.b16 %v6409
    %v6673 = vunpack.c.l.b16 %v6410
    %v6674 = vunpack.c.l.b16 %v6411
    %v6675 = vunpack.c.l.b16 %v6412
    %v6676 = vunpack.c.l.b16 %v6413
    %v6677 = vunpack.c.l.b16 %v6414
    %v6678 = vunpack.c.l.b16 %v6415
    %v6679 = vunpack.c.l.b16 %v6416
    %v6680 = vunpack.c.l.b16 %v6417
    %v6681 = vunpack.c.l.b16 %v6418
    %v6682 = vunpack.c.l.b16 %v6419
    %v6683 = vunpack.c.l.b16 %v6420
    %v6684 = vunpack.c.l.b16 %v6421
    %v6685 = vunpack.c.l.b16 %v6422
    %v6686 = vunpack.c.l.b16 %v6423
    %v6687 = vunpack.c.l.b16 %v6424
    %v6688 = vunpack.c.l.b16 %v6425
    %v6689 = vpack.c.b16 %v6562, %v6561
    %v6690 = vpack.c.b16 %v6564, %v6563
    %v6691 = vpack.c.b16 %v6566, %v6565
    %v6692 = vpack.c.b16 %v6568, %v6567
    %v6693 = vpack.c.b16 %v6570, %v6569
    %v6694 = vpack.c.b16 %v6572, %v6571
    %v6695 = vpack.c.b16 %v6574, %v6573
    %v6696 = vpack.c.b16 %v6576, %v6575
    %v6697 = vpack.c.b16 %v6578, %v6577
    %v6698 = vpack.c.b16 %v6580, %v6579
    %v6699 = vpack.c.b16 %v6582, %v6581
    %v6700 = vpack.c.b16 %v6584, %v6583
    %v6701 = vpack.c.b16 %v6586, %v6585
    %v6702 = vpack.c.b16 %v6588, %v6587
    %v6703 = vpack.c.b16 %v6590, %v6589
    %v6704 = vpack.c.b16 %v6592, %v6591
    %v6705 = vpack.c.b16 %v6594, %v6593
    %v6706 = vpack.c.b16 %v6596, %v6595
    %v6707 = vpack.c.b16 %v6598, %v6597
    %v6708 = vpack.c.b16 %v6600, %v6599
    %v6709 = vpack.c.b16 %v6602, %v6601
    %v6710 = vpack.c.b16 %v6604, %v6603
    %v6711 = vpack.c.b16 %v6606, %v6605
    %v6712 = vpack.c.b16 %v6608, %v6607
    %v6713 = vpack.c.b16 %v6610, %v6609
    %v6714 = vpack.c.b16 %v6612, %v6611
    %v6715 = vpack.c.b16 %v6614, %v6613
    %v6716 = vpack.c.b16 %v6616, %v6615
    %v6717 = vpack.c.b16 %v6618, %v6617
    %v6718 = vpack.c.b16 %v6620, %v6619
    %v6719 = vpack.c.b16 %v6622, %v6621
    %v6720 = vpack.c.b16 %v6624, %v6623
    %v6721 = vpack.c.b16 %v6626, %v6625
    %v6722 = vpack.c.b16 %v6628, %v6627
    %v6723 = vpack.c.b16 %v6630, %v6629
    %v6724 = vpack.c.b16 %v6632, %v6631
    %v6725 = vpack.c.b16 %v6634, %v6633
    %v6726 = vpack.c.b16 %v6636, %v6635
    %v6727 = vpack.c.b16 %v6638, %v6637
    %v6728 = vpack.c.b16 %v6640, %v6639
    %v6729 = vpack.c.b16 %v6642, %v6641
    %v6730 = vpack.c.b16 %v6644, %v6643
    %v6731 = vpack.c.b16 %v6646, %v6645
    %v6732 = vpack.c.b16 %v6648, %v6647
    %v6733 = vpack.c.b16 %v6650, %v6649
    %v6734 = vpack.c.b16 %v6652, %v6651
    %v6735 = vpack.c.b16 %v6654, %v6653
    %v6736 = vpack.c.b16 %v6656, %v6655
    %v6737 = vpack.c.b16 %v6658, %v6657
    %v6738 = vpack.c.b16 %v6660, %v6659
    %v6739 = vpack.c.b16 %v6662, %v6661
    %v6740 = vpack.c.b16 %v6664, %v6663
    %v6741 = vpack.c.b16 %v6666, %v6665
    %v6742 = vpack.c.b16 %v6668, %v6667
    %v6743 = vpack.c.b16 %v6670, %v6669
    %v6744 = vpack.c.b16 %v6672, %v6671
    %v6745 = vpack.c.b16 %v6674, %v6673
    %v6746 = vpack.c.b16 %v6676, %v6675
    %v6747 = vpack.c.b16 %v6678, %v6677
    %v6748 = vpack.c.b16 %v6680, %v6679
    %v6749 = vpack.c.b16 %v6682, %v6681
    %v6750 = vpack.c.b16 %v6684, %v6683
    %v6751 = vpack.c.b16 %v6686, %v6685
    %v6752 = vpack.c.b16 %v6688, %v6687
    %6817 = vmatprep.subr.bf16.mxu0 0
    %6818 = vmatpush1.bf16.msra.mxu0 %v6696
    %6819 = vmatprep.subr.bf16.mxu0 0
    %6820 = vmatpush1.bf16.msra.mxu0 %v6695
    %6821 = vmatprep.subr.bf16.mxu0 0
    %6822 = vmatpush1.bf16.msra.mxu0 %v6694
    %6823 = vmatprep.subr.bf16.mxu0 0
    %6824 = vmatpush1.bf16.msra.mxu0 %v6693
    %6825 = vmatprep.subr.bf16.mxu0 0
    %6826 = vmatpush1.bf16.msra.mxu0 %v6692
    %6827 = vmatprep.subr.bf16.mxu0 0
    %6828 = vmatpush1.bf16.msra.mxu0 %v6691
    %6829 = vmatprep.subr.bf16.mxu0 0
    %6830 = vmatpush1.bf16.msra.mxu0 %v6690
    %6831 = vmatprep.subr.bf16.mxu0 0
    %6832 = vmatpush1.bf16.msra.mxu0 %v6689
    %6833 = vmatprep.subr.bf16.mxu0 0
    %6834 = vmatpush2.bf16.msra.mxu0 %v6704
    %6835 = vmatprep.subr.bf16.mxu0 0
    %6836 = vmatpush2.bf16.msra.mxu0 %v6703
    %6837 = vmatprep.subr.bf16.mxu0 0
    %6838 = vmatpush2.bf16.msra.mxu0 %v6702
    %6839 = vmatprep.subr.bf16.mxu0 0
    %6840 = vmatpush2.bf16.msra.mxu0 %v6701
    %6841 = vmatprep.subr.bf16.mxu0 0
    %6842 = vmatpush2.bf16.msra.mxu0 %v6700
    %6843 = vmatprep.subr.bf16.mxu0 0
    %6844 = vmatpush2.bf16.msra.mxu0 %v6699
    %6845 = vmatprep.subr.bf16.mxu0 0
    %6846 = vmatpush2.bf16.msra.mxu0 %v6698
    %6847 = vmatprep.subr.bf16.mxu0 0
    %6848 = vmatpush2.bf16.msra.mxu0 %v6697
    %6849 = vmatprep.mubr.bf16.mxu0 %v6291
    %6850 = vmatmul.mubr.bf16.gmra.mxu0 %v6290
    %v6851 = vpop.f32.mrf.mxu0
    %v6852 = vadd.f32 %v6431, %v6851
    %v6853 = vpop.f32.mrf.mxu0
    %v6854 = vpop.f32.mrf.mxu0
    %v6855 = vpop.f32.mrf.mxu0
    %6856 = vdwg.mxu0
    %6857 = vmatprep.subr.bf16.mxu0 0
    %6858 = vmatpush1.bf16.msra.mxu0 %v6712
    %6859 = vmatprep.subr.bf16.mxu0 0
    %6860 = vmatpush1.bf16.msra.mxu0 %v6711
    %6861 = vmatprep.subr.bf16.mxu0 0
    %6862 = vmatpush1.bf16.msra.mxu0 %v6710
    %6863 = vmatprep.subr.bf16.mxu0 0
    %6864 = vmatpush1.bf16.msra.mxu0 %v6709
    %6865 = vmatprep.subr.bf16.mxu0 0
    %6866 = vmatpush1.bf16.msra.mxu0 %v6708
    %6867 = vmatprep.subr.bf16.mxu0 0
    %6868 = vmatpush1.bf16.msra.mxu0 %v6707
    %6869 = vmatprep.subr.bf16.mxu0 0
    %6870 = vmatpush1.bf16.msra.mxu0 %v6706
    %6871 = vmatprep.subr.bf16.mxu0 0
    %6872 = vmatpush1.bf16.msra.mxu0 %v6705
    %6873 = vmatprep.subr.bf16.mxu0 0
    %6874 = vmatpush2.bf16.msra.mxu0 %v6720
    %6875 = vmatprep.subr.bf16.mxu0 0
    %6876 = vmatpush2.bf16.msra.mxu0 %v6719
    %6877 = vmatprep.subr.bf16.mxu0 0
    %6878 = vmatpush2.bf16.msra.mxu0 %v6718
    %6879 = vmatprep.subr.bf16.mxu0 0
    %6880 = vmatpush2.bf16.msra.mxu0 %v6717
    %6881 = vmatprep.subr.bf16.mxu0 0
    %6882 = vmatpush2.bf16.msra.mxu0 %v6716
    %6883 = vmatprep.subr.bf16.mxu0 0
    %6884 = vmatpush2.bf16.msra.mxu0 %v6715
    %6885 = vmatprep.subr.bf16.mxu0 0
    %6886 = vmatpush2.bf16.msra.mxu0 %v6714
    %6887 = vmatprep.subr.bf16.mxu0 0
    %6888 = vmatpush2.bf16.msra.mxu0 %v6713
    %6889 = vmatprep.mubr.bf16.mxu0 %v6293
    %6890 = vmatmul.mubr.bf16.gmra.mxu0 %v6292
    %v6891 = vpop.f32.mrf.mxu0
    %v6892 = vadd.f32 %v6852, %v6891
    %v6893 = vpop.f32.mrf.mxu0
    %v6894 = vpop.f32.mrf.mxu0
    %v6895 = vpop.f32.mrf.mxu0
    %6896 = vdwg.mxu0
    %6897 = vmatprep.subr.bf16.mxu0 0
    %6898 = vmatpush1.bf16.msra.mxu0 %v6728
    %6899 = vmatprep.subr.bf16.mxu0 0
    %6900 = vmatpush1.bf16.msra.mxu0 %v6727
    %6901 = vmatprep.subr.bf16.mxu0 0
    %6902 = vmatpush1.bf16.msra.mxu0 %v6726
    %6903 = vmatprep.subr.bf16.mxu0 0
    %6904 = vmatpush1.bf16.msra.mxu0 %v6725
    %6905 = vmatprep.subr.bf16.mxu0 0
    %6906 = vmatpush1.bf16.msra.mxu0 %v6724
    %6907 = vmatprep.subr.bf16.mxu0 0
    %6908 = vmatpush1.bf16.msra.mxu0 %v6723
    %6909 = vmatprep.subr.bf16.mxu0 0
    %6910 = vmatpush1.bf16.msra.mxu0 %v6722
    %6911 = vmatprep.subr.bf16.mxu0 0
    %6912 = vmatpush1.bf16.msra.mxu0 %v6721
    %6913 = vmatprep.subr.bf16.mxu0 0
    %6914 = vmatpush2.bf16.msra.mxu0 %v6736
    %6915 = vmatprep.subr.bf16.mxu0 0
    %6916 = vmatpush2.bf16.msra.mxu0 %v6735
    %6917 = vmatprep.subr.bf16.mxu0 0
    %6918 = vmatpush2.bf16.msra.mxu0 %v6734
    %6919 = vmatprep.subr.bf16.mxu0 0
    %6920 = vmatpush2.bf16.msra.mxu0 %v6733
    %6921 = vmatprep.subr.bf16.mxu0 0
    %6922 = vmatpush2.bf16.msra.mxu0 %v6732
    %6923 = vmatprep.subr.bf16.mxu0 0
    %6924 = vmatpush2.bf16.msra.mxu0 %v6731
    %6925 = vmatprep.subr.bf16.mxu0 0
    %6926 = vmatpush2.bf16.msra.mxu0 %v6730
    %6927 = vmatprep.subr.bf16.mxu0 0
    %6928 = vmatpush2.bf16.msra.mxu0 %v6729
    %6929 = vmatprep.mubr.bf16.mxu0 %v6295
    %6930 = vmatmul.mubr.bf16.gmra.mxu0 %v6294
    %v6931 = vpop.f32.mrf.mxu0
    %v6932 = vadd.f32 %v6892, %v6931
    %v6933 = vpop.f32.mrf.mxu0
    %v6934 = vpop.f32.mrf.mxu0
    %v6935 = vpop.f32.mrf.mxu0
    %6936 = vdwg.mxu0
    %6937 = vmatprep.subr.bf16.mxu0 0
    %6938 = vmatpush1.bf16.msra.mxu0 %v6744
    %6939 = vmatprep.subr.bf16.mxu0 0
    %6940 = vmatpush1.bf16.msra.mxu0 %v6743
    %6941 = vmatprep.subr.bf16.mxu0 0
    %6942 = vmatpush1.bf16.msra.mxu0 %v6742
    %6943 = vmatprep.subr.bf16.mxu0 0
    %6944 = vmatpush1.bf16.msra.mxu0 %v6741
    %6945 = vmatprep.subr.bf16.mxu0 0
    %6946 = vmatpush1.bf16.msra.mxu0 %v6740
    %6947 = vmatprep.subr.bf16.mxu0 0
    %6948 = vmatpush1.bf16.msra.mxu0 %v6739
    %6949 = vmatprep.subr.bf16.mxu0 0
    %6950 = vmatpush1.bf16.msra.mxu0 %v6738
    %6951 = vmatprep.subr.bf16.mxu0 0
    %6952 = vmatpush1.bf16.msra.mxu0 %v6737
    %6953 = vmatprep.subr.bf16.mxu0 0
    %6954 = vmatpush2.bf16.msra.mxu0 %v6752
    %6955 = vmatprep.subr.bf16.mxu0 0
    %6956 = vmatpush2.bf16.msra.mxu0 %v6751
    %6957 = vmatprep.subr.bf16.mxu0 0
    %6958 = vmatpush2.bf16.msra.mxu0 %v6750
    %6959 = vmatprep.subr.bf16.mxu0 0
    %6960 = vmatpush2.bf16.msra.mxu0 %v6749
    %6961 = vmatprep.subr.bf16.mxu0 0
    %6962 = vmatpush2.bf16.msra.mxu0 %v6748
    %6963 = vmatprep.subr.bf16.mxu0 0
    %6964 = vmatpush2.bf16.msra.mxu0 %v6747
    %6965 = vmatprep.subr.bf16.mxu0 0
    %6966 = vmatpush2.bf16.msra.mxu0 %v6746
    %6967 = vmatprep.subr.bf16.mxu0 0
    %6968 = vmatpush2.bf16.msra.mxu0 %v6745
    %6969 = vmatprep.mubr.bf16.mxu0 %v6297
    %6970 = vmatmul.mubr.bf16.gmra.mxu0 %v6296
    %v6971 = vpop.f32.mrf.mxu0
    %v6972 = vadd.f32 %v6932, %v6971
    %v6973 = vpop.f32.mrf.mxu0
    %v6974 = vpop.f32.mrf.mxu0
    %v6975 = vpop.f32.mrf.mxu0
    %6976 = vdwg.mxu0
    %6977 = vst [vmem:[#allocation11] sm:$0x3] %v6972
    // Predicated region
    $region42: #{fcnn_forward.1} parent=1 // pred_check
      _
    $region43: #{fcnn_forward.1} parent=1 // pred_check_branch
      %6979 = sbr.rel (0) target = $region45
    $region44: #{fcnn_forward.1} parent=1 // pred_region
      %s6981 = ssub.s32 32, 32
      %6982 = vsyncadd [#allocation4], %s6981
      %s6984 = sshll.u32 [#allocation11], 4
      %s6985 = int_to_ptr.vmem [resolvable:$true] %s6984
      %6987 = dma.vmem_to_hbm [thread:$0]  %s6985, 32, %s5, [#allocation4]
    $region45: #{fcnn_forward.1} parent=1 // pred_fallthru
      _
    // Predicated region
    $region46: #{fcnn_forward.1} parent=1 // pred_check
      _
    $region47: #{fcnn_forward.1} parent=1 // pred_check_branch
      %6989 = sbr.rel (0) target = $region49
    $region48: #{fcnn_forward.1} parent=1 // pred_region
      %6990 = dma.done [#allocation4], 32
    $region49: #{fcnn_forward.1} parent=1 // pred_fallthru
      _
    %6991 = vsyncpa [#allocation3], 1
    %6992 = vsyncpa [#allocation6], 1
    %6993 = vsyncpa [#allocation9], 1
    %6994 = vsyncpa [#allocation4], 1

</llo_original>
